<compile_context>
chip_gen: v6e
topology: v6e:2x2x1
jax: 0.10.0
libtpu: 0.0.40
codegen_flags: <defaults>
</compile_context>

<pallas_src>
import functools

import jax
import jax.numpy as jnp
from jax import lax
from jax.experimental import pallas as pl
from jax.experimental.pallas import tpu as pltpu


def lstm_classifier_kernel(x_ref, w_ih0_ref, b0_ref, w_blk_ref, b1_ref,
                           w_fc_ref, b_fc_ref, out_ref, gx_ref):
    T, TB, D = x_ref.shape
    H4 = w_ih0_ref.shape[1]
    H = H4 // 4

    # Hoist all weight / bias loads out of the recurrent loop (JAX does not CSE them).
    w_ih0 = w_ih0_ref[...]
    b0 = b0_ref[...]
    w_blk = w_blk_ref[...]          # (2H, 8H) = [[W_hh0 | W_ih1], [0 | W_hh1]], gate-reordered
    b1 = b1_ref[...]
    w_fc = w_fc_ref[...]
    b_fc = b_fc_ref[...]
    mm_dtype = w_blk.dtype          # bf16 matmul operands, f32 accumulation / elementwise

    # ---- layer-0 input projection: ONE (T*TB, D) @ (D, 4H) matmul, bias added once ----
    gx_ref[...] = jnp.dot(x_ref[...].reshape(T * TB, D), w_ih0,
                          preferred_element_type=jnp.float32) + b0

    def cell(gates, c):
        # gate order (i, f, o, g): one contiguous sigmoid slab + one tanh slab
        s = jax.nn.sigmoid(gates[:, :3 * H])
        g = jnp.tanh(gates[:, 3 * H:])
        i, f, o = s[:, :H], s[:, H:2 * H], s[:, 2 * H:]
        c_new = f * c + i * g
        h_new = o * jnp.tanh(c_new)
        return h_new, c_new

    zeros = jnp.zeros((TB, H), jnp.float32)   # PyTorch default h0 = c0 = 0

    # ---- wavefront step 0: layer-0 t=0 only (recurrent term is zero) ----
    h0, c0 = cell(gx_ref[pl.ds(0, TB), :], zeros)
    h1, c1 = zeros, zeros

    # ---- wavefront steps 1..T-1: one fused matmul per step, both layers' cells ----
    def fused_step(s, carry):
        h0, c0, h1, c1 = carry
        hh = jnp.concatenate([h0, h1], axis=1).astype(mm_dtype)          # (TB, 2H)
        g = jnp.dot(hh, w_blk, preferred_element_type=jnp.float32)        # (TB, 8H)
        base = pl.multiple_of(s * TB, TB)
        gates0 = gx_ref[pl.ds(base, TB), :] + g[:, :H4]   # layer-0, timestep s
        gates1 = b1 + g[:, H4:]                           # layer-1, timestep s-1
        h0n, c0n = cell(gates0, c0)
        h1n, c1n = cell(gates1, c1)
        return h0n, c0n, h1n, c1n

    h0, c0, h1, c1 = lax.fori_loop(1, T, fused_step, (h0, c0, h1, c1), unroll=True)

    # ---- wavefront step T: layer-1 t=T-1 only ----
    hh = jnp.concatenate([h0, h1], axis=1).astype(mm_dtype)
    g_last = jnp.dot(hh, w_blk[:, H4:], preferred_element_type=jnp.float32)
    h1, _ = cell(b1 + g_last, c1)

    # ---- FC head on the last layer-1 hidden state (lane-padded to 128 wide) ----
    out_ref[...] = jnp.dot(h1.astype(mm_dtype), w_fc,
                           preferred_element_type=jnp.float32) + b_fc


def rnn_classifier_forward(x, kparams, *, hidden_size, num_classes, batch_tile=None):
    """x: (B, input_size, seq_len) -- same layout the PyTorch module takes."""
    B, D, T = x.shape
    H = hidden_size
    mm_dtype = kparams["w_ih0"].dtype
    c_pad = kparams["w_fc"].shape[1]

    # Whole batch in one grid step unless explicitly tiled (only worth it when M ~>= 128-256).
    tb = B if (batch_tile is None or batch_tile >= B or B % batch_tile != 0) else batch_tile
    grid = (B // tb,)

    # time-major bf16 input; the layer-0 input projection happens inside the kernel
    x_tm = jnp.transpose(x, (2, 0, 1)).astype(mm_dtype)              # (T, B, D)

    def full_spec(a):
        return pl.BlockSpec(a.shape, lambda b: (0,) * a.ndim)

    out_padded = pl.pallas_call(
        lstm_classifier_kernel,
        out_shape=jax.ShapeDtypeStruct((B, c_pad), jnp.float32),
        grid=grid,
        in_specs=[
            pl.BlockSpec((T, tb, D), lambda b: (0, b, 0)),           # x: batch-tiled
            full_spec(kparams["w_ih0"]),
            full_spec(kparams["b0"]),
            full_spec(kparams["w_blk"]),
            full_spec(kparams["b1"]),
            full_spec(kparams["w_fc"]),
            full_spec(kparams["b_fc"]),
        ],
        out_specs=pl.BlockSpec((tb, c_pad), lambda b: (b, 0)),
        scratch_shapes=[
            pltpu.VMEM((T * tb, 4 * H), jnp.float32),    # layer-0 gate pre-activations
        ],
        compiler_params=pltpu.CompilerParams(
            dimension_semantics=("parallel",),            # independent batch tiles
            vmem_limit_bytes=32 * 1024 * 1024,
        ),
    )(x_tm, kparams["w_ih0"], kparams["b0"], kparams["w_blk"], kparams["b1"],
      kparams["w_fc"], kparams["b_fc"])

    return out_padded[:, :num_classes]


def init_params(key, input_size, hidden_size, num_classes):
    """Deterministic synthetic parameters in PyTorch LSTM conventions (f32)."""
    ks = jax.random.split(key, 10)
    H, D, C = hidden_size, input_size, num_classes
    u = lambda k, shape, bound: jax.random.uniform(k, shape, jnp.float32, -bound, bound)
    b = 1.0 / jnp.sqrt(H)
    return {
        # layer 0
        "w_ih_l0": u(ks[0], (4 * H, D), b), "w_hh_l0": u(ks[1], (4 * H, H), b),
        "b_ih_l0": u(ks[2], (4 * H,), b),   "b_hh_l0": u(ks[3], (4 * H,), b),
        # layer 1
        "w_ih_l1": u(ks[4], (4 * H, H), b), "w_hh_l1": u(ks[5], (4 * H, H), b),
        "b_ih_l1": u(ks[6], (4 * H,), b),   "b_hh_l1": u(ks[7], (4 * H,), b),
        # fc
        "w_fc": u(ks[8], (C, H), b), "b_fc": u(ks[9], (C,), b),
    }


def prepare_kernel_params(raw, mm_dtype=jnp.bfloat16, lane=128):
    """Pre-transpose / pre-sum / gate-reorder / pack / pad / cast params for the kernel."""
    H = raw["w_hh_l0"].shape[1]
    C = raw["w_fc"].shape[0]
    c_pad = ((C + lane - 1) // lane) * lane

    def reorder(w):
        # reorder gate column-groups from PyTorch (i, f, g, o) to (i, f, o, g)
        h = w.shape[-1] // 4
        return jnp.concatenate([w[..., k * h:(k + 1) * h] for k in (0, 1, 3, 2)], axis=-1)

    w_ih0 = reorder(raw["w_ih_l0"].T)                                  # (D, 4H)
    w_hh0 = reorder(raw["w_hh_l0"].T)                                  # (H, 4H)
    w_ih1 = reorder(raw["w_ih_l1"].T)                                  # (H, 4H)
    w_hh1 = reorder(raw["w_hh_l1"].T)                                  # (H, 4H)
    b0 = reorder((raw["b_ih_l0"] + raw["b_hh_l0"]).reshape(1, 4 * H))
    b1 = reorder((raw["b_ih_l1"] + raw["b_hh_l1"]).reshape(1, 4 * H))

    # Wavefront block weight: [h0_t | h1_{t-1}] @ [[W_hh0 | W_ih1], [0 | W_hh1]]
    top = jnp.concatenate([w_hh0, w_ih1], axis=1)                      # (H, 8H)
    bot = jnp.concatenate([jnp.zeros((H, 4 * H), jnp.float32), w_hh1], axis=1)
    w_blk = jnp.concatenate([top, bot], axis=0)                        # (2H, 8H)

    w_fc = jnp.zeros((H, c_pad), jnp.float32).at[:, :C].set(raw["w_fc"].T)
    b_fc = jnp.zeros((1, c_pad), jnp.float32).at[:, :C].set(raw["b_fc"])
    return {
        "w_ih0": w_ih0.astype(mm_dtype),
        "b0": b0.astype(jnp.float32),
        "w_blk": w_blk.astype(mm_dtype),
        "b1": b1.astype(jnp.float32),
        "w_fc": w_fc.astype(mm_dtype),      # lane-dense (H, 128*k) padded FC weight
        "b_fc": b_fc,                       # f32 padded bias
    }


def reference_forward(x, raw, hidden_size):
    """Pure-JAX f32 reference mirroring torch.nn.LSTM(batch_first=True) + Linear."""
    B = x.shape[0]
    seq = jnp.transpose(x, (0, 2, 1))                       # (B, T, D) == x.permute(0,2,1)

    def run_layer(seq_btd, w_ih, w_hh, b_ih, b_hh):
        H = w_hh.shape[1]

        def step(carry, x_t):
            h, c = carry
            gates = x_t @ w_ih.T + b_ih + h @ w_hh.T + b_hh
            i, f, g, o = jnp.split(gates, 4, axis=-1)
            i, f, o = jax.nn.sigmoid(i), jax.nn.sigmoid(f), jax.nn.sigmoid(o)
            g = jnp.tanh(g)
            c = f * c + i * g
            h = o * jnp.tanh(c)
            return (h, c), h

        h0 = jnp.zeros((B, H), jnp.float32)
        (_, _), hs = lax.scan(step, (h0, h0), jnp.swapaxes(seq_btd, 0, 1))
        return jnp.swapaxes(hs, 0, 1)                       # (B, T, H)

    out = run_layer(seq, raw["w_ih_l0"], raw["w_hh_l0"], raw["b_ih_l0"], raw["b_hh_l0"])
    out = run_layer(out, raw["w_ih_l1"], raw["w_hh_l1"], raw["b_ih_l1"], raw["b_hh_l1"])
    last = out[:, -1, :]
    return last @ raw["w_fc"].T + raw["b_fc"]


if __name__ == "__main__":
    # Module-default feature sizes (input_size=224, hidden=128, classes=2) at a small
    # batch / sequence: x is (B, input_size, seq_len) exactly as the PyTorch forward takes.
    B, INPUT_SIZE, SEQ_LEN = 16, 224, 8
    HIDDEN, CLASSES = 128, 2

    key = jax.random.PRNGKey(0)
    k_x, k_p = jax.random.split(key)
    x = jax.random.normal(k_x, (B, INPUT_SIZE, SEQ_LEN), jnp.float32)

    raw = init_params(k_p, INPUT_SIZE, HIDDEN, CLASSES)
    kparams = prepare_kernel_params(raw)

    fwd = jax.jit(functools.partial(rnn_classifier_forward,
                                    hidden_size=HIDDEN, num_classes=CLASSES))
    out = jax.block_until_ready(fwd(x, kparams))

    ref = reference_forward(x, raw, HIDDEN)
    assert out.shape == (B, CLASSES)
    # bf16 matmul operands with f32 accumulation vs. pure-f32 reference
    assert jnp.allclose(out, ref, atol=5e-2, rtol=5e-2)

    print("KERNEL_OK")
</pallas_src>

<mosaic_0001>
module attributes {stable_mosaic.version = 11 : i64} {
  func.func @lstm_classifier_kernel(%arg0: i32, %arg1: memref<8x16x224xbf16, #tpu.memory_space<vmem>>, %arg2: memref<224x512xbf16, #tpu.memory_space<vmem>>, %arg3: memref<1x512xf32, #tpu.memory_space<vmem>>, %arg4: memref<256x1024xbf16, #tpu.memory_space<vmem>>, %arg5: memref<1x512xf32, #tpu.memory_space<vmem>>, %arg6: memref<128x128xbf16, #tpu.memory_space<vmem>>, %arg7: memref<1x128xf32, #tpu.memory_space<vmem>>, %arg8: memref<16x128xf32, #tpu.memory_space<vmem>>, %arg9: memref<128x512xf32, #tpu.memory_space<vmem>>) attributes {dimension_semantics = [#tpu.dimension_semantics<parallel>], iteration_bounds = array<i64: 1>, scalar_prefetch = 0 : i64, scratch_operands = 1 : i64, tpu.core_type = #tpu.core_type<tc>, window_params = [{transform_indices = @transform_0, window_bounds = array<i64: 8, 16, 224>}, {pipeline_mode = #tpu.pipeline_mode<synchronous>, transform_indices = @transform_1, window_bounds = array<i64: 224, 512>}, {pipeline_mode = #tpu.pipeline_mode<synchronous>, transform_indices = @transform_2, window_bounds = array<i64: 1, 512>}, {pipeline_mode = #tpu.pipeline_mode<synchronous>, transform_indices = @transform_3, window_bounds = array<i64: 256, 1024>}, {pipeline_mode = #tpu.pipeline_mode<synchronous>, transform_indices = @transform_4, window_bounds = array<i64: 1, 512>}, {pipeline_mode = #tpu.pipeline_mode<synchronous>, transform_indices = @transform_5, window_bounds = array<i64: 128, 128>}, {pipeline_mode = #tpu.pipeline_mode<synchronous>, transform_indices = @transform_6, window_bounds = array<i64: 1, 128>}, {transform_indices = @transform_7, window_bounds = array<i64: 16, 128>}]} {
    %c0 = arith.constant 0 : index
    %c0_0 = arith.constant 0 : index
    %0 = vector.load %arg2[%c0, %c0_0] : memref<224x512xbf16, #tpu.memory_space<vmem>>, vector<224x512xbf16>
    %c0_1 = arith.constant 0 : index
    %c0_2 = arith.constant 0 : index
    %1 = vector.load %arg3[%c0_1, %c0_2] : memref<1x512xf32, #tpu.memory_space<vmem>>, vector<1x512xf32>
    %c0_3 = arith.constant 0 : index
    %c0_4 = arith.constant 0 : index
    %2 = vector.load %arg4[%c0_3, %c0_4] : memref<256x1024xbf16, #tpu.memory_space<vmem>>, vector<256x1024xbf16>
    %c0_5 = arith.constant 0 : index
    %c0_6 = arith.constant 0 : index
    %3 = vector.load %arg5[%c0_5, %c0_6] : memref<1x512xf32, #tpu.memory_space<vmem>>, vector<1x512xf32>
    %c0_7 = arith.constant 0 : index
    %c0_8 = arith.constant 0 : index
    %4 = vector.load %arg6[%c0_7, %c0_8] : memref<128x128xbf16, #tpu.memory_space<vmem>>, vector<128x128xbf16>
    %c0_9 = arith.constant 0 : index
    %c0_10 = arith.constant 0 : index
    %5 = vector.load %arg7[%c0_9, %c0_10] : memref<1x128xf32, #tpu.memory_space<vmem>>, vector<1x128xf32>
    %c0_11 = arith.constant 0 : index
    %c0_12 = arith.constant 0 : index
    %c0_13 = arith.constant 0 : index
    %6 = vector.load %arg1[%c0_11, %c0_12, %c0_13] : memref<8x16x224xbf16, #tpu.memory_space<vmem>>, vector<8x16x224xbf16>
    %7 = vector.shape_cast %6 : vector<8x16x224xbf16> to vector<128x224xbf16>
    %cst = arith.constant dense<0.000000e+00> : vector<128x512xf32>
    %8 = tpu.matmul %7, %0, %cst {dimension_numbers = #tpu.dot_dimension_numbers<[1], [0], [0], [1], [0, 0, 1, 1], [], []>} : vector<128x224xbf16>, vector<224x512xbf16>, vector<128x512xf32> -> vector<128x512xf32>
    %9 = vector.broadcast %1 : vector<1x512xf32> to vector<128x512xf32>
    %10 = arith.addf %8, %9 : vector<128x512xf32>
    %c0_14 = arith.constant 0 : index
    %c0_15 = arith.constant 0 : index
    %11 = vector.load %arg9[%c0_14, %c0_15] : memref<128x512xf32, #tpu.memory_space<vmem>>, vector<128x512xf32>
    tpu.vector_store %arg9[%c0_14, %c0_15], %10 {strides = array<i32>} : memref<128x512xf32, #tpu.memory_space<vmem>>, vector<128x512xf32>,
    %cst_16 = arith.constant 0.000000e+00 : f32
    %12 = vector.broadcast %cst_16 : f32 to vector<16x128xf32>
    %c0_17 = arith.constant 0 : index
    %c0_18 = arith.constant 0 : index
    %13 = vector.load %arg9[%c0_17, %c0_18] : memref<128x512xf32, #tpu.memory_space<vmem>>, vector<16x512xf32>
    %14 = vector.extract_strided_slice %13 {offsets = [0, 0], sizes = [16, 384], strides = [1, 1]} : vector<16x512xf32> to vector<16x384xf32>
    %15 = arith.negf %14 : vector<16x384xf32>
    %16 = math.exp %15 : vector<16x384xf32>
    %cst_19 = arith.constant 1.000000e+00 : f32
    %17 = vector.broadcast %cst_19 : f32 to vector<16x384xf32>
    %18 = arith.addf %17, %16 : vector<16x384xf32>
    %19 = arith.divf %17, %18 : vector<16x384xf32>
    %20 = vector.extract_strided_slice %13 {offsets = [0, 384], sizes = [16, 128], strides = [1, 1]} : vector<16x512xf32> to vector<16x128xf32>
    %21 = math.tanh %20 : vector<16x128xf32>
    %22 = vector.extract_strided_slice %19 {offsets = [0, 0], sizes = [16, 128], strides = [1, 1]} : vector<16x384xf32> to vector<16x128xf32>
    %23 = vector.extract_strided_slice %19 {offsets = [0, 128], sizes = [16, 128], strides = [1, 1]} : vector<16x384xf32> to vector<16x128xf32>
    %24 = vector.extract_strided_slice %19 {offsets = [0, 256], sizes = [16, 128], strides = [1, 1]} : vector<16x384xf32> to vector<16x128xf32>
    %25 = arith.mulf %23, %12 : vector<16x128xf32>
    %26 = arith.mulf %22, %21 : vector<16x128xf32>
    %27 = arith.addf %25, %26 : vector<16x128xf32>
    %28 = math.tanh %27 : vector<16x128xf32>
    %29 = arith.mulf %24, %28 : vector<16x128xf32>
    %c1_i32 = arith.constant 1 : i32
    %30 = tpu.concatenate %29, %12 in 1 : vector<16x128xf32>, vector<16x128xf32> -> vector<16x256xf32>
    %31 = arith.truncf %30 : vector<16x256xf32> to vector<16x256xbf16>
    %cst_20 = arith.constant dense<0.000000e+00> : vector<16x1024xf32>
    %32 = tpu.matmul %31, %2, %cst_20 {dimension_numbers = #tpu.dot_dimension_numbers<[1], [0], [0], [1], [0, 0, 1, 1], [], []>} : vector<16x256xbf16>, vector<256x1024xbf16>, vector<16x1024xf32> -> vector<16x1024xf32>
    %c16_i32 = arith.constant 16 : i32
    %33 = arith.muli %c1_i32, %c16_i32 : i32
    %34 = tpu.assume_multiple %33, 16 : i32
    %35 = arith.index_cast %34 : i32 to index
    %c0_21 = arith.constant 0 : index
    %36 = vector.load %arg9[%35, %c0_21] : memref<128x512xf32, #tpu.memory_space<vmem>>, vector<16x512xf32>
    %37 = vector.extract_strided_slice %32 {offsets = [0, 0], sizes = [16, 512], strides = [1, 1]} : vector<16x1024xf32> to vector<16x512xf32>
    %38 = arith.addf %36, %37 : vector<16x512xf32>
    %39 = vector.extract_strided_slice %32 {offsets = [0, 512], sizes = [16, 512], strides = [1, 1]} : vector<16x1024xf32> to vector<16x512xf32>
    %40 = vector.broadcast %3 : vector<1x512xf32> to vector<16x512xf32>
    %41 = arith.addf %40, %39 : vector<16x512xf32>
    %42 = vector.extract_strided_slice %38 {offsets = [0, 0], sizes = [16, 384], strides = [1, 1]} : vector<16x512xf32> to vector<16x384xf32>
    %43 = arith.negf %42 : vector<16x384xf32>
    %44 = math.exp %43 : vector<16x384xf32>
    %cst_22 = arith.constant 1.000000e+00 : f32
    %45 = vector.broadcast %cst_22 : f32 to vector<16x384xf32>
    %46 = arith.addf %45, %44 : vector<16x384xf32>
    %47 = arith.divf %45, %46 : vector<16x384xf32>
    %48 = vector.extract_strided_slice %38 {offsets = [0, 384], sizes = [16, 128], strides = [1, 1]} : vector<16x512xf32> to vector<16x128xf32>
    %49 = math.tanh %48 : vector<16x128xf32>
    %50 = vector.extract_strided_slice %47 {offsets = [0, 0], sizes = [16, 128], strides = [1, 1]} : vector<16x384xf32> to vector<16x128xf32>
    %51 = vector.extract_strided_slice %47 {offsets = [0, 128], sizes = [16, 128], strides = [1, 1]} : vector<16x384xf32> to vector<16x128xf32>
    %52 = vector.extract_strided_slice %47 {offsets = [0, 256], sizes = [16, 128], strides = [1, 1]} : vector<16x384xf32> to vector<16x128xf32>
    %53 = arith.mulf %51, %27 : vector<16x128xf32>
    %54 = arith.mulf %50, %49 : vector<16x128xf32>
    %55 = arith.addf %53, %54 : vector<16x128xf32>
    %56 = math.tanh %55 : vector<16x128xf32>
    %57 = arith.mulf %52, %56 : vector<16x128xf32>
    %58 = vector.extract_strided_slice %41 {offsets = [0, 0], sizes = [16, 384], strides = [1, 1]} : vector<16x512xf32> to vector<16x384xf32>
    %59 = arith.negf %58 : vector<16x384xf32>
    %60 = math.exp %59 : vector<16x384xf32>
    %cst_23 = arith.constant 1.000000e+00 : f32
    %61 = vector.broadcast %cst_23 : f32 to vector<16x384xf32>
    %62 = arith.addf %61, %60 : vector<16x384xf32>
    %63 = arith.divf %61, %62 : vector<16x384xf32>
    %64 = vector.extract_strided_slice %41 {offsets = [0, 384], sizes = [16, 128], strides = [1, 1]} : vector<16x512xf32> to vector<16x128xf32>
    %65 = math.tanh %64 : vector<16x128xf32>
    %66 = vector.extract_strided_slice %63 {offsets = [0, 0], sizes = [16, 128], strides = [1, 1]} : vector<16x384xf32> to vector<16x128xf32>
    %67 = vector.extract_strided_slice %63 {offsets = [0, 128], sizes = [16, 128], strides = [1, 1]} : vector<16x384xf32> to vector<16x128xf32>
    %68 = vector.extract_strided_slice %63 {offsets = [0, 256], sizes = [16, 128], strides = [1, 1]} : vector<16x384xf32> to vector<16x128xf32>
    %69 = arith.mulf %67, %12 : vector<16x128xf32>
    %70 = arith.mulf %66, %65 : vector<16x128xf32>
    %71 = arith.addf %69, %70 : vector<16x128xf32>
    %72 = math.tanh %71 : vector<16x128xf32>
    %73 = arith.mulf %68, %72 : vector<16x128xf32>
    %c2_i32 = arith.constant 2 : i32
    %74 = tpu.concatenate %57, %73 in 1 : vector<16x128xf32>, vector<16x128xf32> -> vector<16x256xf32>
    %75 = arith.truncf %74 : vector<16x256xf32> to vector<16x256xbf16>
    %cst_24 = arith.constant dense<0.000000e+00> : vector<16x1024xf32>
    %76 = tpu.matmul %75, %2, %cst_24 {dimension_numbers = #tpu.dot_dimension_numbers<[1], [0], [0], [1], [0, 0, 1, 1], [], []>} : vector<16x256xbf16>, vector<256x1024xbf16>, vector<16x1024xf32> -> vector<16x1024xf32>
    %c16_i32_25 = arith.constant 16 : i32
    %77 = arith.muli %c2_i32, %c16_i32_25 : i32
    %78 = tpu.assume_multiple %77, 16 : i32
    %79 = arith.index_cast %78 : i32 to index
    %c0_26 = arith.constant 0 : index
    %80 = vector.load %arg9[%79, %c0_26] : memref<128x512xf32, #tpu.memory_space<vmem>>, vector<16x512xf32>
    %81 = vector.extract_strided_slice %76 {offsets = [0, 0], sizes = [16, 512], strides = [1, 1]} : vector<16x1024xf32> to vector<16x512xf32>
    %82 = arith.addf %80, %81 : vector<16x512xf32>
    %83 = vector.extract_strided_slice %76 {offsets = [0, 512], sizes = [16, 512], strides = [1, 1]} : vector<16x1024xf32> to vector<16x512xf32>
    %84 = vector.broadcast %3 : vector<1x512xf32> to vector<16x512xf32>
    %85 = arith.addf %84, %83 : vector<16x512xf32>
    %86 = vector.extract_strided_slice %82 {offsets = [0, 0], sizes = [16, 384], strides = [1, 1]} : vector<16x512xf32> to vector<16x384xf32>
    %87 = arith.negf %86 : vector<16x384xf32>
    %88 = math.exp %87 : vector<16x384xf32>
    %cst_27 = arith.constant 1.000000e+00 : f32
    %89 = vector.broadcast %cst_27 : f32 to vector<16x384xf32>
    %90 = arith.addf %89, %88 : vector<16x384xf32>
    %91 = arith.divf %89, %90 : vector<16x384xf32>
    %92 = vector.extract_strided_slice %82 {offsets = [0, 384], sizes = [16, 128], strides = [1, 1]} : vector<16x512xf32> to vector<16x128xf32>
    %93 = math.tanh %92 : vector<16x128xf32>
    %94 = vector.extract_strided_slice %91 {offsets = [0, 0], sizes = [16, 128], strides = [1, 1]} : vector<16x384xf32> to vector<16x128xf32>
    %95 = vector.extract_strided_slice %91 {offsets = [0, 128], sizes = [16, 128], strides = [1, 1]} : vector<16x384xf32> to vector<16x128xf32>
    %96 = vector.extract_strided_slice %91 {offsets = [0, 256], sizes = [16, 128], strides = [1, 1]} : vector<16x384xf32> to vector<16x128xf32>
    %97 = arith.mulf %95, %55 : vector<16x128xf32>
    %98 = arith.mulf %94, %93 : vector<16x128xf32>
    %99 = arith.addf %97, %98 : vector<16x128xf32>
    %100 = math.tanh %99 : vector<16x128xf32>
    %101 = arith.mulf %96, %100 : vector<16x128xf32>
    %102 = vector.extract_strided_slice %85 {offsets = [0, 0], sizes = [16, 384], strides = [1, 1]} : vector<16x512xf32> to vector<16x384xf32>
    %103 = arith.negf %102 : vector<16x384xf32>
    %104 = math.exp %103 : vector<16x384xf32>
    %cst_28 = arith.constant 1.000000e+00 : f32
    %105 = vector.broadcast %cst_28 : f32 to vector<16x384xf32>
    %106 = arith.addf %105, %104 : vector<16x384xf32>
    %107 = arith.divf %105, %106 : vector<16x384xf32>
    %108 = vector.extract_strided_slice %85 {offsets = [0, 384], sizes = [16, 128], strides = [1, 1]} : vector<16x512xf32> to vector<16x128xf32>
    %109 = math.tanh %108 : vector<16x128xf32>
    %110 = vector.extract_strided_slice %107 {offsets = [0, 0], sizes = [16, 128], strides = [1, 1]} : vector<16x384xf32> to vector<16x128xf32>
    %111 = vector.extract_strided_slice %107 {offsets = [0, 128], sizes = [16, 128], strides = [1, 1]} : vector<16x384xf32> to vector<16x128xf32>
    %112 = vector.extract_strided_slice %107 {offsets = [0, 256], sizes = [16, 128], strides = [1, 1]} : vector<16x384xf32> to vector<16x128xf32>
    %113 = arith.mulf %111, %71 : vector<16x128xf32>
    %114 = arith.mulf %110, %109 : vector<16x128xf32>
    %115 = arith.addf %113, %114 : vector<16x128xf32>
    %116 = math.tanh %115 : vector<16x128xf32>
    %117 = arith.mulf %112, %116 : vector<16x128xf32>
    %c3_i32 = arith.constant 3 : i32
    %118 = tpu.concatenate %101, %117 in 1 : vector<16x128xf32>, vector<16x128xf32> -> vector<16x256xf32>
    %119 = arith.truncf %118 : vector<16x256xf32> to vector<16x256xbf16>
    %cst_29 = arith.constant dense<0.000000e+00> : vector<16x1024xf32>
    %120 = tpu.matmul %119, %2, %cst_29 {dimension_numbers = #tpu.dot_dimension_numbers<[1], [0], [0], [1], [0, 0, 1, 1], [], []>} : vector<16x256xbf16>, vector<256x1024xbf16>, vector<16x1024xf32> -> vector<16x1024xf32>
    %c16_i32_30 = arith.constant 16 : i32
    %121 = arith.muli %c3_i32, %c16_i32_30 : i32
    %122 = tpu.assume_multiple %121, 16 : i32
    %123 = arith.index_cast %122 : i32 to index
    %c0_31 = arith.constant 0 : index
    %124 = vector.load %arg9[%123, %c0_31] : memref<128x512xf32, #tpu.memory_space<vmem>>, vector<16x512xf32>
    %125 = vector.extract_strided_slice %120 {offsets = [0, 0], sizes = [16, 512], strides = [1, 1]} : vector<16x1024xf32> to vector<16x512xf32>
    %126 = arith.addf %124, %125 : vector<16x512xf32>
    %127 = vector.extract_strided_slice %120 {offsets = [0, 512], sizes = [16, 512], strides = [1, 1]} : vector<16x1024xf32> to vector<16x512xf32>
    %128 = vector.broadcast %3 : vector<1x512xf32> to vector<16x512xf32>
    %129 = arith.addf %128, %127 : vector<16x512xf32>
    %130 = vector.extract_strided_slice %126 {offsets = [0, 0], sizes = [16, 384], strides = [1, 1]} : vector<16x512xf32> to vector<16x384xf32>
    %131 = arith.negf %130 : vector<16x384xf32>
    %132 = math.exp %131 : vector<16x384xf32>
    %cst_32 = arith.constant 1.000000e+00 : f32
    %133 = vector.broadcast %cst_32 : f32 to vector<16x384xf32>
    %134 = arith.addf %133, %132 : vector<16x384xf32>
    %135 = arith.divf %133, %134 : vector<16x384xf32>
    %136 = vector.extract_strided_slice %126 {offsets = [0, 384], sizes = [16, 128], strides = [1, 1]} : vector<16x512xf32> to vector<16x128xf32>
    %137 = math.tanh %136 : vector<16x128xf32>
    %138 = vector.extract_strided_slice %135 {offsets = [0, 0], sizes = [16, 128], strides = [1, 1]} : vector<16x384xf32> to vector<16x128xf32>
    %139 = vector.extract_strided_slice %135 {offsets = [0, 128], sizes = [16, 128], strides = [1, 1]} : vector<16x384xf32> to vector<16x128xf32>
    %140 = vector.extract_strided_slice %135 {offsets = [0, 256], sizes = [16, 128], strides = [1, 1]} : vector<16x384xf32> to vector<16x128xf32>
    %141 = arith.mulf %139, %99 : vector<16x128xf32>
    %142 = arith.mulf %138, %137 : vector<16x128xf32>
    %143 = arith.addf %141, %142 : vector<16x128xf32>
    %144 = math.tanh %143 : vector<16x128xf32>
    %145 = arith.mulf %140, %144 : vector<16x128xf32>
    %146 = vector.extract_strided_slice %129 {offsets = [0, 0], sizes = [16, 384], strides = [1, 1]} : vector<16x512xf32> to vector<16x384xf32>
    %147 = arith.negf %146 : vector<16x384xf32>
    %148 = math.exp %147 : vector<16x384xf32>
    %cst_33 = arith.constant 1.000000e+00 : f32
    %149 = vector.broadcast %cst_33 : f32 to vector<16x384xf32>
    %150 = arith.addf %149, %148 : vector<16x384xf32>
    %151 = arith.divf %149, %150 : vector<16x384xf32>
    %152 = vector.extract_strided_slice %129 {offsets = [0, 384], sizes = [16, 128], strides = [1, 1]} : vector<16x512xf32> to vector<16x128xf32>
    %153 = math.tanh %152 : vector<16x128xf32>
    %154 = vector.extract_strided_slice %151 {offsets = [0, 0], sizes = [16, 128], strides = [1, 1]} : vector<16x384xf32> to vector<16x128xf32>
    %155 = vector.extract_strided_slice %151 {offsets = [0, 128], sizes = [16, 128], strides = [1, 1]} : vector<16x384xf32> to vector<16x128xf32>
    %156 = vector.extract_strided_slice %151 {offsets = [0, 256], sizes = [16, 128], strides = [1, 1]} : vector<16x384xf32> to vector<16x128xf32>
    %157 = arith.mulf %155, %115 : vector<16x128xf32>
    %158 = arith.mulf %154, %153 : vector<16x128xf32>
    %159 = arith.addf %157, %158 : vector<16x128xf32>
    %160 = math.tanh %159 : vector<16x128xf32>
    %161 = arith.mulf %156, %160 : vector<16x128xf32>
    %c4_i32 = arith.constant 4 : i32
    %162 = tpu.concatenate %145, %161 in 1 : vector<16x128xf32>, vector<16x128xf32> -> vector<16x256xf32>
    %163 = arith.truncf %162 : vector<16x256xf32> to vector<16x256xbf16>
    %cst_34 = arith.constant dense<0.000000e+00> : vector<16x1024xf32>
    %164 = tpu.matmul %163, %2, %cst_34 {dimension_numbers = #tpu.dot_dimension_numbers<[1], [0], [0], [1], [0, 0, 1, 1], [], []>} : vector<16x256xbf16>, vector<256x1024xbf16>, vector<16x1024xf32> -> vector<16x1024xf32>
    %c16_i32_35 = arith.constant 16 : i32
    %165 = arith.muli %c4_i32, %c16_i32_35 : i32
    %166 = tpu.assume_multiple %165, 16 : i32
    %167 = arith.index_cast %166 : i32 to index
    %c0_36 = arith.constant 0 : index
    %168 = vector.load %arg9[%167, %c0_36] : memref<128x512xf32, #tpu.memory_space<vmem>>, vector<16x512xf32>
    %169 = vector.extract_strided_slice %164 {offsets = [0, 0], sizes = [16, 512], strides = [1, 1]} : vector<16x1024xf32> to vector<16x512xf32>
    %170 = arith.addf %168, %169 : vector<16x512xf32>
    %171 = vector.extract_strided_slice %164 {offsets = [0, 512], sizes = [16, 512], strides = [1, 1]} : vector<16x1024xf32> to vector<16x512xf32>
    %172 = vector.broadcast %3 : vector<1x512xf32> to vector<16x512xf32>
    %173 = arith.addf %172, %171 : vector<16x512xf32>
    %174 = vector.extract_strided_slice %170 {offsets = [0, 0], sizes = [16, 384], strides = [1, 1]} : vector<16x512xf32> to vector<16x384xf32>
    %175 = arith.negf %174 : vector<16x384xf32>
    %176 = math.exp %175 : vector<16x384xf32>
    %cst_37 = arith.constant 1.000000e+00 : f32
    %177 = vector.broadcast %cst_37 : f32 to vector<16x384xf32>
    %178 = arith.addf %177, %176 : vector<16x384xf32>
    %179 = arith.divf %177, %178 : vector<16x384xf32>
    %180 = vector.extract_strided_slice %170 {offsets = [0, 384], sizes = [16, 128], strides = [1, 1]} : vector<16x512xf32> to vector<16x128xf32>
    %181 = math.tanh %180 : vector<16x128xf32>
    %182 = vector.extract_strided_slice %179 {offsets = [0, 0], sizes = [16, 128], strides = [1, 1]} : vector<16x384xf32> to vector<16x128xf32>
    %183 = vector.extract_strided_slice %179 {offsets = [0, 128], sizes = [16, 128], strides = [1, 1]} : vector<16x384xf32> to vector<16x128xf32>
    %184 = vector.extract_strided_slice %179 {offsets = [0, 256], sizes = [16, 128], strides = [1, 1]} : vector<16x384xf32> to vector<16x128xf32>
    %185 = arith.mulf %183, %143 : vector<16x128xf32>
    %186 = arith.mulf %182, %181 : vector<16x128xf32>
    %187 = arith.addf %185, %186 : vector<16x128xf32>
    %188 = math.tanh %187 : vector<16x128xf32>
    %189 = arith.mulf %184, %188 : vector<16x128xf32>
    %190 = vector.extract_strided_slice %173 {offsets = [0, 0], sizes = [16, 384], strides = [1, 1]} : vector<16x512xf32> to vector<16x384xf32>
    %191 = arith.negf %190 : vector<16x384xf32>
    %192 = math.exp %191 : vector<16x384xf32>
    %cst_38 = arith.constant 1.000000e+00 : f32
    %193 = vector.broadcast %cst_38 : f32 to vector<16x384xf32>
    %194 = arith.addf %193, %192 : vector<16x384xf32>
    %195 = arith.divf %193, %194 : vector<16x384xf32>
    %196 = vector.extract_strided_slice %173 {offsets = [0, 384], sizes = [16, 128], strides = [1, 1]} : vector<16x512xf32> to vector<16x128xf32>
    %197 = math.tanh %196 : vector<16x128xf32>
    %198 = vector.extract_strided_slice %195 {offsets = [0, 0], sizes = [16, 128], strides = [1, 1]} : vector<16x384xf32> to vector<16x128xf32>
    %199 = vector.extract_strided_slice %195 {offsets = [0, 128], sizes = [16, 128], strides = [1, 1]} : vector<16x384xf32> to vector<16x128xf32>
    %200 = vector.extract_strided_slice %195 {offsets = [0, 256], sizes = [16, 128], strides = [1, 1]} : vector<16x384xf32> to vector<16x128xf32>
    %201 = arith.mulf %199, %159 : vector<16x128xf32>
    %202 = arith.mulf %198, %197 : vector<16x128xf32>
    %203 = arith.addf %201, %202 : vector<16x128xf32>
    %204 = math.tanh %203 : vector<16x128xf32>
    %205 = arith.mulf %200, %204 : vector<16x128xf32>
    %c5_i32 = arith.constant 5 : i32
    %206 = tpu.concatenate %189, %205 in 1 : vector<16x128xf32>, vector<16x128xf32> -> vector<16x256xf32>
    %207 = arith.truncf %206 : vector<16x256xf32> to vector<16x256xbf16>
    %cst_39 = arith.constant dense<0.000000e+00> : vector<16x1024xf32>
    %208 = tpu.matmul %207, %2, %cst_39 {dimension_numbers = #tpu.dot_dimension_numbers<[1], [0], [0], [1], [0, 0, 1, 1], [], []>} : vector<16x256xbf16>, vector<256x1024xbf16>, vector<16x1024xf32> -> vector<16x1024xf32>
    %c16_i32_40 = arith.constant 16 : i32
    %209 = arith.muli %c5_i32, %c16_i32_40 : i32
    %210 = tpu.assume_multiple %209, 16 : i32
    %211 = arith.index_cast %210 : i32 to index
    %c0_41 = arith.constant 0 : index
    %212 = vector.load %arg9[%211, %c0_41] : memref<128x512xf32, #tpu.memory_space<vmem>>, vector<16x512xf32>
    %213 = vector.extract_strided_slice %208 {offsets = [0, 0], sizes = [16, 512], strides = [1, 1]} : vector<16x1024xf32> to vector<16x512xf32>
    %214 = arith.addf %212, %213 : vector<16x512xf32>
    %215 = vector.extract_strided_slice %208 {offsets = [0, 512], sizes = [16, 512], strides = [1, 1]} : vector<16x1024xf32> to vector<16x512xf32>
    %216 = vector.broadcast %3 : vector<1x512xf32> to vector<16x512xf32>
    %217 = arith.addf %216, %215 : vector<16x512xf32>
    %218 = vector.extract_strided_slice %214 {offsets = [0, 0], sizes = [16, 384], strides = [1, 1]} : vector<16x512xf32> to vector<16x384xf32>
    %219 = arith.negf %218 : vector<16x384xf32>
    %220 = math.exp %219 : vector<16x384xf32>
    %cst_42 = arith.constant 1.000000e+00 : f32
    %221 = vector.broadcast %cst_42 : f32 to vector<16x384xf32>
    %222 = arith.addf %221, %220 : vector<16x384xf32>
    %223 = arith.divf %221, %222 : vector<16x384xf32>
    %224 = vector.extract_strided_slice %214 {offsets = [0, 384], sizes = [16, 128], strides = [1, 1]} : vector<16x512xf32> to vector<16x128xf32>
    %225 = math.tanh %224 : vector<16x128xf32>
    %226 = vector.extract_strided_slice %223 {offsets = [0, 0], sizes = [16, 128], strides = [1, 1]} : vector<16x384xf32> to vector<16x128xf32>
    %227 = vector.extract_strided_slice %223 {offsets = [0, 128], sizes = [16, 128], strides = [1, 1]} : vector<16x384xf32> to vector<16x128xf32>
    %228 = vector.extract_strided_slice %223 {offsets = [0, 256], sizes = [16, 128], strides = [1, 1]} : vector<16x384xf32> to vector<16x128xf32>
    %229 = arith.mulf %227, %187 : vector<16x128xf32>
    %230 = arith.mulf %226, %225 : vector<16x128xf32>
    %231 = arith.addf %229, %230 : vector<16x128xf32>
    %232 = math.tanh %231 : vector<16x128xf32>
    %233 = arith.mulf %228, %232 : vector<16x128xf32>
    %234 = vector.extract_strided_slice %217 {offsets = [0, 0], sizes = [16, 384], strides = [1, 1]} : vector<16x512xf32> to vector<16x384xf32>
    %235 = arith.negf %234 : vector<16x384xf32>
    %236 = math.exp %235 : vector<16x384xf32>
    %cst_43 = arith.constant 1.000000e+00 : f32
    %237 = vector.broadcast %cst_43 : f32 to vector<16x384xf32>
    %238 = arith.addf %237, %236 : vector<16x384xf32>
    %239 = arith.divf %237, %238 : vector<16x384xf32>
    %240 = vector.extract_strided_slice %217 {offsets = [0, 384], sizes = [16, 128], strides = [1, 1]} : vector<16x512xf32> to vector<16x128xf32>
    %241 = math.tanh %240 : vector<16x128xf32>
    %242 = vector.extract_strided_slice %239 {offsets = [0, 0], sizes = [16, 128], strides = [1, 1]} : vector<16x384xf32> to vector<16x128xf32>
    %243 = vector.extract_strided_slice %239 {offsets = [0, 128], sizes = [16, 128], strides = [1, 1]} : vector<16x384xf32> to vector<16x128xf32>
    %244 = vector.extract_strided_slice %239 {offsets = [0, 256], sizes = [16, 128], strides = [1, 1]} : vector<16x384xf32> to vector<16x128xf32>
    %245 = arith.mulf %243, %203 : vector<16x128xf32>
    %246 = arith.mulf %242, %241 : vector<16x128xf32>
    %247 = arith.addf %245, %246 : vector<16x128xf32>
    %248 = math.tanh %247 : vector<16x128xf32>
    %249 = arith.mulf %244, %248 : vector<16x128xf32>
    %c6_i32 = arith.constant 6 : i32
    %250 = tpu.concatenate %233, %249 in 1 : vector<16x128xf32>, vector<16x128xf32> -> vector<16x256xf32>
    %251 = arith.truncf %250 : vector<16x256xf32> to vector<16x256xbf16>
    %cst_44 = arith.constant dense<0.000000e+00> : vector<16x1024xf32>
    %252 = tpu.matmul %251, %2, %cst_44 {dimension_numbers = #tpu.dot_dimension_numbers<[1], [0], [0], [1], [0, 0, 1, 1], [], []>} : vector<16x256xbf16>, vector<256x1024xbf16>, vector<16x1024xf32> -> vector<16x1024xf32>
    %c16_i32_45 = arith.constant 16 : i32
    %253 = arith.muli %c6_i32, %c16_i32_45 : i32
    %254 = tpu.assume_multiple %253, 16 : i32
    %255 = arith.index_cast %254 : i32 to index
    %c0_46 = arith.constant 0 : index
    %256 = vector.load %arg9[%255, %c0_46] : memref<128x512xf32, #tpu.memory_space<vmem>>, vector<16x512xf32>
    %257 = vector.extract_strided_slice %252 {offsets = [0, 0], sizes = [16, 512], strides = [1, 1]} : vector<16x1024xf32> to vector<16x512xf32>
    %258 = arith.addf %256, %257 : vector<16x512xf32>
    %259 = vector.extract_strided_slice %252 {offsets = [0, 512], sizes = [16, 512], strides = [1, 1]} : vector<16x1024xf32> to vector<16x512xf32>
    %260 = vector.broadcast %3 : vector<1x512xf32> to vector<16x512xf32>
    %261 = arith.addf %260, %259 : vector<16x512xf32>
    %262 = vector.extract_strided_slice %258 {offsets = [0, 0], sizes = [16, 384], strides = [1, 1]} : vector<16x512xf32> to vector<16x384xf32>
    %263 = arith.negf %262 : vector<16x384xf32>
    %264 = math.exp %263 : vector<16x384xf32>
    %cst_47 = arith.constant 1.000000e+00 : f32
    %265 = vector.broadcast %cst_47 : f32 to vector<16x384xf32>
    %266 = arith.addf %265, %264 : vector<16x384xf32>
    %267 = arith.divf %265, %266 : vector<16x384xf32>
    %268 = vector.extract_strided_slice %258 {offsets = [0, 384], sizes = [16, 128], strides = [1, 1]} : vector<16x512xf32> to vector<16x128xf32>
    %269 = math.tanh %268 : vector<16x128xf32>
    %270 = vector.extract_strided_slice %267 {offsets = [0, 0], sizes = [16, 128], strides = [1, 1]} : vector<16x384xf32> to vector<16x128xf32>
    %271 = vector.extract_strided_slice %267 {offsets = [0, 128], sizes = [16, 128], strides = [1, 1]} : vector<16x384xf32> to vector<16x128xf32>
    %272 = vector.extract_strided_slice %267 {offsets = [0, 256], sizes = [16, 128], strides = [1, 1]} : vector<16x384xf32> to vector<16x128xf32>
    %273 = arith.mulf %271, %231 : vector<16x128xf32>
    %274 = arith.mulf %270, %269 : vector<16x128xf32>
    %275 = arith.addf %273, %274 : vector<16x128xf32>
    %276 = math.tanh %275 : vector<16x128xf32>
    %277 = arith.mulf %272, %276 : vector<16x128xf32>
    %278 = vector.extract_strided_slice %261 {offsets = [0, 0], sizes = [16, 384], strides = [1, 1]} : vector<16x512xf32> to vector<16x384xf32>
    %279 = arith.negf %278 : vector<16x384xf32>
    %280 = math.exp %279 : vector<16x384xf32>
    %cst_48 = arith.constant 1.000000e+00 : f32
    %281 = vector.broadcast %cst_48 : f32 to vector<16x384xf32>
    %282 = arith.addf %281, %280 : vector<16x384xf32>
    %283 = arith.divf %281, %282 : vector<16x384xf32>
    %284 = vector.extract_strided_slice %261 {offsets = [0, 384], sizes = [16, 128], strides = [1, 1]} : vector<16x512xf32> to vector<16x128xf32>
    %285 = math.tanh %284 : vector<16x128xf32>
    %286 = vector.extract_strided_slice %283 {offsets = [0, 0], sizes = [16, 128], strides = [1, 1]} : vector<16x384xf32> to vector<16x128xf32>
    %287 = vector.extract_strided_slice %283 {offsets = [0, 128], sizes = [16, 128], strides = [1, 1]} : vector<16x384xf32> to vector<16x128xf32>
    %288 = vector.extract_strided_slice %283 {offsets = [0, 256], sizes = [16, 128], strides = [1, 1]} : vector<16x384xf32> to vector<16x128xf32>
    %289 = arith.mulf %287, %247 : vector<16x128xf32>
    %290 = arith.mulf %286, %285 : vector<16x128xf32>
    %291 = arith.addf %289, %290 : vector<16x128xf32>
    %292 = math.tanh %291 : vector<16x128xf32>
    %293 = arith.mulf %288, %292 : vector<16x128xf32>
    %c7_i32 = arith.constant 7 : i32
    %294 = tpu.concatenate %277, %293 in 1 : vector<16x128xf32>, vector<16x128xf32> -> vector<16x256xf32>
    %295 = arith.truncf %294 : vector<16x256xf32> to vector<16x256xbf16>
    %cst_49 = arith.constant dense<0.000000e+00> : vector<16x1024xf32>
    %296 = tpu.matmul %295, %2, %cst_49 {dimension_numbers = #tpu.dot_dimension_numbers<[1], [0], [0], [1], [0, 0, 1, 1], [], []>} : vector<16x256xbf16>, vector<256x1024xbf16>, vector<16x1024xf32> -> vector<16x1024xf32>
    %c16_i32_50 = arith.constant 16 : i32
    %297 = arith.muli %c7_i32, %c16_i32_50 : i32
    %298 = tpu.assume_multiple %297, 16 : i32
    %299 = arith.index_cast %298 : i32 to index
    %c0_51 = arith.constant 0 : index
    %300 = vector.load %arg9[%299, %c0_51] : memref<128x512xf32, #tpu.memory_space<vmem>>, vector<16x512xf32>
    %301 = vector.extract_strided_slice %296 {offsets = [0, 0], sizes = [16, 512], strides = [1, 1]} : vector<16x1024xf32> to vector<16x512xf32>
    %302 = arith.addf %300, %301 : vector<16x512xf32>
    %303 = vector.extract_strided_slice %296 {offsets = [0, 512], sizes = [16, 512], strides = [1, 1]} : vector<16x1024xf32> to vector<16x512xf32>
    %304 = vector.broadcast %3 : vector<1x512xf32> to vector<16x512xf32>
    %305 = arith.addf %304, %303 : vector<16x512xf32>
    %306 = vector.extract_strided_slice %302 {offsets = [0, 0], sizes = [16, 384], strides = [1, 1]} : vector<16x512xf32> to vector<16x384xf32>
    %307 = arith.negf %306 : vector<16x384xf32>
    %308 = math.exp %307 : vector<16x384xf32>
    %cst_52 = arith.constant 1.000000e+00 : f32
    %309 = vector.broadcast %cst_52 : f32 to vector<16x384xf32>
    %310 = arith.addf %309, %308 : vector<16x384xf32>
    %311 = arith.divf %309, %310 : vector<16x384xf32>
    %312 = vector.extract_strided_slice %302 {offsets = [0, 384], sizes = [16, 128], strides = [1, 1]} : vector<16x512xf32> to vector<16x128xf32>
    %313 = math.tanh %312 : vector<16x128xf32>
    %314 = vector.extract_strided_slice %311 {offsets = [0, 0], sizes = [16, 128], strides = [1, 1]} : vector<16x384xf32> to vector<16x128xf32>
    %315 = vector.extract_strided_slice %311 {offsets = [0, 128], sizes = [16, 128], strides = [1, 1]} : vector<16x384xf32> to vector<16x128xf32>
    %316 = vector.extract_strided_slice %311 {offsets = [0, 256], sizes = [16, 128], strides = [1, 1]} : vector<16x384xf32> to vector<16x128xf32>
    %317 = arith.mulf %315, %275 : vector<16x128xf32>
    %318 = arith.mulf %314, %313 : vector<16x128xf32>
    %319 = arith.addf %317, %318 : vector<16x128xf32>
    %320 = math.tanh %319 : vector<16x128xf32>
    %321 = arith.mulf %316, %320 : vector<16x128xf32>
    %322 = vector.extract_strided_slice %305 {offsets = [0, 0], sizes = [16, 384], strides = [1, 1]} : vector<16x512xf32> to vector<16x384xf32>
    %323 = arith.negf %322 : vector<16x384xf32>
    %324 = math.exp %323 : vector<16x384xf32>
    %cst_53 = arith.constant 1.000000e+00 : f32
    %325 = vector.broadcast %cst_53 : f32 to vector<16x384xf32>
    %326 = arith.addf %325, %324 : vector<16x384xf32>
    %327 = arith.divf %325, %326 : vector<16x384xf32>
    %328 = vector.extract_strided_slice %305 {offsets = [0, 384], sizes = [16, 128], strides = [1, 1]} : vector<16x512xf32> to vector<16x128xf32>
    %329 = math.tanh %328 : vector<16x128xf32>
    %330 = vector.extract_strided_slice %327 {offsets = [0, 0], sizes = [16, 128], strides = [1, 1]} : vector<16x384xf32> to vector<16x128xf32>
    %331 = vector.extract_strided_slice %327 {offsets = [0, 128], sizes = [16, 128], strides = [1, 1]} : vector<16x384xf32> to vector<16x128xf32>
    %332 = vector.extract_strided_slice %327 {offsets = [0, 256], sizes = [16, 128], strides = [1, 1]} : vector<16x384xf32> to vector<16x128xf32>
    %333 = arith.mulf %331, %291 : vector<16x128xf32>
    %334 = arith.mulf %330, %329 : vector<16x128xf32>
    %335 = arith.addf %333, %334 : vector<16x128xf32>
    %336 = math.tanh %335 : vector<16x128xf32>
    %337 = arith.mulf %332, %336 : vector<16x128xf32>
    %c7_i32_54 = arith.constant 7 : i32
    %338 = tpu.concatenate %321, %337 in 1 : vector<16x128xf32>, vector<16x128xf32> -> vector<16x256xf32>
    %339 = arith.truncf %338 : vector<16x256xf32> to vector<16x256xbf16>
    %340 = vector.extract_strided_slice %2 {offsets = [0, 512], sizes = [256, 512], strides = [1, 1]} : vector<256x1024xbf16> to vector<256x512xbf16>
    %cst_55 = arith.constant dense<0.000000e+00> : vector<16x512xf32>
    %341 = tpu.matmul %339, %340, %cst_55 {dimension_numbers = #tpu.dot_dimension_numbers<[1], [0], [0], [1], [0, 0, 1, 1], [], []>} : vector<16x256xbf16>, vector<256x512xbf16>, vector<16x512xf32> -> vector<16x512xf32>
    %342 = vector.broadcast %3 : vector<1x512xf32> to vector<16x512xf32>
    %343 = arith.addf %342, %341 : vector<16x512xf32>
    %344 = vector.extract_strided_slice %343 {offsets = [0, 0], sizes = [16, 384], strides = [1, 1]} : vector<16x512xf32> to vector<16x384xf32>
    %345 = arith.negf %344 : vector<16x384xf32>
    %346 = math.exp %345 : vector<16x384xf32>
    %cst_56 = arith.constant 1.000000e+00 : f32
    %347 = vector.broadcast %cst_56 : f32 to vector<16x384xf32>
    %348 = arith.addf %347, %346 : vector<16x384xf32>
    %349 = arith.divf %347, %348 : vector<16x384xf32>
    %350 = vector.extract_strided_slice %343 {offsets = [0, 384], sizes = [16, 128], strides = [1, 1]} : vector<16x512xf32> to vector<16x128xf32>
    %351 = math.tanh %350 : vector<16x128xf32>
    %352 = vector.extract_strided_slice %349 {offsets = [0, 0], sizes = [16, 128], strides = [1, 1]} : vector<16x384xf32> to vector<16x128xf32>
    %353 = vector.extract_strided_slice %349 {offsets = [0, 128], sizes = [16, 128], strides = [1, 1]} : vector<16x384xf32> to vector<16x128xf32>
    %354 = vector.extract_strided_slice %349 {offsets = [0, 256], sizes = [16, 128], strides = [1, 1]} : vector<16x384xf32> to vector<16x128xf32>
    %355 = arith.mulf %353, %335 : vector<16x128xf32>
    %356 = arith.mulf %352, %351 : vector<16x128xf32>
    %357 = arith.addf %355, %356 : vector<16x128xf32>
    %358 = math.tanh %357 : vector<16x128xf32>
    %359 = arith.mulf %354, %358 : vector<16x128xf32>
    %360 = arith.truncf %359 : vector<16x128xf32> to vector<16x128xbf16>
    %cst_57 = arith.constant dense<0.000000e+00> : vector<16x128xf32>
    %361 = tpu.matmul %360, %4, %cst_57 {dimension_numbers = #tpu.dot_dimension_numbers<[1], [0], [0], [1], [0, 0, 1, 1], [], []>} : vector<16x128xbf16>, vector<128x128xbf16>, vector<16x128xf32> -> vector<16x128xf32>
    %362 = vector.broadcast %5 : vector<1x128xf32> to vector<16x128xf32>
    %363 = arith.addf %361, %362 : vector<16x128xf32>
    %c0_58 = arith.constant 0 : index
    %c0_59 = arith.constant 0 : index
    %364 = vector.load %arg8[%c0_58, %c0_59] : memref<16x128xf32, #tpu.memory_space<vmem>>, vector<16x128xf32>
    tpu.vector_store %arg8[%c0_58, %c0_59], %363 {strides = array<i32>} : memref<16x128xf32, #tpu.memory_space<vmem>>, vector<16x128xf32>,
    return
  }
  func.func @transform_0(%arg0: i32) -> (i32, i32, i32) {
    %c0_i32 = arith.constant 0 : i32
    %c0_i32_0 = arith.constant 0 : i32
    %c0_i32_1 = arith.constant 0 : i32
    return %c0_i32, %arg0, %c0_i32_0 : i32, i32, i32
  }
  func.func @transform_1(%arg0: i32) -> (i32, i32) {
    %c0_i32 = arith.constant 0 : i32
    %c0_i32_0 = arith.constant 0 : i32
    %c0_i32_1 = arith.constant 0 : i32
    return %c0_i32, %c0_i32_0 : i32, i32
  }
  func.func @transform_2(%arg0: i32) -> (i32, i32) {
    %c0_i32 = arith.constant 0 : i32
    %c0_i32_0 = arith.constant 0 : i32
    %c0_i32_1 = arith.constant 0 : i32
    return %c0_i32, %c0_i32_0 : i32, i32
  }
  func.func @transform_3(%arg0: i32) -> (i32, i32) {
    %c0_i32 = arith.constant 0 : i32
    %c0_i32_0 = arith.constant 0 : i32
    %c0_i32_1 = arith.constant 0 : i32
    return %c0_i32, %c0_i32_0 : i32, i32
  }
  func.func @transform_4(%arg0: i32) -> (i32, i32) {
    %c0_i32 = arith.constant 0 : i32
    %c0_i32_0 = arith.constant 0 : i32
    %c0_i32_1 = arith.constant 0 : i32
    return %c0_i32, %c0_i32_0 : i32, i32
  }
  func.func @transform_5(%arg0: i32) -> (i32, i32) {
    %c0_i32 = arith.constant 0 : i32
    %c0_i32_0 = arith.constant 0 : i32
    %c0_i32_1 = arith.constant 0 : i32
    return %c0_i32, %c0_i32_0 : i32, i32
  }
  func.func @transform_6(%arg0: i32) -> (i32, i32) {
    %c0_i32 = arith.constant 0 : i32
    %c0_i32_0 = arith.constant 0 : i32
    %c0_i32_1 = arith.constant 0 : i32
    return %c0_i32, %c0_i32_0 : i32, i32
  }
  func.func @transform_7(%arg0: i32) -> (i32, i32) {
    %c0_i32 = arith.constant 0 : i32
    %c0_i32_0 = arith.constant 0 : i32
    return %arg0, %c0_i32 : i32, i32
  }
}

</mosaic_0001>

<llo_original>
// kernel: rnn_classifier_forward.1
$region0: #{rnn_classifier_forward.1}
  #allocation0 [shape = 'u32[]', space=smem, size = 0x4, offset = 0x4, fixed_abs, tag = 'smem constant byte address 0x4 - core index']
  #allocation1 [shape = 'u32[144,128]{1,0:T(1,128)}', space=vmem, size = 0x12000, scoped, tag = 'internal scratch']
  #allocation2 [shape = 'f32[128,512]{1,0:T(8,128)}', space=vmem, size = 0x40000, scoped, tag = 'scratch operand']
  %s0 = inlined_call_operand.vmem [shape: bf16[8,16,224], index: 0, kind: input, shape index: {}]
  %s1 = inlined_call_operand.hbm [shape: bf16[224,512], index: 1, kind: input, shape index: {}]
  %s2 = inlined_call_operand.vmem [shape: f32[1,512], index: 2, kind: input, shape index: {}]
  %s3 = inlined_call_operand.hbm [shape: bf16[256,1024], index: 3, kind: input, shape index: {}]
  %s4 = inlined_call_operand.vmem [shape: f32[1,512], index: 4, kind: input, shape index: {}]
  %s5 = inlined_call_operand.vmem [shape: bf16[128,128], index: 5, kind: input, shape index: {}]
  %s6 = inlined_call_operand.vmem [shape: f32[1,128], index: 6, kind: input, shape index: {}]
  %s7 = inlined_call_operand.vmem [shape: f32[16,128], index: 7, kind: output, shape index: {}]
  %s8 = sld [smem:[#allocation0]]
  $region46: #{rnn_classifier_forward.1} parent=0
    _
  %s10 = ssub.s32 1, %s8
  %s11 = scalar_select 0, %s10, %s8
  $region1: #{rnn_classifier_forward.1} parent=0
    #allocation3 [shape = 'u8[229376]{0}', space=vmem, size = 0x38000, scoped, tag = 'input window, operand 1, single buffered']
    #allocation4 [shape = 's32[1]{0}', space=sflag, size = 0x4, scoped, tag = 'scoped memory for rnn_classifier_forward.1']
    #allocation5 [shape = 'u8[524288]{0}', space=vmem, size = 0x80000, scoped, tag = 'input window, operand 3, single buffered']
    #allocation6 [shape = 's32[1]{0}', space=sflag, size = 0x4, scoped, tag = 'scoped memory for rnn_classifier_forward.1']
    %12 = vsyncpa [#allocation4], 0
    %13 = vsyncpa [#allocation6], 0
    // Predicated region
    $region2: #{rnn_classifier_forward.1} parent=1 // pred_check
      _
    $region3: #{rnn_classifier_forward.1} parent=1 // pred_check_branch
      %15 = sbr.rel (0) target = $region5
    $region4: #{rnn_classifier_forward.1} parent=1 // pred_region
      _
    $region5: #{rnn_classifier_forward.1} parent=1 // pred_fallthru
      _
    // Predicated region
    $region6: #{rnn_classifier_forward.1} parent=1 // pred_check
      _
    $region7: #{rnn_classifier_forward.1} parent=1 // pred_check_branch
      %17 = sbr.rel (0) target = $region9
    $region8: #{rnn_classifier_forward.1} parent=1 // pred_region
      %s19 = ssub.s32 7168, 7168
      %20 = vsyncadd [#allocation4], %s19
      %s21 = sshll.u32 [#allocation3], 4
      %s22 = int_to_ptr.vmem [resolvable:$true] %s21
      %27 = dma.hbm_to_vmem [thread:$0]  %s1, 7168, %s22, [#allocation4], 256, 256, 16
    $region9: #{rnn_classifier_forward.1} parent=1 // pred_fallthru
      _
    // Predicated region
    $region10: #{rnn_classifier_forward.1} parent=1 // pred_check
      _
    $region11: #{rnn_classifier_forward.1} parent=1 // pred_check_branch
      %29 = sbr.rel (0) target = $region13
    $region12: #{rnn_classifier_forward.1} parent=1 // pred_region
      _
    $region13: #{rnn_classifier_forward.1} parent=1 // pred_fallthru
      _
    // Predicated region
    $region14: #{rnn_classifier_forward.1} parent=1 // pred_check
      _
    $region15: #{rnn_classifier_forward.1} parent=1 // pred_check_branch
      %31 = sbr.rel (0) target = $region17
    $region16: #{rnn_classifier_forward.1} parent=1 // pred_region
      %s33 = ssub.s32 16384, 16384
      %34 = vsyncadd [#allocation6], %s33
      %s35 = sshll.u32 [#allocation5], 4
      %s36 = int_to_ptr.vmem [resolvable:$true] %s35
      %41 = dma.hbm_to_vmem [thread:$0]  %s3, 16384, %s36, [#allocation6], 512, 512, 32
    $region17: #{rnn_classifier_forward.1} parent=1 // pred_fallthru
      _
    // Predicated region
    $region18: #{rnn_classifier_forward.1} parent=1 // pred_check
      _
    $region19: #{rnn_classifier_forward.1} parent=1 // pred_check_branch
      %43 = sbr.rel (0) target = $region21
    $region20: #{rnn_classifier_forward.1} parent=1 // pred_region
      _
    $region21: #{rnn_classifier_forward.1} parent=1 // pred_fallthru
      _
    // Predicated region
    $region22: #{rnn_classifier_forward.1} parent=1 // pred_check
      _
    $region23: #{rnn_classifier_forward.1} parent=1 // pred_check_branch
      %45 = sbr.rel (0) target = $region25
    $region24: #{rnn_classifier_forward.1} parent=1 // pred_region
      _
    $region25: #{rnn_classifier_forward.1} parent=1 // pred_fallthru
      _
    // Predicated region
    $region26: #{rnn_classifier_forward.1} parent=1 // pred_check
      _
    $region27: #{rnn_classifier_forward.1} parent=1 // pred_check_branch
      %47 = sbr.rel (0) target = $region29
    $region28: #{rnn_classifier_forward.1} parent=1 // pred_region
      _
    $region29: #{rnn_classifier_forward.1} parent=1 // pred_fallthru
      _
    // Predicated region
    $region30: #{rnn_classifier_forward.1} parent=1 // pred_check
      _
    $region31: #{rnn_classifier_forward.1} parent=1 // pred_check_branch
      %49 = sbr.rel (0) target = $region33
    $region32: #{rnn_classifier_forward.1} parent=1 // pred_region
      %50 = dma.done [#allocation4], 7168
    $region33: #{rnn_classifier_forward.1} parent=1 // pred_fallthru
      _
    // Predicated region
    $region34: #{rnn_classifier_forward.1} parent=1 // pred_check
      _
    $region35: #{rnn_classifier_forward.1} parent=1 // pred_check_branch
      %52 = sbr.rel (0) target = $region37
    $region36: #{rnn_classifier_forward.1} parent=1 // pred_region
      %53 = dma.done [#allocation6], 16384
    $region37: #{rnn_classifier_forward.1} parent=1 // pred_fallthru
      _
    %v55 = vld [vmem:[#allocation3] sm:$0xff]
    %v56 = vld [vmem:[#allocation3 + $0x8] sm:$0xff]
    %v57 = vld [vmem:[#allocation3 + $0x10] sm:$0xff]
    %v58 = vld [vmem:[#allocation3 + $0x18] sm:$0xff]
    %v59 = vld [vmem:[#allocation3 + $0x20] sm:$0xff]
    %v60 = vld [vmem:[#allocation3 + $0x28] sm:$0xff]
    %v61 = vld [vmem:[#allocation3 + $0x30] sm:$0xff]
    %v62 = vld [vmem:[#allocation3 + $0x38] sm:$0xff]
    %v63 = vld [vmem:[#allocation3 + $0x40] sm:$0xff]
    %v64 = vld [vmem:[#allocation3 + $0x48] sm:$0xff]
    %v65 = vld [vmem:[#allocation3 + $0x50] sm:$0xff]
    %v66 = vld [vmem:[#allocation3 + $0x58] sm:$0xff]
    %v67 = vld [vmem:[#allocation3 + $0x60] sm:$0xff]
    %v68 = vld [vmem:[#allocation3 + $0x68] sm:$0xff]
    %v69 = vld [vmem:[#allocation3 + $0x70] sm:$0xff]
    %v70 = vld [vmem:[#allocation3 + $0x78] sm:$0xff]
    %v71 = vld [vmem:[#allocation3 + $0x80] sm:$0xff]
    %v72 = vld [vmem:[#allocation3 + $0x88] sm:$0xff]
    %v73 = vld [vmem:[#allocation3 + $0x90] sm:$0xff]
    %v74 = vld [vmem:[#allocation3 + $0x98] sm:$0xff]
    %v75 = vld [vmem:[#allocation3 + $0xa0] sm:$0xff]
    %v76 = vld [vmem:[#allocation3 + $0xa8] sm:$0xff]
    %v77 = vld [vmem:[#allocation3 + $0xb0] sm:$0xff]
    %v78 = vld [vmem:[#allocation3 + $0xb8] sm:$0xff]
    %v79 = vld [vmem:[#allocation3 + $0xc0] sm:$0xff]
    %v80 = vld [vmem:[#allocation3 + $0xc8] sm:$0xff]
    %v81 = vld [vmem:[#allocation3 + $0xd0] sm:$0xff]
    %v82 = vld [vmem:[#allocation3 + $0xd8] sm:$0xff]
    %v83 = vld [vmem:[#allocation3 + $0xe0] sm:$0xff]
    %v84 = vld [vmem:[#allocation3 + $0xe8] sm:$0xff]
    %v85 = vld [vmem:[#allocation3 + $0xf0] sm:$0xff]
    %v86 = vld [vmem:[#allocation3 + $0xf8] sm:$0xff]
    %v87 = vld [vmem:[#allocation3 + $0x100] sm:$0xff]
    %v88 = vld [vmem:[#allocation3 + $0x108] sm:$0xff]
    %v89 = vld [vmem:[#allocation3 + $0x110] sm:$0xff]
    %v90 = vld [vmem:[#allocation3 + $0x118] sm:$0xff]
    %v91 = vld [vmem:[#allocation3 + $0x120] sm:$0xff]
    %v92 = vld [vmem:[#allocation3 + $0x128] sm:$0xff]
    %v93 = vld [vmem:[#allocation3 + $0x130] sm:$0xff]
    %v94 = vld [vmem:[#allocation3 + $0x138] sm:$0xff]
    %v95 = vld [vmem:[#allocation3 + $0x140] sm:$0xff]
    %v96 = vld [vmem:[#allocation3 + $0x148] sm:$0xff]
    %v97 = vld [vmem:[#allocation3 + $0x150] sm:$0xff]
    %v98 = vld [vmem:[#allocation3 + $0x158] sm:$0xff]
    %v99 = vld [vmem:[#allocation3 + $0x160] sm:$0xff]
    %v100 = vld [vmem:[#allocation3 + $0x168] sm:$0xff]
    %v101 = vld [vmem:[#allocation3 + $0x170] sm:$0xff]
    %v102 = vld [vmem:[#allocation3 + $0x178] sm:$0xff]
    %v103 = vld [vmem:[#allocation3 + $0x180] sm:$0xff]
    %v104 = vld [vmem:[#allocation3 + $0x188] sm:$0xff]
    %v105 = vld [vmem:[#allocation3 + $0x190] sm:$0xff]
    %v106 = vld [vmem:[#allocation3 + $0x198] sm:$0xff]
    %v107 = vld [vmem:[#allocation3 + $0x1a0] sm:$0xff]
    %v108 = vld [vmem:[#allocation3 + $0x1a8] sm:$0xff]
    %v109 = vld [vmem:[#allocation3 + $0x1b0] sm:$0xff]
    %v110 = vld [vmem:[#allocation3 + $0x1b8] sm:$0xff]
    %v111 = vld [vmem:[%s2] sm:$0xf]
    %v112 = vld [vmem:[#allocation5] sm:$0xff]
    %v113 = vld [vmem:[#allocation5 + $0x8] sm:$0xff]
    %v114 = vld [vmem:[#allocation5 + $0x10] sm:$0xff]
    %v115 = vld [vmem:[#allocation5 + $0x18] sm:$0xff]
    %v116 = vld [vmem:[#allocation5 + $0x20] sm:$0xff]
    %v117 = vld [vmem:[#allocation5 + $0x28] sm:$0xff]
    %v118 = vld [vmem:[#allocation5 + $0x30] sm:$0xff]
    %v119 = vld [vmem:[#allocation5 + $0x38] sm:$0xff]
    %v120 = vld [vmem:[#allocation5 + $0x40] sm:$0xff]
    %v121 = vld [vmem:[#allocation5 + $0x48] sm:$0xff]
    %v122 = vld [vmem:[#allocation5 + $0x50] sm:$0xff]
    %v123 = vld [vmem:[#allocation5 + $0x58] sm:$0xff]
    %v124 = vld [vmem:[#allocation5 + $0x60] sm:$0xff]
    %v125 = vld [vmem:[#allocation5 + $0x68] sm:$0xff]
    %v126 = vld [vmem:[#allocation5 + $0x70] sm:$0xff]
    %v127 = vld [vmem:[#allocation5 + $0x78] sm:$0xff]
    %v128 = vld [vmem:[#allocation5 + $0x80] sm:$0xff]
    %v129 = vld [vmem:[#allocation5 + $0x88] sm:$0xff]
    %v130 = vld [vmem:[#allocation5 + $0x90] sm:$0xff]
    %v131 = vld [vmem:[#allocation5 + $0x98] sm:$0xff]
    %v132 = vld [vmem:[#allocation5 + $0xa0] sm:$0xff]
    %v133 = vld [vmem:[#allocation5 + $0xa8] sm:$0xff]
    %v134 = vld [vmem:[#allocation5 + $0xb0] sm:$0xff]
    %v135 = vld [vmem:[#allocation5 + $0xb8] sm:$0xff]
    %v136 = vld [vmem:[#allocation5 + $0xc0] sm:$0xff]
    %v137 = vld [vmem:[#allocation5 + $0xc8] sm:$0xff]
    %v138 = vld [vmem:[#allocation5 + $0xd0] sm:$0xff]
    %v139 = vld [vmem:[#allocation5 + $0xd8] sm:$0xff]
    %v140 = vld [vmem:[#allocation5 + $0xe0] sm:$0xff]
    %v141 = vld [vmem:[#allocation5 + $0xe8] sm:$0xff]
    %v142 = vld [vmem:[#allocation5 + $0xf0] sm:$0xff]
    %v143 = vld [vmem:[#allocation5 + $0xf8] sm:$0xff]
    %v144 = vld [vmem:[#allocation5 + $0x100] sm:$0xff]
    %v145 = vld [vmem:[#allocation5 + $0x108] sm:$0xff]
    %v146 = vld [vmem:[#allocation5 + $0x110] sm:$0xff]
    %v147 = vld [vmem:[#allocation5 + $0x118] sm:$0xff]
    %v148 = vld [vmem:[#allocation5 + $0x120] sm:$0xff]
    %v149 = vld [vmem:[#allocation5 + $0x128] sm:$0xff]
    %v150 = vld [vmem:[#allocation5 + $0x130] sm:$0xff]
    %v151 = vld [vmem:[#allocation5 + $0x138] sm:$0xff]
    %v152 = vld [vmem:[#allocation5 + $0x140] sm:$0xff]
    %v153 = vld [vmem:[#allocation5 + $0x148] sm:$0xff]
    %v154 = vld [vmem:[#allocation5 + $0x150] sm:$0xff]
    %v155 = vld [vmem:[#allocation5 + $0x158] sm:$0xff]
    %v156 = vld [vmem:[#allocation5 + $0x160] sm:$0xff]
    %v157 = vld [vmem:[#allocation5 + $0x168] sm:$0xff]
    %v158 = vld [vmem:[#allocation5 + $0x170] sm:$0xff]
    %v159 = vld [vmem:[#allocation5 + $0x178] sm:$0xff]
    %v160 = vld [vmem:[#allocation5 + $0x180] sm:$0xff]
    %v161 = vld [vmem:[#allocation5 + $0x188] sm:$0xff]
    %v162 = vld [vmem:[#allocation5 + $0x190] sm:$0xff]
    %v163 = vld [vmem:[#allocation5 + $0x198] sm:$0xff]
    %v164 = vld [vmem:[#allocation5 + $0x1a0] sm:$0xff]
    %v165 = vld [vmem:[#allocation5 + $0x1a8] sm:$0xff]
    %v166 = vld [vmem:[#allocation5 + $0x1b0] sm:$0xff]
    %v167 = vld [vmem:[#allocation5 + $0x1b8] sm:$0xff]
    %v168 = vld [vmem:[#allocation5 + $0x1c0] sm:$0xff]
    %v169 = vld [vmem:[#allocation5 + $0x1c8] sm:$0xff]
    %v170 = vld [vmem:[#allocation5 + $0x1d0] sm:$0xff]
    %v171 = vld [vmem:[#allocation5 + $0x1d8] sm:$0xff]
    %v172 = vld [vmem:[#allocation5 + $0x1e0] sm:$0xff]
    %v173 = vld [vmem:[#allocation5 + $0x1e8] sm:$0xff]
    %v174 = vld [vmem:[#allocation5 + $0x1f0] sm:$0xff]
    %v175 = vld [vmem:[#allocation5 + $0x1f8] sm:$0xff]
    %v176 = vld [vmem:[#allocation5 + $0x200] sm:$0xff]
    %v177 = vld [vmem:[#allocation5 + $0x208] sm:$0xff]
    %v178 = vld [vmem:[#allocation5 + $0x210] sm:$0xff]
    %v179 = vld [vmem:[#allocation5 + $0x218] sm:$0xff]
    %v180 = vld [vmem:[#allocation5 + $0x220] sm:$0xff]
    %v181 = vld [vmem:[#allocation5 + $0x228] sm:$0xff]
    %v182 = vld [vmem:[#allocation5 + $0x230] sm:$0xff]
    %v183 = vld [vmem:[#allocation5 + $0x238] sm:$0xff]
    %v184 = vld [vmem:[#allocation5 + $0x240] sm:$0xff]
    %v185 = vld [vmem:[#allocation5 + $0x248] sm:$0xff]
    %v186 = vld [vmem:[#allocation5 + $0x250] sm:$0xff]
    %v187 = vld [vmem:[#allocation5 + $0x258] sm:$0xff]
    %v188 = vld [vmem:[#allocation5 + $0x260] sm:$0xff]
    %v189 = vld [vmem:[#allocation5 + $0x268] sm:$0xff]
    %v190 = vld [vmem:[#allocation5 + $0x270] sm:$0xff]
    %v191 = vld [vmem:[#allocation5 + $0x278] sm:$0xff]
    %v192 = vld [vmem:[#allocation5 + $0x280] sm:$0xff]
    %v193 = vld [vmem:[#allocation5 + $0x288] sm:$0xff]
    %v194 = vld [vmem:[#allocation5 + $0x290] sm:$0xff]
    %v195 = vld [vmem:[#allocation5 + $0x298] sm:$0xff]
    %v196 = vld [vmem:[#allocation5 + $0x2a0] sm:$0xff]
    %v197 = vld [vmem:[#allocation5 + $0x2a8] sm:$0xff]
    %v198 = vld [vmem:[#allocation5 + $0x2b0] sm:$0xff]
    %v199 = vld [vmem:[#allocation5 + $0x2b8] sm:$0xff]
    %v200 = vld [vmem:[#allocation5 + $0x2c0] sm:$0xff]
    %v201 = vld [vmem:[#allocation5 + $0x2c8] sm:$0xff]
    %v202 = vld [vmem:[#allocation5 + $0x2d0] sm:$0xff]
    %v203 = vld [vmem:[#allocation5 + $0x2d8] sm:$0xff]
    %v204 = vld [vmem:[#allocation5 + $0x2e0] sm:$0xff]
    %v205 = vld [vmem:[#allocation5 + $0x2e8] sm:$0xff]
    %v206 = vld [vmem:[#allocation5 + $0x2f0] sm:$0xff]
    %v207 = vld [vmem:[#allocation5 + $0x2f8] sm:$0xff]
    %v208 = vld [vmem:[#allocation5 + $0x300] sm:$0xff]
    %v209 = vld [vmem:[#allocation5 + $0x308] sm:$0xff]
    %v210 = vld [vmem:[#allocation5 + $0x310] sm:$0xff]
    %v211 = vld [vmem:[#allocation5 + $0x318] sm:$0xff]
    %v212 = vld [vmem:[#allocation5 + $0x320] sm:$0xff]
    %v213 = vld [vmem:[#allocation5 + $0x328] sm:$0xff]
    %v214 = vld [vmem:[#allocation5 + $0x330] sm:$0xff]
    %v215 = vld [vmem:[#allocation5 + $0x338] sm:$0xff]
    %v216 = vld [vmem:[#allocation5 + $0x340] sm:$0xff]
    %v217 = vld [vmem:[#allocation5 + $0x348] sm:$0xff]
    %v218 = vld [vmem:[#allocation5 + $0x350] sm:$0xff]
    %v219 = vld [vmem:[#allocation5 + $0x358] sm:$0xff]
    %v220 = vld [vmem:[#allocation5 + $0x360] sm:$0xff]
    %v221 = vld [vmem:[#allocation5 + $0x368] sm:$0xff]
    %v222 = vld [vmem:[#allocation5 + $0x370] sm:$0xff]
    %v223 = vld [vmem:[#allocation5 + $0x378] sm:$0xff]
    %v224 = vld [vmem:[#allocation5 + $0x380] sm:$0xff]
    %v225 = vld [vmem:[#allocation5 + $0x388] sm:$0xff]
    %v226 = vld [vmem:[#allocation5 + $0x390] sm:$0xff]
    %v227 = vld [vmem:[#allocation5 + $0x398] sm:$0xff]
    %v228 = vld [vmem:[#allocation5 + $0x3a0] sm:$0xff]
    %v229 = vld [vmem:[#allocation5 + $0x3a8] sm:$0xff]
    %v230 = vld [vmem:[#allocation5 + $0x3b0] sm:$0xff]
    %v231 = vld [vmem:[#allocation5 + $0x3b8] sm:$0xff]
    %v232 = vld [vmem:[#allocation5 + $0x3c0] sm:$0xff]
    %v233 = vld [vmem:[#allocation5 + $0x3c8] sm:$0xff]
    %v234 = vld [vmem:[#allocation5 + $0x3d0] sm:$0xff]
    %v235 = vld [vmem:[#allocation5 + $0x3d8] sm:$0xff]
    %v236 = vld [vmem:[#allocation5 + $0x3e0] sm:$0xff]
    %v237 = vld [vmem:[#allocation5 + $0x3e8] sm:$0xff]
    %v238 = vld [vmem:[#allocation5 + $0x3f0] sm:$0xff]
    %v239 = vld [vmem:[#allocation5 + $0x3f8] sm:$0xff]
    %v240 = vld [vmem:[%s4] sm:$0xf]
    %v241 = vld [vmem:[%s5] sm:$0xf]
    %v242 = vld [vmem:[%s5 + $0x4] sm:$0xf]
    %v243 = vld [vmem:[%s5 + $0x8] sm:$0xf]
    %v244 = vld [vmem:[%s5 + $0xc] sm:$0xf]
    %v245 = vld [vmem:[%s5 + $0x10] sm:$0xf]
    %v246 = vld [vmem:[%s5 + $0x14] sm:$0xf]
    %v247 = vld [vmem:[%s5 + $0x18] sm:$0xf]
    %v248 = vld [vmem:[%s5 + $0x1c] sm:$0xf]
    %v249 = vld [vmem:[%s5 + $0x20] sm:$0xf]
    %v250 = vld [vmem:[%s5 + $0x24] sm:$0xf]
    %v251 = vld [vmem:[%s5 + $0x28] sm:$0xf]
    %v252 = vld [vmem:[%s5 + $0x2c] sm:$0xf]
    %v253 = vld [vmem:[%s5 + $0x30] sm:$0xf]
    %v254 = vld [vmem:[%s5 + $0x34] sm:$0xf]
    %v255 = vld [vmem:[%s5 + $0x38] sm:$0xf]
    %v256 = vld [vmem:[%s5 + $0x3c] sm:$0xf]
    %v257 = vld [vmem:[%s6] sm:$0x1]
    %v258 = vld [vmem:[%s0] sm:$0xff]
    %v259 = vld [vmem:[%s0 + $0x8] sm:$0xff]
    %v260 = vld [vmem:[%s0 + $0x10] sm:$0xff]
    %v261 = vld [vmem:[%s0 + $0x18] sm:$0xff]
    %v262 = vld [vmem:[%s0 + $0x20] sm:$0xff]
    %v263 = vld [vmem:[%s0 + $0x28] sm:$0xff]
    %v264 = vld [vmem:[%s0 + $0x30] sm:$0xff]
    %v265 = vld [vmem:[%s0 + $0x38] sm:$0xff]
    %v266 = vld [vmem:[%s0 + $0x40] sm:$0xff]
    %v267 = vld [vmem:[%s0 + $0x48] sm:$0xff]
    %v268 = vld [vmem:[%s0 + $0x50] sm:$0xff]
    %v269 = vld [vmem:[%s0 + $0x58] sm:$0xff]
    %v270 = vld [vmem:[%s0 + $0x60] sm:$0xff]
    %v271 = vld [vmem:[%s0 + $0x68] sm:$0xff]
    %v272 = vld [vmem:[%s0 + $0x70] sm:$0xff]
    %v273 = vld [vmem:[%s0 + $0x78] sm:$0xff]
    %v275 = vlaneseq
    %v276 = vshrl.u32 %v275, 7
    %v277 = vsub.s32 0, %v276
    %v278 = vrot.slane %v111, %v277
    %v279 = vlaneseq
    %v280 = vshrl.u32 %v279, 7
    %v281 = vsub.s32 1, %v280
    %v282 = vrot.slane %v111, %v281
    %v283 = vlaneseq
    %v284 = vshrl.u32 %v283, 7
    %v285 = vsub.s32 2, %v284
    %v286 = vrot.slane %v111, %v285
    %v287 = vlaneseq
    %v288 = vshrl.u32 %v287, 7
    %v289 = vsub.s32 3, %v288
    %v290 = vrot.slane %v111, %v289
    %v311 = vunpack.c.l.b16 %v258
    %v312 = vunpack.c.h.b16 %v258
    %v313 = vunpack.c.l.b16 %v259
    %v314 = vunpack.c.h.b16 %v259
    %v315 = vunpack.c.l.b16 %v260
    %v316 = vunpack.c.h.b16 %v260
    %v317 = vunpack.c.l.b16 %v261
    %v318 = vunpack.c.h.b16 %v261
    %v319 = vunpack.c.l.b16 %v262
    %v320 = vunpack.c.h.b16 %v262
    %v321 = vunpack.c.l.b16 %v263
    %v322 = vunpack.c.h.b16 %v263
    %v323 = vunpack.c.l.b16 %v264
    %v324 = vunpack.c.h.b16 %v264
    %v325 = vunpack.c.l.b16 %v265
    %v326 = vunpack.c.h.b16 %v265
    %v327 = vunpack.c.l.b16 %v266
    %v328 = vunpack.c.h.b16 %v266
    %v329 = vunpack.c.l.b16 %v267
    %v330 = vunpack.c.h.b16 %v267
    %v331 = vunpack.c.l.b16 %v268
    %v332 = vunpack.c.h.b16 %v268
    %v333 = vunpack.c.l.b16 %v269
    %v334 = vunpack.c.h.b16 %v269
    %v335 = vunpack.c.l.b16 %v270
    %v336 = vunpack.c.h.b16 %v270
    %v337 = vunpack.c.l.b16 %v271
    %v338 = vunpack.c.h.b16 %v271
    %v339 = vunpack.c.l.b16 %v272
    %v340 = vunpack.c.h.b16 %v272
    %v341 = vunpack.c.l.b16 %v273
    %v342 = vunpack.c.h.b16 %v273
    %v343 = vpack.c.b16 %v313, %v311
    %v344 = vpack.c.b16 %v314, %v312
    %v345 = vpack.c.b16 %v317, %v315
    %v346 = vpack.c.b16 %v318, %v316
    %v347 = vpack.c.b16 %v321, %v319
    %v348 = vpack.c.b16 %v322, %v320
    %v349 = vpack.c.b16 %v325, %v323
    %v350 = vpack.c.b16 %v326, %v324
    %v351 = vpack.c.b16 %v329, %v327
    %v352 = vpack.c.b16 %v330, %v328
    %v353 = vpack.c.b16 %v333, %v331
    %v354 = vpack.c.b16 %v334, %v332
    %v355 = vpack.c.b16 %v337, %v335
    %v356 = vpack.c.b16 %v338, %v336
    %v357 = vpack.c.b16 %v341, %v339
    %v358 = vpack.c.b16 %v342, %v340
    %v423 = vunpack.c.l.b16 %v55
    %v424 = vunpack.c.h.b16 %v55
    %v425 = vunpack.c.l.b16 %v56
    %v426 = vunpack.c.h.b16 %v56
    %v427 = vunpack.c.l.b16 %v57
    %v428 = vunpack.c.h.b16 %v57
    %v429 = vunpack.c.l.b16 %v58
    %v430 = vunpack.c.h.b16 %v58
    %v431 = vunpack.c.l.b16 %v59
    %v432 = vunpack.c.h.b16 %v59
    %v433 = vunpack.c.l.b16 %v60
    %v434 = vunpack.c.h.b16 %v60
    %v435 = vunpack.c.l.b16 %v61
    %v436 = vunpack.c.h.b16 %v61
    %v437 = vunpack.c.l.b16 %v62
    %v438 = vunpack.c.h.b16 %v62
    %v439 = vunpack.c.l.b16 %v63
    %v440 = vunpack.c.h.b16 %v63
    %v441 = vunpack.c.l.b16 %v64
    %v442 = vunpack.c.h.b16 %v64
    %v443 = vunpack.c.l.b16 %v65
    %v444 = vunpack.c.h.b16 %v65
    %v445 = vunpack.c.l.b16 %v66
    %v446 = vunpack.c.h.b16 %v66
    %v447 = vunpack.c.l.b16 %v67
    %v448 = vunpack.c.h.b16 %v67
    %v449 = vunpack.c.l.b16 %v68
    %v450 = vunpack.c.h.b16 %v68
    %v451 = vunpack.c.l.b16 %v69
    %v452 = vunpack.c.h.b16 %v69
    %v453 = vunpack.c.l.b16 %v70
    %v454 = vunpack.c.h.b16 %v70
    %v455 = vunpack.c.l.b16 %v71
    %v456 = vunpack.c.h.b16 %v71
    %v457 = vunpack.c.l.b16 %v72
    %v458 = vunpack.c.h.b16 %v72
    %v459 = vunpack.c.l.b16 %v73
    %v460 = vunpack.c.h.b16 %v73
    %v461 = vunpack.c.l.b16 %v74
    %v462 = vunpack.c.h.b16 %v74
    %v463 = vunpack.c.l.b16 %v75
    %v464 = vunpack.c.h.b16 %v75
    %v465 = vunpack.c.l.b16 %v76
    %v466 = vunpack.c.h.b16 %v76
    %v467 = vunpack.c.l.b16 %v77
    %v468 = vunpack.c.h.b16 %v77
    %v469 = vunpack.c.l.b16 %v78
    %v470 = vunpack.c.h.b16 %v78
    %v471 = vunpack.c.l.b16 %v79
    %v472 = vunpack.c.h.b16 %v79
    %v473 = vunpack.c.l.b16 %v80
    %v474 = vunpack.c.h.b16 %v80
    %v475 = vunpack.c.l.b16 %v81
    %v476 = vunpack.c.h.b16 %v81
    %v477 = vunpack.c.l.b16 %v82
    %v478 = vunpack.c.h.b16 %v82
    %v479 = vunpack.c.l.b16 %v83
    %v480 = vunpack.c.h.b16 %v83
    %v481 = vunpack.c.l.b16 %v84
    %v482 = vunpack.c.h.b16 %v84
    %v483 = vunpack.c.l.b16 %v85
    %v484 = vunpack.c.h.b16 %v85
    %v485 = vunpack.c.l.b16 %v86
    %v486 = vunpack.c.h.b16 %v86
    %v487 = vunpack.c.l.b16 %v87
    %v488 = vunpack.c.h.b16 %v87
    %v489 = vunpack.c.l.b16 %v88
    %v490 = vunpack.c.h.b16 %v88
    %v491 = vunpack.c.l.b16 %v89
    %v492 = vunpack.c.h.b16 %v89
    %v493 = vunpack.c.l.b16 %v90
    %v494 = vunpack.c.h.b16 %v90
    %v495 = vunpack.c.l.b16 %v91
    %v496 = vunpack.c.h.b16 %v91
    %v497 = vunpack.c.l.b16 %v92
    %v498 = vunpack.c.h.b16 %v92
    %v499 = vunpack.c.l.b16 %v93
    %v500 = vunpack.c.h.b16 %v93
    %v501 = vunpack.c.l.b16 %v94
    %v502 = vunpack.c.h.b16 %v94
    %v503 = vunpack.c.l.b16 %v95
    %v504 = vunpack.c.h.b16 %v95
    %v505 = vunpack.c.l.b16 %v96
    %v506 = vunpack.c.h.b16 %v96
    %v507 = vunpack.c.l.b16 %v97
    %v508 = vunpack.c.h.b16 %v97
    %v509 = vunpack.c.l.b16 %v98
    %v510 = vunpack.c.h.b16 %v98
    %v511 = vunpack.c.l.b16 %v99
    %v512 = vunpack.c.h.b16 %v99
    %v513 = vunpack.c.l.b16 %v100
    %v514 = vunpack.c.h.b16 %v100
    %v515 = vunpack.c.l.b16 %v101
    %v516 = vunpack.c.h.b16 %v101
    %v517 = vunpack.c.l.b16 %v102
    %v518 = vunpack.c.h.b16 %v102
    %v519 = vunpack.c.l.b16 %v103
    %v520 = vunpack.c.h.b16 %v103
    %v521 = vunpack.c.l.b16 %v104
    %v522 = vunpack.c.h.b16 %v104
    %v523 = vunpack.c.l.b16 %v105
    %v524 = vunpack.c.h.b16 %v105
    %v525 = vunpack.c.l.b16 %v106
    %v526 = vunpack.c.h.b16 %v106
    %v527 = vunpack.c.l.b16 %v107
    %v528 = vunpack.c.h.b16 %v107
    %v529 = vunpack.c.l.b16 %v108
    %v530 = vunpack.c.h.b16 %v108
    %v531 = vunpack.c.l.b16 %v109
    %v532 = vunpack.c.h.b16 %v109
    %v533 = vunpack.c.l.b16 %v110
    %v534 = vunpack.c.h.b16 %v110
    %v535 = vpack.c.b16 %v427, %v423
    %v536 = vpack.c.b16 %v428, %v424
    %v537 = vpack.c.b16 %v429, %v425
    %v538 = vpack.c.b16 %v430, %v426
    %v539 = vpack.c.b16 %v435, %v431
    %v540 = vpack.c.b16 %v436, %v432
    %v541 = vpack.c.b16 %v437, %v433
    %v542 = vpack.c.b16 %v438, %v434
    %v543 = vpack.c.b16 %v443, %v439
    %v544 = vpack.c.b16 %v444, %v440
    %v545 = vpack.c.b16 %v445, %v441
    %v546 = vpack.c.b16 %v446, %v442
    %v547 = vpack.c.b16 %v451, %v447
    %v548 = vpack.c.b16 %v452, %v448
    %v549 = vpack.c.b16 %v453, %v449
    %v550 = vpack.c.b16 %v454, %v450
    %v551 = vpack.c.b16 %v459, %v455
    %v552 = vpack.c.b16 %v460, %v456
    %v553 = vpack.c.b16 %v461, %v457
    %v554 = vpack.c.b16 %v462, %v458
    %v555 = vpack.c.b16 %v467, %v463
    %v556 = vpack.c.b16 %v468, %v464
    %v557 = vpack.c.b16 %v469, %v465
    %v558 = vpack.c.b16 %v470, %v466
    %v559 = vpack.c.b16 %v475, %v471
    %v560 = vpack.c.b16 %v476, %v472
    %v561 = vpack.c.b16 %v477, %v473
    %v562 = vpack.c.b16 %v478, %v474
    %v563 = vpack.c.b16 %v483, %v479
    %v564 = vpack.c.b16 %v484, %v480
    %v565 = vpack.c.b16 %v485, %v481
    %v566 = vpack.c.b16 %v486, %v482
    %v567 = vpack.c.b16 %v491, %v487
    %v568 = vpack.c.b16 %v492, %v488
    %v569 = vpack.c.b16 %v493, %v489
    %v570 = vpack.c.b16 %v494, %v490
    %v571 = vpack.c.b16 %v499, %v495
    %v572 = vpack.c.b16 %v500, %v496
    %v573 = vpack.c.b16 %v501, %v497
    %v574 = vpack.c.b16 %v502, %v498
    %v575 = vpack.c.b16 %v507, %v503
    %v576 = vpack.c.b16 %v508, %v504
    %v577 = vpack.c.b16 %v509, %v505
    %v578 = vpack.c.b16 %v510, %v506
    %v579 = vpack.c.b16 %v515, %v511
    %v580 = vpack.c.b16 %v516, %v512
    %v581 = vpack.c.b16 %v517, %v513
    %v582 = vpack.c.b16 %v518, %v514
    %v583 = vpack.c.b16 %v523, %v519
    %v584 = vpack.c.b16 %v524, %v520
    %v585 = vpack.c.b16 %v525, %v521
    %v586 = vpack.c.b16 %v526, %v522
    %v587 = vpack.c.b16 %v531, %v527
    %v588 = vpack.c.b16 %v532, %v528
    %v589 = vpack.c.b16 %v533, %v529
    %v590 = vpack.c.b16 %v534, %v530
    %vm647 = vcmask 785408
    %v649 = vsel %vm647, %v344, 0
    %v652 = vsel %vm647, %v346, 0
    %v655 = vsel %vm647, %v348, 0
    %v658 = vsel %vm647, %v350, 0
    %v661 = vsel %vm647, %v352, 0
    %v664 = vsel %vm647, %v354, 0
    %v667 = vsel %vm647, %v356, 0
    %v670 = vsel %vm647, %v358, 0
    %672 = vmatprep.subr.bf16.mxu0 %v564
    %673 = vmatpush1.bf16.msra.mxu0 %v563
    %674 = vmatprep.subr.bf16.mxu0 %v560
    %675 = vmatpush1.bf16.msra.mxu0 %v559
    %676 = vmatprep.subr.bf16.mxu0 %v556
    %677 = vmatpush1.bf16.msra.mxu0 %v555
    %678 = vmatprep.subr.bf16.mxu0 %v552
    %679 = vmatpush1.bf16.msra.mxu0 %v551
    %680 = vmatprep.subr.bf16.mxu0 %v548
    %681 = vmatpush1.bf16.msra.mxu0 %v547
    %682 = vmatprep.subr.bf16.mxu0 %v544
    %683 = vmatpush1.bf16.msra.mxu0 %v543
    %684 = vmatprep.subr.bf16.mxu0 %v540
    %685 = vmatpush1.bf16.msra.mxu0 %v539
    %686 = vmatprep.subr.bf16.mxu0 %v536
    %687 = vmatpush1.bf16.msra.mxu0 %v535
    %688 = vmatprep.subr.bf16.mxu0 0
    %689 = vmatpush2.bf16.msra.mxu0 0
    %690 = vmatprep.subr.bf16.mxu0 0
    %691 = vmatpush2.bf16.msra.mxu0 0
    %692 = vmatprep.subr.bf16.mxu0 %v588
    %693 = vmatpush2.bf16.msra.mxu0 %v587
    %694 = vmatprep.subr.bf16.mxu0 %v584
    %695 = vmatpush2.bf16.msra.mxu0 %v583
    %696 = vmatprep.subr.bf16.mxu0 %v580
    %697 = vmatpush2.bf16.msra.mxu0 %v579
    %698 = vmatprep.subr.bf16.mxu0 %v576
    %699 = vmatpush2.bf16.msra.mxu0 %v575
    %700 = vmatprep.subr.bf16.mxu0 %v572
    %701 = vmatpush2.bf16.msra.mxu0 %v571
    %702 = vmatprep.subr.bf16.mxu0 %v568
    %703 = vmatpush2.bf16.msra.mxu0 %v567
    %704 = vmatprep.mubr.bf16.mxu0 %v649
    %705 = vmatmul.mubr.bf16.gmra.mxu0 %v343
    %v706 = vpop.f32.mrf.mxu0
    %v707 = vadd.f32 %v278, %v706
    %v708 = vpop.f32.mrf.mxu0
    %v709 = vadd.f32 %v282, %v708
    %v710 = vpop.f32.mrf.mxu0
    %v711 = vadd.f32 %v278, %v710
    %v712 = vpop.f32.mrf.mxu0
    %v713 = vadd.f32 %v282, %v712
    %714 = vmatprep.mubr.bf16.mxu0 %v652
    %715 = vmatmul.mubr.bf16.gmra.mxu0 %v345
    %v716 = vpop.f32.mrf.mxu0
    %v717 = vadd.f32 %v278, %v716
    %v718 = vpop.f32.mrf.mxu0
    %v719 = vadd.f32 %v282, %v718
    %v720 = vpop.f32.mrf.mxu0
    %v721 = vadd.f32 %v278, %v720
    %v722 = vpop.f32.mrf.mxu0
    %v723 = vadd.f32 %v282, %v722
    %724 = vmatprep.mubr.bf16.mxu0 %v655
    %725 = vmatmul.mubr.bf16.gmra.mxu0 %v347
    %v726 = vpop.f32.mrf.mxu0
    %v727 = vadd.f32 %v278, %v726
    %v728 = vpop.f32.mrf.mxu0
    %v729 = vadd.f32 %v282, %v728
    %v730 = vpop.f32.mrf.mxu0
    %v731 = vadd.f32 %v278, %v730
    %v732 = vpop.f32.mrf.mxu0
    %v733 = vadd.f32 %v282, %v732
    %734 = vmatprep.mubr.bf16.mxu0 %v658
    %735 = vmatmul.mubr.bf16.gmra.mxu0 %v349
    %v736 = vpop.f32.mrf.mxu0
    %v737 = vadd.f32 %v278, %v736
    %v738 = vpop.f32.mrf.mxu0
    %v739 = vadd.f32 %v282, %v738
    %v740 = vpop.f32.mrf.mxu0
    %v741 = vadd.f32 %v278, %v740
    %v742 = vpop.f32.mrf.mxu0
    %v743 = vadd.f32 %v282, %v742
    %744 = vmatprep.mubr.bf16.mxu0 %v661
    %745 = vmatmul.mubr.bf16.gmra.mxu0 %v351
    %v746 = vpop.f32.mrf.mxu0
    %v747 = vadd.f32 %v278, %v746
    %v748 = vpop.f32.mrf.mxu0
    %v749 = vadd.f32 %v282, %v748
    %v750 = vpop.f32.mrf.mxu0
    %v751 = vadd.f32 %v278, %v750
    %v752 = vpop.f32.mrf.mxu0
    %v753 = vadd.f32 %v282, %v752
    %754 = vmatprep.mubr.bf16.mxu0 %v664
    %755 = vmatmul.mubr.bf16.gmra.mxu0 %v353
    %v756 = vpop.f32.mrf.mxu0
    %v757 = vadd.f32 %v278, %v756
    %v758 = vpop.f32.mrf.mxu0
    %v759 = vadd.f32 %v282, %v758
    %v760 = vpop.f32.mrf.mxu0
    %v761 = vadd.f32 %v278, %v760
    %v762 = vpop.f32.mrf.mxu0
    %v763 = vadd.f32 %v282, %v762
    %764 = vmatprep.mubr.bf16.mxu0 %v667
    %765 = vmatmul.mubr.bf16.gmra.mxu0 %v355
    %v766 = vpop.f32.mrf.mxu0
    %v767 = vadd.f32 %v278, %v766
    %v768 = vpop.f32.mrf.mxu0
    %v769 = vadd.f32 %v282, %v768
    %v770 = vpop.f32.mrf.mxu0
    %v771 = vadd.f32 %v278, %v770
    %v772 = vpop.f32.mrf.mxu0
    %v773 = vadd.f32 %v282, %v772
    %774 = vmatprep.mubr.bf16.mxu0 %v670
    %775 = vmatmul.mubr.bf16.gmra.mxu0 %v357
    %v776 = vpop.f32.mrf.mxu0
    %v777 = vadd.f32 %v278, %v776
    %v778 = vpop.f32.mrf.mxu0
    %v779 = vadd.f32 %v282, %v778
    %v780 = vpop.f32.mrf.mxu0
    %v781 = vadd.f32 %v278, %v780
    %v782 = vpop.f32.mrf.mxu0
    %v783 = vadd.f32 %v282, %v782
    %784 = vdwg.mxu0
    %785 = vmatprep.subr.bf16.mxu0 %v566
    %786 = vmatpush1.bf16.msra.mxu0 %v565
    %787 = vmatprep.subr.bf16.mxu0 %v562
    %788 = vmatpush1.bf16.msra.mxu0 %v561
    %789 = vmatprep.subr.bf16.mxu0 %v558
    %790 = vmatpush1.bf16.msra.mxu0 %v557
    %791 = vmatprep.subr.bf16.mxu0 %v554
    %792 = vmatpush1.bf16.msra.mxu0 %v553
    %793 = vmatprep.subr.bf16.mxu0 %v550
    %794 = vmatpush1.bf16.msra.mxu0 %v549
    %795 = vmatprep.subr.bf16.mxu0 %v546
    %796 = vmatpush1.bf16.msra.mxu0 %v545
    %797 = vmatprep.subr.bf16.mxu0 %v542
    %798 = vmatpush1.bf16.msra.mxu0 %v541
    %799 = vmatprep.subr.bf16.mxu0 %v538
    %800 = vmatpush1.bf16.msra.mxu0 %v537
    %801 = vmatprep.subr.bf16.mxu0 0
    %802 = vmatpush2.bf16.msra.mxu0 0
    %803 = vmatprep.subr.bf16.mxu0 0
    %804 = vmatpush2.bf16.msra.mxu0 0
    %805 = vmatprep.subr.bf16.mxu0 %v590
    %806 = vmatpush2.bf16.msra.mxu0 %v589
    %807 = vmatprep.subr.bf16.mxu0 %v586
    %808 = vmatpush2.bf16.msra.mxu0 %v585
    %809 = vmatprep.subr.bf16.mxu0 %v582
    %810 = vmatpush2.bf16.msra.mxu0 %v581
    %811 = vmatprep.subr.bf16.mxu0 %v578
    %812 = vmatpush2.bf16.msra.mxu0 %v577
    %813 = vmatprep.subr.bf16.mxu0 %v574
    %814 = vmatpush2.bf16.msra.mxu0 %v573
    %815 = vmatprep.subr.bf16.mxu0 %v570
    %816 = vmatpush2.bf16.msra.mxu0 %v569
    %817 = vmatprep.mubr.bf16.mxu0 %v649
    %818 = vmatmul.mubr.bf16.gmra.mxu0 %v343
    %v819 = vpop.f32.mrf.mxu0
    %v820 = vadd.f32 %v286, %v819
    %v821 = vpop.f32.mrf.mxu0
    %v822 = vadd.f32 %v290, %v821
    %v823 = vpop.f32.mrf.mxu0
    %v824 = vadd.f32 %v286, %v823
    %v825 = vpop.f32.mrf.mxu0
    %v826 = vadd.f32 %v290, %v825
    %827 = vmatprep.mubr.bf16.mxu0 %v652
    %828 = vmatmul.mubr.bf16.gmra.mxu0 %v345
    %v829 = vpop.f32.mrf.mxu0
    %v830 = vadd.f32 %v286, %v829
    %v831 = vpop.f32.mrf.mxu0
    %v832 = vadd.f32 %v290, %v831
    %v833 = vpop.f32.mrf.mxu0
    %v834 = vadd.f32 %v286, %v833
    %v835 = vpop.f32.mrf.mxu0
    %v836 = vadd.f32 %v290, %v835
    %837 = vmatprep.mubr.bf16.mxu0 %v655
    %838 = vmatmul.mubr.bf16.gmra.mxu0 %v347
    %v839 = vpop.f32.mrf.mxu0
    %v840 = vadd.f32 %v286, %v839
    %v841 = vpop.f32.mrf.mxu0
    %v842 = vadd.f32 %v290, %v841
    %v843 = vpop.f32.mrf.mxu0
    %v844 = vadd.f32 %v286, %v843
    %v845 = vpop.f32.mrf.mxu0
    %v846 = vadd.f32 %v290, %v845
    %847 = vmatprep.mubr.bf16.mxu0 %v658
    %848 = vmatmul.mubr.bf16.gmra.mxu0 %v349
    %v849 = vpop.f32.mrf.mxu0
    %v850 = vadd.f32 %v286, %v849
    %v851 = vpop.f32.mrf.mxu0
    %v852 = vadd.f32 %v290, %v851
    %v853 = vpop.f32.mrf.mxu0
    %v854 = vadd.f32 %v286, %v853
    %v855 = vpop.f32.mrf.mxu0
    %v856 = vadd.f32 %v290, %v855
    %857 = vmatprep.mubr.bf16.mxu0 %v661
    %858 = vmatmul.mubr.bf16.gmra.mxu0 %v351
    %v859 = vpop.f32.mrf.mxu0
    %v860 = vadd.f32 %v286, %v859
    %v861 = vpop.f32.mrf.mxu0
    %v862 = vadd.f32 %v290, %v861
    %v863 = vpop.f32.mrf.mxu0
    %v864 = vadd.f32 %v286, %v863
    %v865 = vpop.f32.mrf.mxu0
    %v866 = vadd.f32 %v290, %v865
    %867 = vmatprep.mubr.bf16.mxu0 %v664
    %868 = vmatmul.mubr.bf16.gmra.mxu0 %v353
    %v869 = vpop.f32.mrf.mxu0
    %v870 = vadd.f32 %v286, %v869
    %v871 = vpop.f32.mrf.mxu0
    %v872 = vadd.f32 %v290, %v871
    %v873 = vpop.f32.mrf.mxu0
    %v874 = vadd.f32 %v286, %v873
    %v875 = vpop.f32.mrf.mxu0
    %v876 = vadd.f32 %v290, %v875
    %877 = vmatprep.mubr.bf16.mxu0 %v667
    %878 = vmatmul.mubr.bf16.gmra.mxu0 %v355
    %v879 = vpop.f32.mrf.mxu0
    %v880 = vadd.f32 %v286, %v879
    %v881 = vpop.f32.mrf.mxu0
    %v882 = vadd.f32 %v290, %v881
    %v883 = vpop.f32.mrf.mxu0
    %v884 = vadd.f32 %v286, %v883
    %v885 = vpop.f32.mrf.mxu0
    %v886 = vadd.f32 %v290, %v885
    %887 = vmatprep.mubr.bf16.mxu0 %v670
    %888 = vmatmul.mubr.bf16.gmra.mxu0 %v357
    %v889 = vpop.f32.mrf.mxu0
    %v890 = vadd.f32 %v286, %v889
    %v891 = vpop.f32.mrf.mxu0
    %v892 = vadd.f32 %v290, %v891
    %v893 = vpop.f32.mrf.mxu0
    %v894 = vadd.f32 %v286, %v893
    %v895 = vpop.f32.mrf.mxu0
    %v896 = vadd.f32 %v290, %v895
    %897 = vdwg.mxu0
    %898 = vst [vmem:[#allocation2] sm:$0xff] %v707
    %899 = vst [vmem:[#allocation2 + $0x8] sm:$0xff] %v709
    %900 = vst [vmem:[#allocation2 + $0x10] sm:$0xff] %v820
    %901 = vst [vmem:[#allocation2 + $0x18] sm:$0xff] %v822
    %902 = vst [vmem:[#allocation2 + $0x20] sm:$0xff] %v711
    %903 = vst [vmem:[#allocation2 + $0x28] sm:$0xff] %v713
    %904 = vst [vmem:[#allocation2 + $0x30] sm:$0xff] %v824
    %905 = vst [vmem:[#allocation2 + $0x38] sm:$0xff] %v826
    %906 = vst [vmem:[#allocation2 + $0x40] sm:$0xff] %v717
    %907 = vst [vmem:[#allocation2 + $0x48] sm:$0xff] %v719
    %908 = vst [vmem:[#allocation2 + $0x50] sm:$0xff] %v830
    %909 = vst [vmem:[#allocation2 + $0x58] sm:$0xff] %v832
    %910 = vst [vmem:[#allocation2 + $0x60] sm:$0xff] %v721
    %911 = vst [vmem:[#allocation2 + $0x68] sm:$0xff] %v723
    %912 = vst [vmem:[#allocation2 + $0x70] sm:$0xff] %v834
    %913 = vst [vmem:[#allocation2 + $0x78] sm:$0xff] %v836
    %914 = vst [vmem:[#allocation2 + $0x80] sm:$0xff] %v727
    %915 = vst [vmem:[#allocation2 + $0x88] sm:$0xff] %v729
    %916 = vst [vmem:[#allocation2 + $0x90] sm:$0xff] %v840
    %917 = vst [vmem:[#allocation2 + $0x98] sm:$0xff] %v842
    %918 = vst [vmem:[#allocation2 + $0xa0] sm:$0xff] %v731
    %919 = vst [vmem:[#allocation2 + $0xa8] sm:$0xff] %v733
    %920 = vst [vmem:[#allocation2 + $0xb0] sm:$0xff] %v844
    %921 = vst [vmem:[#allocation2 + $0xb8] sm:$0xff] %v846
    %922 = vst [vmem:[#allocation2 + $0xc0] sm:$0xff] %v737
    %923 = vst [vmem:[#allocation2 + $0xc8] sm:$0xff] %v739
    %924 = vst [vmem:[#allocation2 + $0xd0] sm:$0xff] %v850
    %925 = vst [vmem:[#allocation2 + $0xd8] sm:$0xff] %v852
    %926 = vst [vmem:[#allocation2 + $0xe0] sm:$0xff] %v741
    %927 = vst [vmem:[#allocation2 + $0xe8] sm:$0xff] %v743
    %928 = vst [vmem:[#allocation2 + $0xf0] sm:$0xff] %v854
    %929 = vst [vmem:[#allocation2 + $0xf8] sm:$0xff] %v856
    %930 = vst [vmem:[#allocation2 + $0x100] sm:$0xff] %v747
    %931 = vst [vmem:[#allocation2 + $0x108] sm:$0xff] %v749
    %932 = vst [vmem:[#allocation2 + $0x110] sm:$0xff] %v860
    %933 = vst [vmem:[#allocation2 + $0x118] sm:$0xff] %v862
    %934 = vst [vmem:[#allocation2 + $0x120] sm:$0xff] %v751
    %935 = vst [vmem:[#allocation2 + $0x128] sm:$0xff] %v753
    %936 = vst [vmem:[#allocation2 + $0x130] sm:$0xff] %v864
    %937 = vst [vmem:[#allocation2 + $0x138] sm:$0xff] %v866
    %938 = vst [vmem:[#allocation2 + $0x140] sm:$0xff] %v757
    %939 = vst [vmem:[#allocation2 + $0x148] sm:$0xff] %v759
    %940 = vst [vmem:[#allocation2 + $0x150] sm:$0xff] %v870
    %941 = vst [vmem:[#allocation2 + $0x158] sm:$0xff] %v872
    %942 = vst [vmem:[#allocation2 + $0x160] sm:$0xff] %v761
    %943 = vst [vmem:[#allocation2 + $0x168] sm:$0xff] %v763
    %944 = vst [vmem:[#allocation2 + $0x170] sm:$0xff] %v874
    %945 = vst [vmem:[#allocation2 + $0x178] sm:$0xff] %v876
    %946 = vst [vmem:[#allocation2 + $0x180] sm:$0xff] %v767
    %947 = vst [vmem:[#allocation2 + $0x188] sm:$0xff] %v769
    %948 = vst [vmem:[#allocation2 + $0x190] sm:$0xff] %v880
    %949 = vst [vmem:[#allocation2 + $0x198] sm:$0xff] %v882
    %950 = vst [vmem:[#allocation2 + $0x1a0] sm:$0xff] %v771
    %951 = vst [vmem:[#allocation2 + $0x1a8] sm:$0xff] %v773
    %952 = vst [vmem:[#allocation2 + $0x1b0] sm:$0xff] %v884
    %953 = vst [vmem:[#allocation2 + $0x1b8] sm:$0xff] %v886
    %954 = vst [vmem:[#allocation2 + $0x1c0] sm:$0xff] %v777
    %955 = vst [vmem:[#allocation2 + $0x1c8] sm:$0xff] %v779
    %956 = vst [vmem:[#allocation2 + $0x1d0] sm:$0xff] %v890
    %957 = vst [vmem:[#allocation2 + $0x1d8] sm:$0xff] %v892
    %958 = vst [vmem:[#allocation2 + $0x1e0] sm:$0xff] %v781
    %959 = vst [vmem:[#allocation2 + $0x1e8] sm:$0xff] %v783
    %960 = vst [vmem:[#allocation2 + $0x1f0] sm:$0xff] %v894
    %961 = vst [vmem:[#allocation2 + $0x1f8] sm:$0xff] %v896
    %v962 = vld [vmem:[#allocation2] sm:$0xff]
    %v963 = vld [vmem:[#allocation2 + $0x8] sm:$0xff]
    %v964 = vld [vmem:[#allocation2 + $0x10] sm:$0xff]
    %v965 = vld [vmem:[#allocation2 + $0x18] sm:$0xff]
    %v966 = vld [vmem:[#allocation2 + $0x20] sm:$0xff]
    %v967 = vld [vmem:[#allocation2 + $0x28] sm:$0xff]
    %v968 = vld [vmem:[#allocation2 + $0x30] sm:$0xff]
    %v969 = vld [vmem:[#allocation2 + $0x38] sm:$0xff]
    %v970 = vxor.u32 %v962, 2147483648
    %v971 = vxor.u32 %v963, 2147483648
    %v972 = vxor.u32 %v964, 2147483648
    %v973 = vxor.u32 %v966, 2147483648
    %v974 = vxor.u32 %v967, 2147483648
    %v975 = vxor.u32 %v968, 2147483648
    %v976 = vmul.f32 %v970, 1.442695
    %v977 = vpow.pop %v976
    %v978 = vmul.f32 %v971, 1.442695
    %v979 = vpow.pop %v978
    %v980 = vmul.f32 %v972, 1.442695
    %v981 = vpow.pop %v980
    %v982 = vmul.f32 %v973, 1.442695
    %v983 = vpow.pop %v982
    %v984 = vmul.f32 %v974, 1.442695
    %v985 = vpow.pop %v984
    %v986 = vmul.f32 %v975, 1.442695
    %v987 = vpow.pop %v986
    %v988 = vadd.f32 %v977, 1.0
    %v989 = vadd.f32 %v979, 1.0
    %v990 = vadd.f32 %v981, 1.0
    %v991 = vadd.f32 %v983, 1.0
    %v992 = vadd.f32 %v985, 1.0
    %v993 = vadd.f32 %v987, 1.0
    %v994 = vrcp.pop %v988
    %v995 = vmul.f32 1.0, %v994
    %v996 = vrcp.pop %v989
    %v997 = vmul.f32 1.0, %v996
    %v998 = vrcp.pop %v990
    %v999 = vmul.f32 1.0, %v998
    %v1000 = vrcp.pop %v991
    %v1001 = vmul.f32 1.0, %v1000
    %v1002 = vrcp.pop %v992
    %v1003 = vmul.f32 1.0, %v1002
    %v1004 = vrcp.pop %v993
    %v1005 = vmul.f32 1.0, %v1004
    %v1006 = vtanh.pop %v965
    %v1007 = vtanh.pop %v969
    %v1008 = vmul.f32 %v997, 0.0
    %v1009 = vmul.f32 %v1003, 0.0
    %v1010 = vmul.f32 %v995, %v1006
    %v1011 = vmul.f32 %v1001, %v1007
    %v1012 = vadd.f32 %v1008, %v1010
    %v1013 = vadd.f32 %v1009, %v1011
    %v1014 = vtanh.pop %v1012
    %v1015 = vtanh.pop %v1013
    %v1016 = vmul.f32 %v999, %v1014
    %v1017 = vmul.f32 %v1005, %v1015
    %v1018 = vpack.c.bf16 %v1017, %v1016
    %v1019 = vpack.c.bf16 0.0, 0.0
    %v1148 = vunpack.c.l.b16 %v112
    %v1149 = vunpack.c.h.b16 %v112
    %v1150 = vunpack.c.l.b16 %v113
    %v1151 = vunpack.c.h.b16 %v113
    %v1152 = vunpack.c.l.b16 %v114
    %v1153 = vunpack.c.h.b16 %v114
    %v1154 = vunpack.c.l.b16 %v115
    %v1155 = vunpack.c.h.b16 %v115
    %v1156 = vunpack.c.l.b16 %v116
    %v1157 = vunpack.c.h.b16 %v116
    %v1158 = vunpack.c.l.b16 %v117
    %v1159 = vunpack.c.h.b16 %v117
    %v1160 = vunpack.c.l.b16 %v118
    %v1161 = vunpack.c.h.b16 %v118
    %v1162 = vunpack.c.l.b16 %v119
    %v1163 = vunpack.c.h.b16 %v119
    %v1164 = vunpack.c.l.b16 %v120
    %v1165 = vunpack.c.h.b16 %v120
    %v1166 = vunpack.c.l.b16 %v121
    %v1167 = vunpack.c.h.b16 %v121
    %v1168 = vunpack.c.l.b16 %v122
    %v1169 = vunpack.c.h.b16 %v122
    %v1170 = vunpack.c.l.b16 %v123
    %v1171 = vunpack.c.h.b16 %v123
    %v1172 = vunpack.c.l.b16 %v124
    %v1173 = vunpack.c.h.b16 %v124
    %v1174 = vunpack.c.l.b16 %v125
    %v1175 = vunpack.c.h.b16 %v125
    %v1176 = vunpack.c.l.b16 %v126
    %v1177 = vunpack.c.h.b16 %v126
    %v1178 = vunpack.c.l.b16 %v127
    %v1179 = vunpack.c.h.b16 %v127
    %v1180 = vunpack.c.l.b16 %v128
    %v1181 = vunpack.c.h.b16 %v128
    %v1182 = vunpack.c.l.b16 %v129
    %v1183 = vunpack.c.h.b16 %v129
    %v1184 = vunpack.c.l.b16 %v130
    %v1185 = vunpack.c.h.b16 %v130
    %v1186 = vunpack.c.l.b16 %v131
    %v1187 = vunpack.c.h.b16 %v131
    %v1188 = vunpack.c.l.b16 %v132
    %v1189 = vunpack.c.h.b16 %v132
    %v1190 = vunpack.c.l.b16 %v133
    %v1191 = vunpack.c.h.b16 %v133
    %v1192 = vunpack.c.l.b16 %v134
    %v1193 = vunpack.c.h.b16 %v134
    %v1194 = vunpack.c.l.b16 %v135
    %v1195 = vunpack.c.h.b16 %v135
    %v1196 = vunpack.c.l.b16 %v136
    %v1197 = vunpack.c.h.b16 %v136
    %v1198 = vunpack.c.l.b16 %v137
    %v1199 = vunpack.c.h.b16 %v137
    %v1200 = vunpack.c.l.b16 %v138
    %v1201 = vunpack.c.h.b16 %v138
    %v1202 = vunpack.c.l.b16 %v139
    %v1203 = vunpack.c.h.b16 %v139
    %v1204 = vunpack.c.l.b16 %v140
    %v1205 = vunpack.c.h.b16 %v140
    %v1206 = vunpack.c.l.b16 %v141
    %v1207 = vunpack.c.h.b16 %v141
    %v1208 = vunpack.c.l.b16 %v142
    %v1209 = vunpack.c.h.b16 %v142
    %v1210 = vunpack.c.l.b16 %v143
    %v1211 = vunpack.c.h.b16 %v143
    %v1212 = vunpack.c.l.b16 %v144
    %v1213 = vunpack.c.h.b16 %v144
    %v1214 = vunpack.c.l.b16 %v145
    %v1215 = vunpack.c.h.b16 %v145
    %v1216 = vunpack.c.l.b16 %v146
    %v1217 = vunpack.c.h.b16 %v146
    %v1218 = vunpack.c.l.b16 %v147
    %v1219 = vunpack.c.h.b16 %v147
    %v1220 = vunpack.c.l.b16 %v148
    %v1221 = vunpack.c.h.b16 %v148
    %v1222 = vunpack.c.l.b16 %v149
    %v1223 = vunpack.c.h.b16 %v149
    %v1224 = vunpack.c.l.b16 %v150
    %v1225 = vunpack.c.h.b16 %v150
    %v1226 = vunpack.c.l.b16 %v151
    %v1227 = vunpack.c.h.b16 %v151
    %v1228 = vunpack.c.l.b16 %v152
    %v1229 = vunpack.c.h.b16 %v152
    %v1230 = vunpack.c.l.b16 %v153
    %v1231 = vunpack.c.h.b16 %v153
    %v1232 = vunpack.c.l.b16 %v154
    %v1233 = vunpack.c.h.b16 %v154
    %v1234 = vunpack.c.l.b16 %v155
    %v1235 = vunpack.c.h.b16 %v155
    %v1236 = vunpack.c.l.b16 %v156
    %v1237 = vunpack.c.h.b16 %v156
    %v1238 = vunpack.c.l.b16 %v157
    %v1239 = vunpack.c.h.b16 %v157
    %v1240 = vunpack.c.l.b16 %v158
    %v1241 = vunpack.c.h.b16 %v158
    %v1242 = vunpack.c.l.b16 %v159
    %v1243 = vunpack.c.h.b16 %v159
    %v1244 = vunpack.c.l.b16 %v160
    %v1245 = vunpack.c.h.b16 %v160
    %v1246 = vunpack.c.l.b16 %v161
    %v1247 = vunpack.c.h.b16 %v161
    %v1248 = vunpack.c.l.b16 %v162
    %v1249 = vunpack.c.h.b16 %v162
    %v1250 = vunpack.c.l.b16 %v163
    %v1251 = vunpack.c.h.b16 %v163
    %v1252 = vunpack.c.l.b16 %v164
    %v1253 = vunpack.c.h.b16 %v164
    %v1254 = vunpack.c.l.b16 %v165
    %v1255 = vunpack.c.h.b16 %v165
    %v1256 = vunpack.c.l.b16 %v166
    %v1257 = vunpack.c.h.b16 %v166
    %v1258 = vunpack.c.l.b16 %v167
    %v1259 = vunpack.c.h.b16 %v167
    %v1260 = vunpack.c.l.b16 %v168
    %v1261 = vunpack.c.h.b16 %v168
    %v1262 = vunpack.c.l.b16 %v169
    %v1263 = vunpack.c.h.b16 %v169
    %v1264 = vunpack.c.l.b16 %v170
    %v1265 = vunpack.c.h.b16 %v170
    %v1266 = vunpack.c.l.b16 %v171
    %v1267 = vunpack.c.h.b16 %v171
    %v1268 = vunpack.c.l.b16 %v172
    %v1269 = vunpack.c.h.b16 %v172
    %v1270 = vunpack.c.l.b16 %v173
    %v1271 = vunpack.c.h.b16 %v173
    %v1272 = vunpack.c.l.b16 %v174
    %v1273 = vunpack.c.h.b16 %v174
    %v1274 = vunpack.c.l.b16 %v175
    %v1275 = vunpack.c.h.b16 %v175
    %v1276 = vunpack.c.l.b16 %v176
    %v1277 = vunpack.c.h.b16 %v176
    %v1278 = vunpack.c.l.b16 %v177
    %v1279 = vunpack.c.h.b16 %v177
    %v1280 = vunpack.c.l.b16 %v178
    %v1281 = vunpack.c.h.b16 %v178
    %v1282 = vunpack.c.l.b16 %v179
    %v1283 = vunpack.c.h.b16 %v179
    %v1284 = vunpack.c.l.b16 %v180
    %v1285 = vunpack.c.h.b16 %v180
    %v1286 = vunpack.c.l.b16 %v181
    %v1287 = vunpack.c.h.b16 %v181
    %v1288 = vunpack.c.l.b16 %v182
    %v1289 = vunpack.c.h.b16 %v182
    %v1290 = vunpack.c.l.b16 %v183
    %v1291 = vunpack.c.h.b16 %v183
    %v1292 = vunpack.c.l.b16 %v184
    %v1293 = vunpack.c.h.b16 %v184
    %v1294 = vunpack.c.l.b16 %v185
    %v1295 = vunpack.c.h.b16 %v185
    %v1296 = vunpack.c.l.b16 %v186
    %v1297 = vunpack.c.h.b16 %v186
    %v1298 = vunpack.c.l.b16 %v187
    %v1299 = vunpack.c.h.b16 %v187
    %v1300 = vunpack.c.l.b16 %v188
    %v1301 = vunpack.c.h.b16 %v188
    %v1302 = vunpack.c.l.b16 %v189
    %v1303 = vunpack.c.h.b16 %v189
    %v1304 = vunpack.c.l.b16 %v190
    %v1305 = vunpack.c.h.b16 %v190
    %v1306 = vunpack.c.l.b16 %v191
    %v1307 = vunpack.c.h.b16 %v191
    %v1308 = vunpack.c.l.b16 %v192
    %v1309 = vunpack.c.h.b16 %v192
    %v1310 = vunpack.c.l.b16 %v193
    %v1311 = vunpack.c.h.b16 %v193
    %v1312 = vunpack.c.l.b16 %v194
    %v1313 = vunpack.c.h.b16 %v194
    %v1314 = vunpack.c.l.b16 %v195
    %v1315 = vunpack.c.h.b16 %v195
    %v1316 = vunpack.c.l.b16 %v196
    %v1317 = vunpack.c.h.b16 %v196
    %v1318 = vunpack.c.l.b16 %v197
    %v1319 = vunpack.c.h.b16 %v197
    %v1320 = vunpack.c.l.b16 %v198
    %v1321 = vunpack.c.h.b16 %v198
    %v1322 = vunpack.c.l.b16 %v199
    %v1323 = vunpack.c.h.b16 %v199
    %v1324 = vunpack.c.l.b16 %v200
    %v1325 = vunpack.c.h.b16 %v200
    %v1326 = vunpack.c.l.b16 %v201
    %v1327 = vunpack.c.h.b16 %v201
    %v1328 = vunpack.c.l.b16 %v202
    %v1329 = vunpack.c.h.b16 %v202
    %v1330 = vunpack.c.l.b16 %v203
    %v1331 = vunpack.c.h.b16 %v203
    %v1332 = vunpack.c.l.b16 %v204
    %v1333 = vunpack.c.h.b16 %v204
    %v1334 = vunpack.c.l.b16 %v205
    %v1335 = vunpack.c.h.b16 %v205
    %v1336 = vunpack.c.l.b16 %v206
    %v1337 = vunpack.c.h.b16 %v206
    %v1338 = vunpack.c.l.b16 %v207
    %v1339 = vunpack.c.h.b16 %v207
    %v1340 = vunpack.c.l.b16 %v208
    %v1341 = vunpack.c.h.b16 %v208
    %v1342 = vunpack.c.l.b16 %v209
    %v1343 = vunpack.c.h.b16 %v209
    %v1344 = vunpack.c.l.b16 %v210
    %v1345 = vunpack.c.h.b16 %v210
    %v1346 = vunpack.c.l.b16 %v211
    %v1347 = vunpack.c.h.b16 %v211
    %v1348 = vunpack.c.l.b16 %v212
    %v1349 = vunpack.c.h.b16 %v212
    %v1350 = vunpack.c.l.b16 %v213
    %v1351 = vunpack.c.h.b16 %v213
    %v1352 = vunpack.c.l.b16 %v214
    %v1353 = vunpack.c.h.b16 %v214
    %v1354 = vunpack.c.l.b16 %v215
    %v1355 = vunpack.c.h.b16 %v215
    %v1356 = vunpack.c.l.b16 %v216
    %v1357 = vunpack.c.h.b16 %v216
    %v1358 = vunpack.c.l.b16 %v217
    %v1359 = vunpack.c.h.b16 %v217
    %v1360 = vunpack.c.l.b16 %v218
    %v1361 = vunpack.c.h.b16 %v218
    %v1362 = vunpack.c.l.b16 %v219
    %v1363 = vunpack.c.h.b16 %v219
    %v1364 = vunpack.c.l.b16 %v220
    %v1365 = vunpack.c.h.b16 %v220
    %v1366 = vunpack.c.l.b16 %v221
    %v1367 = vunpack.c.h.b16 %v221
    %v1368 = vunpack.c.l.b16 %v222
    %v1369 = vunpack.c.h.b16 %v222
    %v1370 = vunpack.c.l.b16 %v223
    %v1371 = vunpack.c.h.b16 %v223
    %v1372 = vunpack.c.l.b16 %v224
    %v1373 = vunpack.c.h.b16 %v224
    %v1374 = vunpack.c.l.b16 %v225
    %v1375 = vunpack.c.h.b16 %v225
    %v1376 = vunpack.c.l.b16 %v226
    %v1377 = vunpack.c.h.b16 %v226
    %v1378 = vunpack.c.l.b16 %v227
    %v1379 = vunpack.c.h.b16 %v227
    %v1380 = vunpack.c.l.b16 %v228
    %v1381 = vunpack.c.h.b16 %v228
    %v1382 = vunpack.c.l.b16 %v229
    %v1383 = vunpack.c.h.b16 %v229
    %v1384 = vunpack.c.l.b16 %v230
    %v1385 = vunpack.c.h.b16 %v230
    %v1386 = vunpack.c.l.b16 %v231
    %v1387 = vunpack.c.h.b16 %v231
    %v1388 = vunpack.c.l.b16 %v232
    %v1389 = vunpack.c.h.b16 %v232
    %v1390 = vunpack.c.l.b16 %v233
    %v1391 = vunpack.c.h.b16 %v233
    %v1392 = vunpack.c.l.b16 %v234
    %v1393 = vunpack.c.h.b16 %v234
    %v1394 = vunpack.c.l.b16 %v235
    %v1395 = vunpack.c.h.b16 %v235
    %v1396 = vunpack.c.l.b16 %v236
    %v1397 = vunpack.c.h.b16 %v236
    %v1398 = vunpack.c.l.b16 %v237
    %v1399 = vunpack.c.h.b16 %v237
    %v1400 = vunpack.c.l.b16 %v238
    %v1401 = vunpack.c.h.b16 %v238
    %v1402 = vunpack.c.l.b16 %v239
    %v1403 = vunpack.c.h.b16 %v239
    %v1404 = vpack.c.b16 %v1156, %v1148
    %v1405 = vpack.c.b16 %v1157, %v1149
    %v1406 = vpack.c.b16 %v1158, %v1150
    %v1407 = vpack.c.b16 %v1159, %v1151
    %v1408 = vpack.c.b16 %v1160, %v1152
    %v1409 = vpack.c.b16 %v1161, %v1153
    %v1410 = vpack.c.b16 %v1162, %v1154
    %v1411 = vpack.c.b16 %v1163, %v1155
    %v1412 = vpack.c.b16 %v1172, %v1164
    %v1413 = vpack.c.b16 %v1173, %v1165
    %v1414 = vpack.c.b16 %v1174, %v1166
    %v1415 = vpack.c.b16 %v1175, %v1167
    %v1416 = vpack.c.b16 %v1176, %v1168
    %v1417 = vpack.c.b16 %v1177, %v1169
    %v1418 = vpack.c.b16 %v1178, %v1170
    %v1419 = vpack.c.b16 %v1179, %v1171
    %v1420 = vpack.c.b16 %v1188, %v1180
    %v1421 = vpack.c.b16 %v1189, %v1181
    %v1422 = vpack.c.b16 %v1190, %v1182
    %v1423 = vpack.c.b16 %v1191, %v1183
    %v1424 = vpack.c.b16 %v1192, %v1184
    %v1425 = vpack.c.b16 %v1193, %v1185
    %v1426 = vpack.c.b16 %v1194, %v1186
    %v1427 = vpack.c.b16 %v1195, %v1187
    %v1428 = vpack.c.b16 %v1204, %v1196
    %v1429 = vpack.c.b16 %v1205, %v1197
    %v1430 = vpack.c.b16 %v1206, %v1198
    %v1431 = vpack.c.b16 %v1207, %v1199
    %v1432 = vpack.c.b16 %v1208, %v1200
    %v1433 = vpack.c.b16 %v1209, %v1201
    %v1434 = vpack.c.b16 %v1210, %v1202
    %v1435 = vpack.c.b16 %v1211, %v1203
    %v1436 = vpack.c.b16 %v1220, %v1212
    %v1437 = vpack.c.b16 %v1221, %v1213
    %v1438 = vpack.c.b16 %v1222, %v1214
    %v1439 = vpack.c.b16 %v1223, %v1215
    %v1440 = vpack.c.b16 %v1224, %v1216
    %v1441 = vpack.c.b16 %v1225, %v1217
    %v1442 = vpack.c.b16 %v1226, %v1218
    %v1443 = vpack.c.b16 %v1227, %v1219
    %v1444 = vpack.c.b16 %v1236, %v1228
    %v1445 = vpack.c.b16 %v1237, %v1229
    %v1446 = vpack.c.b16 %v1238, %v1230
    %v1447 = vpack.c.b16 %v1239, %v1231
    %v1448 = vpack.c.b16 %v1240, %v1232
    %v1449 = vpack.c.b16 %v1241, %v1233
    %v1450 = vpack.c.b16 %v1242, %v1234
    %v1451 = vpack.c.b16 %v1243, %v1235
    %v1452 = vpack.c.b16 %v1252, %v1244
    %v1453 = vpack.c.b16 %v1253, %v1245
    %v1454 = vpack.c.b16 %v1254, %v1246
    %v1455 = vpack.c.b16 %v1255, %v1247
    %v1456 = vpack.c.b16 %v1256, %v1248
    %v1457 = vpack.c.b16 %v1257, %v1249
    %v1458 = vpack.c.b16 %v1258, %v1250
    %v1459 = vpack.c.b16 %v1259, %v1251
    %v1460 = vpack.c.b16 %v1268, %v1260
    %v1461 = vpack.c.b16 %v1269, %v1261
    %v1462 = vpack.c.b16 %v1270, %v1262
    %v1463 = vpack.c.b16 %v1271, %v1263
    %v1464 = vpack.c.b16 %v1272, %v1264
    %v1465 = vpack.c.b16 %v1273, %v1265
    %v1466 = vpack.c.b16 %v1274, %v1266
    %v1467 = vpack.c.b16 %v1275, %v1267
    %v1468 = vpack.c.b16 %v1284, %v1276
    %v1469 = vpack.c.b16 %v1285, %v1277
    %v1470 = vpack.c.b16 %v1286, %v1278
    %v1471 = vpack.c.b16 %v1287, %v1279
    %v1472 = vpack.c.b16 %v1288, %v1280
    %v1473 = vpack.c.b16 %v1289, %v1281
    %v1474 = vpack.c.b16 %v1290, %v1282
    %v1475 = vpack.c.b16 %v1291, %v1283
    %v1476 = vpack.c.b16 %v1300, %v1292
    %v1477 = vpack.c.b16 %v1301, %v1293
    %v1478 = vpack.c.b16 %v1302, %v1294
    %v1479 = vpack.c.b16 %v1303, %v1295
    %v1480 = vpack.c.b16 %v1304, %v1296
    %v1481 = vpack.c.b16 %v1305, %v1297
    %v1482 = vpack.c.b16 %v1306, %v1298
    %v1483 = vpack.c.b16 %v1307, %v1299
    %v1484 = vpack.c.b16 %v1316, %v1308
    %v1485 = vpack.c.b16 %v1317, %v1309
    %v1486 = vpack.c.b16 %v1318, %v1310
    %v1487 = vpack.c.b16 %v1319, %v1311
    %v1488 = vpack.c.b16 %v1320, %v1312
    %v1489 = vpack.c.b16 %v1321, %v1313
    %v1490 = vpack.c.b16 %v1322, %v1314
    %v1491 = vpack.c.b16 %v1323, %v1315
    %v1492 = vpack.c.b16 %v1332, %v1324
    %v1493 = vpack.c.b16 %v1333, %v1325
    %v1494 = vpack.c.b16 %v1334, %v1326
    %v1495 = vpack.c.b16 %v1335, %v1327
    %v1496 = vpack.c.b16 %v1336, %v1328
    %v1497 = vpack.c.b16 %v1337, %v1329
    %v1498 = vpack.c.b16 %v1338, %v1330
    %v1499 = vpack.c.b16 %v1339, %v1331
    %v1500 = vpack.c.b16 %v1348, %v1340
    %v1501 = vpack.c.b16 %v1349, %v1341
    %v1502 = vpack.c.b16 %v1350, %v1342
    %v1503 = vpack.c.b16 %v1351, %v1343
    %v1504 = vpack.c.b16 %v1352, %v1344
    %v1505 = vpack.c.b16 %v1353, %v1345
    %v1506 = vpack.c.b16 %v1354, %v1346
    %v1507 = vpack.c.b16 %v1355, %v1347
    %v1508 = vpack.c.b16 %v1364, %v1356
    %v1509 = vpack.c.b16 %v1365, %v1357
    %v1510 = vpack.c.b16 %v1366, %v1358
    %v1511 = vpack.c.b16 %v1367, %v1359
    %v1512 = vpack.c.b16 %v1368, %v1360
    %v1513 = vpack.c.b16 %v1369, %v1361
    %v1514 = vpack.c.b16 %v1370, %v1362
    %v1515 = vpack.c.b16 %v1371, %v1363
    %v1516 = vpack.c.b16 %v1380, %v1372
    %v1517 = vpack.c.b16 %v1381, %v1373
    %v1518 = vpack.c.b16 %v1382, %v1374
    %v1519 = vpack.c.b16 %v1383, %v1375
    %v1520 = vpack.c.b16 %v1384, %v1376
    %v1521 = vpack.c.b16 %v1385, %v1377
    %v1522 = vpack.c.b16 %v1386, %v1378
    %v1523 = vpack.c.b16 %v1387, %v1379
    %v1524 = vpack.c.b16 %v1396, %v1388
    %v1525 = vpack.c.b16 %v1397, %v1389
    %v1526 = vpack.c.b16 %v1398, %v1390
    %v1527 = vpack.c.b16 %v1399, %v1391
    %v1528 = vpack.c.b16 %v1400, %v1392
    %v1529 = vpack.c.b16 %v1401, %v1393
    %v1530 = vpack.c.b16 %v1402, %v1394
    %v1531 = vpack.c.b16 %v1403, %v1395
    %1660 = vmatprep.subr.bf16.mxu0 %v1461
    %1661 = vmatpush1.bf16.msra.mxu0 %v1460
    %1662 = vmatprep.subr.bf16.mxu0 %v1453
    %1663 = vmatpush1.bf16.msra.mxu0 %v1452
    %1664 = vmatprep.subr.bf16.mxu0 %v1445
    %1665 = vmatpush1.bf16.msra.mxu0 %v1444
    %1666 = vmatprep.subr.bf16.mxu0 %v1437
    %1667 = vmatpush1.bf16.msra.mxu0 %v1436
    %1668 = vmatprep.subr.bf16.mxu0 %v1429
    %1669 = vmatpush1.bf16.msra.mxu0 %v1428
    %1670 = vmatprep.subr.bf16.mxu0 %v1421
    %1671 = vmatpush1.bf16.msra.mxu0 %v1420
    %1672 = vmatprep.subr.bf16.mxu0 %v1413
    %1673 = vmatpush1.bf16.msra.mxu0 %v1412
    %1674 = vmatprep.subr.bf16.mxu0 %v1405
    %1675 = vmatpush1.bf16.msra.mxu0 %v1404
    %1676 = vmatprep.subr.bf16.mxu0 %v1525
    %1677 = vmatpush2.bf16.msra.mxu0 %v1524
    %1678 = vmatprep.subr.bf16.mxu0 %v1517
    %1679 = vmatpush2.bf16.msra.mxu0 %v1516
    %1680 = vmatprep.subr.bf16.mxu0 %v1509
    %1681 = vmatpush2.bf16.msra.mxu0 %v1508
    %1682 = vmatprep.subr.bf16.mxu0 %v1501
    %1683 = vmatpush2.bf16.msra.mxu0 %v1500
    %1684 = vmatprep.subr.bf16.mxu0 %v1493
    %1685 = vmatpush2.bf16.msra.mxu0 %v1492
    %1686 = vmatprep.subr.bf16.mxu0 %v1485
    %1687 = vmatpush2.bf16.msra.mxu0 %v1484
    %1688 = vmatprep.subr.bf16.mxu0 %v1477
    %1689 = vmatpush2.bf16.msra.mxu0 %v1476
    %1690 = vmatprep.subr.bf16.mxu0 %v1469
    %1691 = vmatpush2.bf16.msra.mxu0 %v1468
    %1692 = vmatprep.mubr.bf16.mxu0 %v1019
    %1693 = vmatmul.mubr.bf16.gmra.mxu0 %v1018
    %v1694 = vpop.f32.mrf.mxu0
    %v1695 = vadd.f32 0.0, %v1694
    %v1696 = vpop.f32.mrf.mxu0
    %v1697 = vadd.f32 0.0, %v1696
    %v1698 = vpop.f32.mrf.mxu0
    %v1699 = vadd.f32 0.0, %v1698
    %v1700 = vpop.f32.mrf.mxu0
    %v1701 = vadd.f32 0.0, %v1700
    %1702 = vdwg.mxu0
    %1703 = vmatprep.subr.bf16.mxu0 %v1463
    %1704 = vmatpush1.bf16.msra.mxu0 %v1462
    %1705 = vmatprep.subr.bf16.mxu0 %v1455
    %1706 = vmatpush1.bf16.msra.mxu0 %v1454
    %1707 = vmatprep.subr.bf16.mxu0 %v1447
    %1708 = vmatpush1.bf16.msra.mxu0 %v1446
    %1709 = vmatprep.subr.bf16.mxu0 %v1439
    %1710 = vmatpush1.bf16.msra.mxu0 %v1438
    %1711 = vmatprep.subr.bf16.mxu0 %v1431
    %1712 = vmatpush1.bf16.msra.mxu0 %v1430
    %1713 = vmatprep.subr.bf16.mxu0 %v1423
    %1714 = vmatpush1.bf16.msra.mxu0 %v1422
    %1715 = vmatprep.subr.bf16.mxu0 %v1415
    %1716 = vmatpush1.bf16.msra.mxu0 %v1414
    %1717 = vmatprep.subr.bf16.mxu0 %v1407
    %1718 = vmatpush1.bf16.msra.mxu0 %v1406
    %1719 = vmatprep.subr.bf16.mxu0 %v1527
    %1720 = vmatpush2.bf16.msra.mxu0 %v1526
    %1721 = vmatprep.subr.bf16.mxu0 %v1519
    %1722 = vmatpush2.bf16.msra.mxu0 %v1518
    %1723 = vmatprep.subr.bf16.mxu0 %v1511
    %1724 = vmatpush2.bf16.msra.mxu0 %v1510
    %1725 = vmatprep.subr.bf16.mxu0 %v1503
    %1726 = vmatpush2.bf16.msra.mxu0 %v1502
    %1727 = vmatprep.subr.bf16.mxu0 %v1495
    %1728 = vmatpush2.bf16.msra.mxu0 %v1494
    %1729 = vmatprep.subr.bf16.mxu0 %v1487
    %1730 = vmatpush2.bf16.msra.mxu0 %v1486
    %1731 = vmatprep.subr.bf16.mxu0 %v1479
    %1732 = vmatpush2.bf16.msra.mxu0 %v1478
    %1733 = vmatprep.subr.bf16.mxu0 %v1471
    %1734 = vmatpush2.bf16.msra.mxu0 %v1470
    %1735 = vmatprep.mubr.bf16.mxu0 %v1019
    %1736 = vmatmul.mubr.bf16.gmra.mxu0 %v1018
    %v1737 = vpop.f32.mrf.mxu0
    %v1738 = vadd.f32 0.0, %v1737
    %v1739 = vpop.f32.mrf.mxu0
    %v1740 = vadd.f32 0.0, %v1739
    %v1741 = vpop.f32.mrf.mxu0
    %v1742 = vadd.f32 0.0, %v1741
    %v1743 = vpop.f32.mrf.mxu0
    %v1744 = vadd.f32 0.0, %v1743
    %1745 = vdwg.mxu0
    %1746 = vmatprep.subr.bf16.mxu0 %v1465
    %1747 = vmatpush1.bf16.msra.mxu0 %v1464
    %1748 = vmatprep.subr.bf16.mxu0 %v1457
    %1749 = vmatpush1.bf16.msra.mxu0 %v1456
    %1750 = vmatprep.subr.bf16.mxu0 %v1449
    %1751 = vmatpush1.bf16.msra.mxu0 %v1448
    %1752 = vmatprep.subr.bf16.mxu0 %v1441
    %1753 = vmatpush1.bf16.msra.mxu0 %v1440
    %1754 = vmatprep.subr.bf16.mxu0 %v1433
    %1755 = vmatpush1.bf16.msra.mxu0 %v1432
    %1756 = vmatprep.subr.bf16.mxu0 %v1425
    %1757 = vmatpush1.bf16.msra.mxu0 %v1424
    %1758 = vmatprep.subr.bf16.mxu0 %v1417
    %1759 = vmatpush1.bf16.msra.mxu0 %v1416
    %1760 = vmatprep.subr.bf16.mxu0 %v1409
    %1761 = vmatpush1.bf16.msra.mxu0 %v1408
    %1762 = vmatprep.subr.bf16.mxu0 %v1529
    %1763 = vmatpush2.bf16.msra.mxu0 %v1528
    %1764 = vmatprep.subr.bf16.mxu0 %v1521
    %1765 = vmatpush2.bf16.msra.mxu0 %v1520
    %1766 = vmatprep.subr.bf16.mxu0 %v1513
    %1767 = vmatpush2.bf16.msra.mxu0 %v1512
    %1768 = vmatprep.subr.bf16.mxu0 %v1505
    %1769 = vmatpush2.bf16.msra.mxu0 %v1504
    %1770 = vmatprep.subr.bf16.mxu0 %v1497
    %1771 = vmatpush2.bf16.msra.mxu0 %v1496
    %1772 = vmatprep.subr.bf16.mxu0 %v1489
    %1773 = vmatpush2.bf16.msra.mxu0 %v1488
    %1774 = vmatprep.subr.bf16.mxu0 %v1481
    %1775 = vmatpush2.bf16.msra.mxu0 %v1480
    %1776 = vmatprep.subr.bf16.mxu0 %v1473
    %1777 = vmatpush2.bf16.msra.mxu0 %v1472
    %1778 = vmatprep.mubr.bf16.mxu0 %v1019
    %1779 = vmatmul.mubr.bf16.gmra.mxu0 %v1018
    %v1780 = vpop.f32.mrf.mxu0
    %v1781 = vadd.f32 0.0, %v1780
    %v1782 = vpop.f32.mrf.mxu0
    %v1783 = vadd.f32 0.0, %v1782
    %v1784 = vpop.f32.mrf.mxu0
    %v1785 = vadd.f32 0.0, %v1784
    %v1786 = vpop.f32.mrf.mxu0
    %v1787 = vadd.f32 0.0, %v1786
    %1788 = vdwg.mxu0
    %1789 = vmatprep.subr.bf16.mxu0 %v1467
    %1790 = vmatpush1.bf16.msra.mxu0 %v1466
    %1791 = vmatprep.subr.bf16.mxu0 %v1459
    %1792 = vmatpush1.bf16.msra.mxu0 %v1458
    %1793 = vmatprep.subr.bf16.mxu0 %v1451
    %1794 = vmatpush1.bf16.msra.mxu0 %v1450
    %1795 = vmatprep.subr.bf16.mxu0 %v1443
    %1796 = vmatpush1.bf16.msra.mxu0 %v1442
    %1797 = vmatprep.subr.bf16.mxu0 %v1435
    %1798 = vmatpush1.bf16.msra.mxu0 %v1434
    %1799 = vmatprep.subr.bf16.mxu0 %v1427
    %1800 = vmatpush1.bf16.msra.mxu0 %v1426
    %1801 = vmatprep.subr.bf16.mxu0 %v1419
    %1802 = vmatpush1.bf16.msra.mxu0 %v1418
    %1803 = vmatprep.subr.bf16.mxu0 %v1411
    %1804 = vmatpush1.bf16.msra.mxu0 %v1410
    %1805 = vmatprep.subr.bf16.mxu0 %v1531
    %1806 = vmatpush2.bf16.msra.mxu0 %v1530
    %1807 = vmatprep.subr.bf16.mxu0 %v1523
    %1808 = vmatpush2.bf16.msra.mxu0 %v1522
    %1809 = vmatprep.subr.bf16.mxu0 %v1515
    %1810 = vmatpush2.bf16.msra.mxu0 %v1514
    %1811 = vmatprep.subr.bf16.mxu0 %v1507
    %1812 = vmatpush2.bf16.msra.mxu0 %v1506
    %1813 = vmatprep.subr.bf16.mxu0 %v1499
    %1814 = vmatpush2.bf16.msra.mxu0 %v1498
    %1815 = vmatprep.subr.bf16.mxu0 %v1491
    %1816 = vmatpush2.bf16.msra.mxu0 %v1490
    %1817 = vmatprep.subr.bf16.mxu0 %v1483
    %1818 = vmatpush2.bf16.msra.mxu0 %v1482
    %1819 = vmatprep.subr.bf16.mxu0 %v1475
    %1820 = vmatpush2.bf16.msra.mxu0 %v1474
    %1821 = vmatprep.mubr.bf16.mxu0 %v1019
    %1822 = vmatmul.mubr.bf16.gmra.mxu0 %v1018
    %v1823 = vpop.f32.mrf.mxu0
    %v1824 = vadd.f32 0.0, %v1823
    %v1825 = vpop.f32.mrf.mxu0
    %v1826 = vadd.f32 0.0, %v1825
    %v1827 = vpop.f32.mrf.mxu0
    %v1828 = vadd.f32 0.0, %v1827
    %v1829 = vpop.f32.mrf.mxu0
    %v1830 = vadd.f32 0.0, %v1829
    %1831 = vdwg.mxu0
    %s1832 = smul.u32 2, 4
    %s1833 = smul.addr %s1832, 8
    %s1834 = scalar_lea.vmem [#allocation2], %s1833
    %v1835 = vld [vmem:[%s1834] sm:$0xff]
    %v1836 = vld [vmem:[%s1834 + $0x8] sm:$0xff]
    %v1837 = vld [vmem:[%s1834 + $0x10] sm:$0xff]
    %v1838 = vld [vmem:[%s1834 + $0x18] sm:$0xff]
    %v1839 = vld [vmem:[%s1834 + $0x20] sm:$0xff]
    %v1840 = vld [vmem:[%s1834 + $0x28] sm:$0xff]
    %v1841 = vld [vmem:[%s1834 + $0x30] sm:$0xff]
    %v1842 = vld [vmem:[%s1834 + $0x38] sm:$0xff]
    %v1843 = vadd.f32 %v1835, %v1695
    %v1844 = vadd.f32 %v1836, %v1697
    %v1845 = vadd.f32 %v1837, %v1738
    %v1846 = vadd.f32 %v1838, %v1740
    %v1847 = vadd.f32 %v1839, %v1699
    %v1848 = vadd.f32 %v1840, %v1701
    %v1849 = vadd.f32 %v1841, %v1742
    %v1850 = vadd.f32 %v1842, %v1744
    %v1852 = vlaneseq
    %v1853 = vshrl.u32 %v1852, 7
    %v1854 = vsub.s32 0, %v1853
    %v1855 = vrot.slane %v240, %v1854
    %v1856 = vlaneseq
    %v1857 = vshrl.u32 %v1856, 7
    %v1858 = vsub.s32 1, %v1857
    %v1859 = vrot.slane %v240, %v1858
    %v1860 = vlaneseq
    %v1861 = vshrl.u32 %v1860, 7
    %v1862 = vsub.s32 2, %v1861
    %v1863 = vrot.slane %v240, %v1862
    %v1864 = vlaneseq
    %v1865 = vshrl.u32 %v1864, 7
    %v1866 = vsub.s32 3, %v1865
    %v1867 = vrot.slane %v240, %v1866
    %v1872 = vadd.f32 %v1855, %v1781
    %v1873 = vadd.f32 %v1859, %v1783
    %v1874 = vadd.f32 %v1863, %v1824
    %v1875 = vadd.f32 %v1867, %v1826
    %v1876 = vadd.f32 %v1855, %v1785
    %v1877 = vadd.f32 %v1859, %v1787
    %v1878 = vadd.f32 %v1863, %v1828
    %v1879 = vadd.f32 %v1867, %v1830
    %v1880 = vxor.u32 %v1843, 2147483648
    %v1881 = vxor.u32 %v1844, 2147483648
    %v1882 = vxor.u32 %v1845, 2147483648
    %v1883 = vxor.u32 %v1847, 2147483648
    %v1884 = vxor.u32 %v1848, 2147483648
    %v1885 = vxor.u32 %v1849, 2147483648
    %v1886 = vmul.f32 %v1880, 1.442695
    %v1887 = vpow.pop %v1886
    %v1888 = vmul.f32 %v1881, 1.442695
    %v1889 = vpow.pop %v1888
    %v1890 = vmul.f32 %v1882, 1.442695
    %v1891 = vpow.pop %v1890
    %v1892 = vmul.f32 %v1883, 1.442695
    %v1893 = vpow.pop %v1892
    %v1894 = vmul.f32 %v1884, 1.442695
    %v1895 = vpow.pop %v1894
    %v1896 = vmul.f32 %v1885, 1.442695
    %v1897 = vpow.pop %v1896
    %v1898 = vadd.f32 %v1887, 1.0
    %v1899 = vadd.f32 %v1889, 1.0
    %v1900 = vadd.f32 %v1891, 1.0
    %v1901 = vadd.f32 %v1893, 1.0
    %v1902 = vadd.f32 %v1895, 1.0
    %v1903 = vadd.f32 %v1897, 1.0
    %v1904 = vrcp.pop %v1898
    %v1905 = vmul.f32 1.0, %v1904
    %v1906 = vrcp.pop %v1899
    %v1907 = vmul.f32 1.0, %v1906
    %v1908 = vrcp.pop %v1900
    %v1909 = vmul.f32 1.0, %v1908
    %v1910 = vrcp.pop %v1901
    %v1911 = vmul.f32 1.0, %v1910
    %v1912 = vrcp.pop %v1902
    %v1913 = vmul.f32 1.0, %v1912
    %v1914 = vrcp.pop %v1903
    %v1915 = vmul.f32 1.0, %v1914
    %v1916 = vtanh.pop %v1846
    %v1917 = vtanh.pop %v1850
    %v1918 = vmul.f32 %v1907, %v1012
    %v1919 = vmul.f32 %v1913, %v1013
    %v1920 = vmul.f32 %v1905, %v1916
    %v1921 = vmul.f32 %v1911, %v1917
    %v1922 = vadd.f32 %v1918, %v1920
    %v1923 = vadd.f32 %v1919, %v1921
    %v1924 = vtanh.pop %v1922
    %v1925 = vtanh.pop %v1923
    %v1926 = vmul.f32 %v1909, %v1924
    %v1927 = vmul.f32 %v1915, %v1925
    %v1928 = vxor.u32 %v1872, 2147483648
    %v1929 = vxor.u32 %v1873, 2147483648
    %v1930 = vxor.u32 %v1874, 2147483648
    %v1931 = vxor.u32 %v1876, 2147483648
    %v1932 = vxor.u32 %v1877, 2147483648
    %v1933 = vxor.u32 %v1878, 2147483648
    %v1934 = vmul.f32 %v1928, 1.442695
    %v1935 = vpow.pop %v1934
    %v1936 = vmul.f32 %v1929, 1.442695
    %v1937 = vpow.pop %v1936
    %v1938 = vmul.f32 %v1930, 1.442695
    %v1939 = vpow.pop %v1938
    %v1940 = vmul.f32 %v1931, 1.442695
    %v1941 = vpow.pop %v1940
    %v1942 = vmul.f32 %v1932, 1.442695
    %v1943 = vpow.pop %v1942
    %v1944 = vmul.f32 %v1933, 1.442695
    %v1945 = vpow.pop %v1944
    %v1946 = vadd.f32 %v1935, 1.0
    %v1947 = vadd.f32 %v1937, 1.0
    %v1948 = vadd.f32 %v1939, 1.0
    %v1949 = vadd.f32 %v1941, 1.0
    %v1950 = vadd.f32 %v1943, 1.0
    %v1951 = vadd.f32 %v1945, 1.0
    %v1952 = vrcp.pop %v1946
    %v1953 = vmul.f32 1.0, %v1952
    %v1954 = vrcp.pop %v1947
    %v1955 = vmul.f32 1.0, %v1954
    %v1956 = vrcp.pop %v1948
    %v1957 = vmul.f32 1.0, %v1956
    %v1958 = vrcp.pop %v1949
    %v1959 = vmul.f32 1.0, %v1958
    %v1960 = vrcp.pop %v1950
    %v1961 = vmul.f32 1.0, %v1960
    %v1962 = vrcp.pop %v1951
    %v1963 = vmul.f32 1.0, %v1962
    %v1964 = vtanh.pop %v1875
    %v1965 = vtanh.pop %v1879
    %v1966 = vmul.f32 %v1955, 0.0
    %v1967 = vmul.f32 %v1961, 0.0
    %v1968 = vmul.f32 %v1953, %v1964
    %v1969 = vmul.f32 %v1959, %v1965
    %v1970 = vadd.f32 %v1966, %v1968
    %v1971 = vadd.f32 %v1967, %v1969
    %v1972 = vtanh.pop %v1970
    %v1973 = vtanh.pop %v1971
    %v1974 = vmul.f32 %v1957, %v1972
    %v1975 = vmul.f32 %v1963, %v1973
    %v1976 = vpack.c.bf16 %v1927, %v1926
    %v1977 = vpack.c.bf16 %v1975, %v1974
    %1978 = vmatprep.subr.bf16.mxu0 %v1461
    %1979 = vmatpush1.bf16.msra.mxu0 %v1460
    %1980 = vmatprep.subr.bf16.mxu0 %v1453
    %1981 = vmatpush1.bf16.msra.mxu0 %v1452
    %1982 = vmatprep.subr.bf16.mxu0 %v1445
    %1983 = vmatpush1.bf16.msra.mxu0 %v1444
    %1984 = vmatprep.subr.bf16.mxu0 %v1437
    %1985 = vmatpush1.bf16.msra.mxu0 %v1436
    %1986 = vmatprep.subr.bf16.mxu0 %v1429
    %1987 = vmatpush1.bf16.msra.mxu0 %v1428
    %1988 = vmatprep.subr.bf16.mxu0 %v1421
    %1989 = vmatpush1.bf16.msra.mxu0 %v1420
    %1990 = vmatprep.subr.bf16.mxu0 %v1413
    %1991 = vmatpush1.bf16.msra.mxu0 %v1412
    %1992 = vmatprep.subr.bf16.mxu0 %v1405
    %1993 = vmatpush1.bf16.msra.mxu0 %v1404
    %1994 = vmatprep.subr.bf16.mxu0 %v1525
    %1995 = vmatpush2.bf16.msra.mxu0 %v1524
    %1996 = vmatprep.subr.bf16.mxu0 %v1517
    %1997 = vmatpush2.bf16.msra.mxu0 %v1516
    %1998 = vmatprep.subr.bf16.mxu0 %v1509
    %1999 = vmatpush2.bf16.msra.mxu0 %v1508
    %2000 = vmatprep.subr.bf16.mxu0 %v1501
    %2001 = vmatpush2.bf16.msra.mxu0 %v1500
    %2002 = vmatprep.subr.bf16.mxu0 %v1493
    %2003 = vmatpush2.bf16.msra.mxu0 %v1492
    %2004 = vmatprep.subr.bf16.mxu0 %v1485
    %2005 = vmatpush2.bf16.msra.mxu0 %v1484
    %2006 = vmatprep.subr.bf16.mxu0 %v1477
    %2007 = vmatpush2.bf16.msra.mxu0 %v1476
    %2008 = vmatprep.subr.bf16.mxu0 %v1469
    %2009 = vmatpush2.bf16.msra.mxu0 %v1468
    %2010 = vmatprep.mubr.bf16.mxu0 %v1977
    %2011 = vmatmul.mubr.bf16.gmra.mxu0 %v1976
    %v2012 = vpop.f32.mrf.mxu0
    %v2013 = vadd.f32 0.0, %v2012
    %v2014 = vpop.f32.mrf.mxu0
    %v2015 = vadd.f32 0.0, %v2014
    %v2016 = vpop.f32.mrf.mxu0
    %v2017 = vadd.f32 0.0, %v2016
    %v2018 = vpop.f32.mrf.mxu0
    %v2019 = vadd.f32 0.0, %v2018
    %2020 = vdwg.mxu0
    %2021 = vmatprep.subr.bf16.mxu0 %v1463
    %2022 = vmatpush1.bf16.msra.mxu0 %v1462
    %2023 = vmatprep.subr.bf16.mxu0 %v1455
    %2024 = vmatpush1.bf16.msra.mxu0 %v1454
    %2025 = vmatprep.subr.bf16.mxu0 %v1447
    %2026 = vmatpush1.bf16.msra.mxu0 %v1446
    %2027 = vmatprep.subr.bf16.mxu0 %v1439
    %2028 = vmatpush1.bf16.msra.mxu0 %v1438
    %2029 = vmatprep.subr.bf16.mxu0 %v1431
    %2030 = vmatpush1.bf16.msra.mxu0 %v1430
    %2031 = vmatprep.subr.bf16.mxu0 %v1423
    %2032 = vmatpush1.bf16.msra.mxu0 %v1422
    %2033 = vmatprep.subr.bf16.mxu0 %v1415
    %2034 = vmatpush1.bf16.msra.mxu0 %v1414
    %2035 = vmatprep.subr.bf16.mxu0 %v1407
    %2036 = vmatpush1.bf16.msra.mxu0 %v1406
    %2037 = vmatprep.subr.bf16.mxu0 %v1527
    %2038 = vmatpush2.bf16.msra.mxu0 %v1526
    %2039 = vmatprep.subr.bf16.mxu0 %v1519
    %2040 = vmatpush2.bf16.msra.mxu0 %v1518
    %2041 = vmatprep.subr.bf16.mxu0 %v1511
    %2042 = vmatpush2.bf16.msra.mxu0 %v1510
    %2043 = vmatprep.subr.bf16.mxu0 %v1503
    %2044 = vmatpush2.bf16.msra.mxu0 %v1502
    %2045 = vmatprep.subr.bf16.mxu0 %v1495
    %2046 = vmatpush2.bf16.msra.mxu0 %v1494
    %2047 = vmatprep.subr.bf16.mxu0 %v1487
    %2048 = vmatpush2.bf16.msra.mxu0 %v1486
    %2049 = vmatprep.subr.bf16.mxu0 %v1479
    %2050 = vmatpush2.bf16.msra.mxu0 %v1478
    %2051 = vmatprep.subr.bf16.mxu0 %v1471
    %2052 = vmatpush2.bf16.msra.mxu0 %v1470
    %2053 = vmatprep.mubr.bf16.mxu0 %v1977
    %2054 = vmatmul.mubr.bf16.gmra.mxu0 %v1976
    %v2055 = vpop.f32.mrf.mxu0
    %v2056 = vadd.f32 0.0, %v2055
    %v2057 = vpop.f32.mrf.mxu0
    %v2058 = vadd.f32 0.0, %v2057
    %v2059 = vpop.f32.mrf.mxu0
    %v2060 = vadd.f32 0.0, %v2059
    %v2061 = vpop.f32.mrf.mxu0
    %v2062 = vadd.f32 0.0, %v2061
    %2063 = vdwg.mxu0
    %2064 = vmatprep.subr.bf16.mxu0 %v1465
    %2065 = vmatpush1.bf16.msra.mxu0 %v1464
    %2066 = vmatprep.subr.bf16.mxu0 %v1457
    %2067 = vmatpush1.bf16.msra.mxu0 %v1456
    %2068 = vmatprep.subr.bf16.mxu0 %v1449
    %2069 = vmatpush1.bf16.msra.mxu0 %v1448
    %2070 = vmatprep.subr.bf16.mxu0 %v1441
    %2071 = vmatpush1.bf16.msra.mxu0 %v1440
    %2072 = vmatprep.subr.bf16.mxu0 %v1433
    %2073 = vmatpush1.bf16.msra.mxu0 %v1432
    %2074 = vmatprep.subr.bf16.mxu0 %v1425
    %2075 = vmatpush1.bf16.msra.mxu0 %v1424
    %2076 = vmatprep.subr.bf16.mxu0 %v1417
    %2077 = vmatpush1.bf16.msra.mxu0 %v1416
    %2078 = vmatprep.subr.bf16.mxu0 %v1409
    %2079 = vmatpush1.bf16.msra.mxu0 %v1408
    %2080 = vmatprep.subr.bf16.mxu0 %v1529
    %2081 = vmatpush2.bf16.msra.mxu0 %v1528
    %2082 = vmatprep.subr.bf16.mxu0 %v1521
    %2083 = vmatpush2.bf16.msra.mxu0 %v1520
    %2084 = vmatprep.subr.bf16.mxu0 %v1513
    %2085 = vmatpush2.bf16.msra.mxu0 %v1512
    %2086 = vmatprep.subr.bf16.mxu0 %v1505
    %2087 = vmatpush2.bf16.msra.mxu0 %v1504
    %2088 = vmatprep.subr.bf16.mxu0 %v1497
    %2089 = vmatpush2.bf16.msra.mxu0 %v1496
    %2090 = vmatprep.subr.bf16.mxu0 %v1489
    %2091 = vmatpush2.bf16.msra.mxu0 %v1488
    %2092 = vmatprep.subr.bf16.mxu0 %v1481
    %2093 = vmatpush2.bf16.msra.mxu0 %v1480
    %2094 = vmatprep.subr.bf16.mxu0 %v1473
    %2095 = vmatpush2.bf16.msra.mxu0 %v1472
    %2096 = vmatprep.mubr.bf16.mxu0 %v1977
    %2097 = vmatmul.mubr.bf16.gmra.mxu0 %v1976
    %v2098 = vpop.f32.mrf.mxu0
    %v2099 = vadd.f32 0.0, %v2098
    %v2100 = vpop.f32.mrf.mxu0
    %v2101 = vadd.f32 0.0, %v2100
    %v2102 = vpop.f32.mrf.mxu0
    %v2103 = vadd.f32 0.0, %v2102
    %v2104 = vpop.f32.mrf.mxu0
    %v2105 = vadd.f32 0.0, %v2104
    %2106 = vdwg.mxu0
    %2107 = vmatprep.subr.bf16.mxu0 %v1467
    %2108 = vmatpush1.bf16.msra.mxu0 %v1466
    %2109 = vmatprep.subr.bf16.mxu0 %v1459
    %2110 = vmatpush1.bf16.msra.mxu0 %v1458
    %2111 = vmatprep.subr.bf16.mxu0 %v1451
    %2112 = vmatpush1.bf16.msra.mxu0 %v1450
    %2113 = vmatprep.subr.bf16.mxu0 %v1443
    %2114 = vmatpush1.bf16.msra.mxu0 %v1442
    %2115 = vmatprep.subr.bf16.mxu0 %v1435
    %2116 = vmatpush1.bf16.msra.mxu0 %v1434
    %2117 = vmatprep.subr.bf16.mxu0 %v1427
    %2118 = vmatpush1.bf16.msra.mxu0 %v1426
    %2119 = vmatprep.subr.bf16.mxu0 %v1419
    %2120 = vmatpush1.bf16.msra.mxu0 %v1418
    %2121 = vmatprep.subr.bf16.mxu0 %v1411
    %2122 = vmatpush1.bf16.msra.mxu0 %v1410
    %2123 = vmatprep.subr.bf16.mxu0 %v1531
    %2124 = vmatpush2.bf16.msra.mxu0 %v1530
    %2125 = vmatprep.subr.bf16.mxu0 %v1523
    %2126 = vmatpush2.bf16.msra.mxu0 %v1522
    %2127 = vmatprep.subr.bf16.mxu0 %v1515
    %2128 = vmatpush2.bf16.msra.mxu0 %v1514
    %2129 = vmatprep.subr.bf16.mxu0 %v1507
    %2130 = vmatpush2.bf16.msra.mxu0 %v1506
    %2131 = vmatprep.subr.bf16.mxu0 %v1499
    %2132 = vmatpush2.bf16.msra.mxu0 %v1498
    %2133 = vmatprep.subr.bf16.mxu0 %v1491
    %2134 = vmatpush2.bf16.msra.mxu0 %v1490
    %2135 = vmatprep.subr.bf16.mxu0 %v1483
    %2136 = vmatpush2.bf16.msra.mxu0 %v1482
    %2137 = vmatprep.subr.bf16.mxu0 %v1475
    %2138 = vmatpush2.bf16.msra.mxu0 %v1474
    %2139 = vmatprep.mubr.bf16.mxu0 %v1977
    %2140 = vmatmul.mubr.bf16.gmra.mxu0 %v1976
    %v2141 = vpop.f32.mrf.mxu0
    %v2142 = vadd.f32 0.0, %v2141
    %v2143 = vpop.f32.mrf.mxu0
    %v2144 = vadd.f32 0.0, %v2143
    %v2145 = vpop.f32.mrf.mxu0
    %v2146 = vadd.f32 0.0, %v2145
    %v2147 = vpop.f32.mrf.mxu0
    %v2148 = vadd.f32 0.0, %v2147
    %2149 = vdwg.mxu0
    %s2150 = smul.u32 4, 4
    %s2151 = smul.addr %s2150, 8
    %s2152 = scalar_lea.vmem [#allocation2], %s2151
    %v2153 = vld [vmem:[%s2152] sm:$0xff]
    %v2154 = vld [vmem:[%s2152 + $0x8] sm:$0xff]
    %v2155 = vld [vmem:[%s2152 + $0x10] sm:$0xff]
    %v2156 = vld [vmem:[%s2152 + $0x18] sm:$0xff]
    %v2157 = vld [vmem:[%s2152 + $0x20] sm:$0xff]
    %v2158 = vld [vmem:[%s2152 + $0x28] sm:$0xff]
    %v2159 = vld [vmem:[%s2152 + $0x30] sm:$0xff]
    %v2160 = vld [vmem:[%s2152 + $0x38] sm:$0xff]
    %v2161 = vadd.f32 %v2153, %v2013
    %v2162 = vadd.f32 %v2154, %v2015
    %v2163 = vadd.f32 %v2155, %v2056
    %v2164 = vadd.f32 %v2156, %v2058
    %v2165 = vadd.f32 %v2157, %v2017
    %v2166 = vadd.f32 %v2158, %v2019
    %v2167 = vadd.f32 %v2159, %v2060
    %v2168 = vadd.f32 %v2160, %v2062
    %v2169 = vadd.f32 %v1855, %v2099
    %v2170 = vadd.f32 %v1859, %v2101
    %v2171 = vadd.f32 %v1863, %v2142
    %v2172 = vadd.f32 %v1867, %v2144
    %v2173 = vadd.f32 %v1855, %v2103
    %v2174 = vadd.f32 %v1859, %v2105
    %v2175 = vadd.f32 %v1863, %v2146
    %v2176 = vadd.f32 %v1867, %v2148
    %v2177 = vxor.u32 %v2161, 2147483648
    %v2178 = vxor.u32 %v2162, 2147483648
    %v2179 = vxor.u32 %v2163, 2147483648
    %v2180 = vxor.u32 %v2165, 2147483648
    %v2181 = vxor.u32 %v2166, 2147483648
    %v2182 = vxor.u32 %v2167, 2147483648
    %v2183 = vmul.f32 %v2177, 1.442695
    %v2184 = vpow.pop %v2183
    %v2185 = vmul.f32 %v2178, 1.442695
    %v2186 = vpow.pop %v2185
    %v2187 = vmul.f32 %v2179, 1.442695
    %v2188 = vpow.pop %v2187
    %v2189 = vmul.f32 %v2180, 1.442695
    %v2190 = vpow.pop %v2189
    %v2191 = vmul.f32 %v2181, 1.442695
    %v2192 = vpow.pop %v2191
    %v2193 = vmul.f32 %v2182, 1.442695
    %v2194 = vpow.pop %v2193
    %v2195 = vadd.f32 %v2184, 1.0
    %v2196 = vadd.f32 %v2186, 1.0
    %v2197 = vadd.f32 %v2188, 1.0
    %v2198 = vadd.f32 %v2190, 1.0
    %v2199 = vadd.f32 %v2192, 1.0
    %v2200 = vadd.f32 %v2194, 1.0
    %v2201 = vrcp.pop %v2195
    %v2202 = vmul.f32 1.0, %v2201
    %v2203 = vrcp.pop %v2196
    %v2204 = vmul.f32 1.0, %v2203
    %v2205 = vrcp.pop %v2197
    %v2206 = vmul.f32 1.0, %v2205
    %v2207 = vrcp.pop %v2198
    %v2208 = vmul.f32 1.0, %v2207
    %v2209 = vrcp.pop %v2199
    %v2210 = vmul.f32 1.0, %v2209
    %v2211 = vrcp.pop %v2200
    %v2212 = vmul.f32 1.0, %v2211
    %v2213 = vtanh.pop %v2164
    %v2214 = vtanh.pop %v2168
    %v2215 = vmul.f32 %v2204, %v1922
    %v2216 = vmul.f32 %v2210, %v1923
    %v2217 = vmul.f32 %v2202, %v2213
    %v2218 = vmul.f32 %v2208, %v2214
    %v2219 = vadd.f32 %v2215, %v2217
    %v2220 = vadd.f32 %v2216, %v2218
    %v2221 = vtanh.pop %v2219
    %v2222 = vtanh.pop %v2220
    %v2223 = vmul.f32 %v2206, %v2221
    %v2224 = vmul.f32 %v2212, %v2222
    %v2225 = vxor.u32 %v2169, 2147483648
    %v2226 = vxor.u32 %v2170, 2147483648
    %v2227 = vxor.u32 %v2171, 2147483648
    %v2228 = vxor.u32 %v2173, 2147483648
    %v2229 = vxor.u32 %v2174, 2147483648
    %v2230 = vxor.u32 %v2175, 2147483648
    %v2231 = vmul.f32 %v2225, 1.442695
    %v2232 = vpow.pop %v2231
    %v2233 = vmul.f32 %v2226, 1.442695
    %v2234 = vpow.pop %v2233
    %v2235 = vmul.f32 %v2227, 1.442695
    %v2236 = vpow.pop %v2235
    %v2237 = vmul.f32 %v2228, 1.442695
    %v2238 = vpow.pop %v2237
    %v2239 = vmul.f32 %v2229, 1.442695
    %v2240 = vpow.pop %v2239
    %v2241 = vmul.f32 %v2230, 1.442695
    %v2242 = vpow.pop %v2241
    %v2243 = vadd.f32 %v2232, 1.0
    %v2244 = vadd.f32 %v2234, 1.0
    %v2245 = vadd.f32 %v2236, 1.0
    %v2246 = vadd.f32 %v2238, 1.0
    %v2247 = vadd.f32 %v2240, 1.0
    %v2248 = vadd.f32 %v2242, 1.0
    %v2249 = vrcp.pop %v2243
    %v2250 = vmul.f32 1.0, %v2249
    %v2251 = vrcp.pop %v2244
    %v2252 = vmul.f32 1.0, %v2251
    %v2253 = vrcp.pop %v2245
    %v2254 = vmul.f32 1.0, %v2253
    %v2255 = vrcp.pop %v2246
    %v2256 = vmul.f32 1.0, %v2255
    %v2257 = vrcp.pop %v2247
    %v2258 = vmul.f32 1.0, %v2257
    %v2259 = vrcp.pop %v2248
    %v2260 = vmul.f32 1.0, %v2259
    %v2261 = vtanh.pop %v2172
    %v2262 = vtanh.pop %v2176
    %v2263 = vmul.f32 %v2252, %v1970
    %v2264 = vmul.f32 %v2258, %v1971
    %v2265 = vmul.f32 %v2250, %v2261
    %v2266 = vmul.f32 %v2256, %v2262
    %v2267 = vadd.f32 %v2263, %v2265
    %v2268 = vadd.f32 %v2264, %v2266
    %v2269 = vtanh.pop %v2267
    %v2270 = vtanh.pop %v2268
    %v2271 = vmul.f32 %v2254, %v2269
    %v2272 = vmul.f32 %v2260, %v2270
    %v2273 = vpack.c.bf16 %v2224, %v2223
    %v2274 = vpack.c.bf16 %v2272, %v2271
    %2275 = vmatprep.subr.bf16.mxu0 %v1461
    %2276 = vmatpush1.bf16.msra.mxu0 %v1460
    %2277 = vmatprep.subr.bf16.mxu0 %v1453
    %2278 = vmatpush1.bf16.msra.mxu0 %v1452
    %2279 = vmatprep.subr.bf16.mxu0 %v1445
    %2280 = vmatpush1.bf16.msra.mxu0 %v1444
    %2281 = vmatprep.subr.bf16.mxu0 %v1437
    %2282 = vmatpush1.bf16.msra.mxu0 %v1436
    %2283 = vmatprep.subr.bf16.mxu0 %v1429
    %2284 = vmatpush1.bf16.msra.mxu0 %v1428
    %2285 = vmatprep.subr.bf16.mxu0 %v1421
    %2286 = vmatpush1.bf16.msra.mxu0 %v1420
    %2287 = vmatprep.subr.bf16.mxu0 %v1413
    %2288 = vmatpush1.bf16.msra.mxu0 %v1412
    %2289 = vmatprep.subr.bf16.mxu0 %v1405
    %2290 = vmatpush1.bf16.msra.mxu0 %v1404
    %2291 = vmatprep.subr.bf16.mxu0 %v1525
    %2292 = vmatpush2.bf16.msra.mxu0 %v1524
    %2293 = vmatprep.subr.bf16.mxu0 %v1517
    %2294 = vmatpush2.bf16.msra.mxu0 %v1516
    %2295 = vmatprep.subr.bf16.mxu0 %v1509
    %2296 = vmatpush2.bf16.msra.mxu0 %v1508
    %2297 = vmatprep.subr.bf16.mxu0 %v1501
    %2298 = vmatpush2.bf16.msra.mxu0 %v1500
    %2299 = vmatprep.subr.bf16.mxu0 %v1493
    %2300 = vmatpush2.bf16.msra.mxu0 %v1492
    %2301 = vmatprep.subr.bf16.mxu0 %v1485
    %2302 = vmatpush2.bf16.msra.mxu0 %v1484
    %2303 = vmatprep.subr.bf16.mxu0 %v1477
    %2304 = vmatpush2.bf16.msra.mxu0 %v1476
    %2305 = vmatprep.subr.bf16.mxu0 %v1469
    %2306 = vmatpush2.bf16.msra.mxu0 %v1468
    %2307 = vmatprep.mubr.bf16.mxu0 %v2274
    %2308 = vmatmul.mubr.bf16.gmra.mxu0 %v2273
    %v2309 = vpop.f32.mrf.mxu0
    %v2310 = vadd.f32 0.0, %v2309
    %v2311 = vpop.f32.mrf.mxu0
    %v2312 = vadd.f32 0.0, %v2311
    %v2313 = vpop.f32.mrf.mxu0
    %v2314 = vadd.f32 0.0, %v2313
    %v2315 = vpop.f32.mrf.mxu0
    %v2316 = vadd.f32 0.0, %v2315
    %2317 = vdwg.mxu0
    %2318 = vmatprep.subr.bf16.mxu0 %v1463
    %2319 = vmatpush1.bf16.msra.mxu0 %v1462
    %2320 = vmatprep.subr.bf16.mxu0 %v1455
    %2321 = vmatpush1.bf16.msra.mxu0 %v1454
    %2322 = vmatprep.subr.bf16.mxu0 %v1447
    %2323 = vmatpush1.bf16.msra.mxu0 %v1446
    %2324 = vmatprep.subr.bf16.mxu0 %v1439
    %2325 = vmatpush1.bf16.msra.mxu0 %v1438
    %2326 = vmatprep.subr.bf16.mxu0 %v1431
    %2327 = vmatpush1.bf16.msra.mxu0 %v1430
    %2328 = vmatprep.subr.bf16.mxu0 %v1423
    %2329 = vmatpush1.bf16.msra.mxu0 %v1422
    %2330 = vmatprep.subr.bf16.mxu0 %v1415
    %2331 = vmatpush1.bf16.msra.mxu0 %v1414
    %2332 = vmatprep.subr.bf16.mxu0 %v1407
    %2333 = vmatpush1.bf16.msra.mxu0 %v1406
    %2334 = vmatprep.subr.bf16.mxu0 %v1527
    %2335 = vmatpush2.bf16.msra.mxu0 %v1526
    %2336 = vmatprep.subr.bf16.mxu0 %v1519
    %2337 = vmatpush2.bf16.msra.mxu0 %v1518
    %2338 = vmatprep.subr.bf16.mxu0 %v1511
    %2339 = vmatpush2.bf16.msra.mxu0 %v1510
    %2340 = vmatprep.subr.bf16.mxu0 %v1503
    %2341 = vmatpush2.bf16.msra.mxu0 %v1502
    %2342 = vmatprep.subr.bf16.mxu0 %v1495
    %2343 = vmatpush2.bf16.msra.mxu0 %v1494
    %2344 = vmatprep.subr.bf16.mxu0 %v1487
    %2345 = vmatpush2.bf16.msra.mxu0 %v1486
    %2346 = vmatprep.subr.bf16.mxu0 %v1479
    %2347 = vmatpush2.bf16.msra.mxu0 %v1478
    %2348 = vmatprep.subr.bf16.mxu0 %v1471
    %2349 = vmatpush2.bf16.msra.mxu0 %v1470
    %2350 = vmatprep.mubr.bf16.mxu0 %v2274
    %2351 = vmatmul.mubr.bf16.gmra.mxu0 %v2273
    %v2352 = vpop.f32.mrf.mxu0
    %v2353 = vadd.f32 0.0, %v2352
    %v2354 = vpop.f32.mrf.mxu0
    %v2355 = vadd.f32 0.0, %v2354
    %v2356 = vpop.f32.mrf.mxu0
    %v2357 = vadd.f32 0.0, %v2356
    %v2358 = vpop.f32.mrf.mxu0
    %v2359 = vadd.f32 0.0, %v2358
    %2360 = vdwg.mxu0
    %2361 = vmatprep.subr.bf16.mxu0 %v1465
    %2362 = vmatpush1.bf16.msra.mxu0 %v1464
    %2363 = vmatprep.subr.bf16.mxu0 %v1457
    %2364 = vmatpush1.bf16.msra.mxu0 %v1456
    %2365 = vmatprep.subr.bf16.mxu0 %v1449
    %2366 = vmatpush1.bf16.msra.mxu0 %v1448
    %2367 = vmatprep.subr.bf16.mxu0 %v1441
    %2368 = vmatpush1.bf16.msra.mxu0 %v1440
    %2369 = vmatprep.subr.bf16.mxu0 %v1433
    %2370 = vmatpush1.bf16.msra.mxu0 %v1432
    %2371 = vmatprep.subr.bf16.mxu0 %v1425
    %2372 = vmatpush1.bf16.msra.mxu0 %v1424
    %2373 = vmatprep.subr.bf16.mxu0 %v1417
    %2374 = vmatpush1.bf16.msra.mxu0 %v1416
    %2375 = vmatprep.subr.bf16.mxu0 %v1409
    %2376 = vmatpush1.bf16.msra.mxu0 %v1408
    %2377 = vmatprep.subr.bf16.mxu0 %v1529
    %2378 = vmatpush2.bf16.msra.mxu0 %v1528
    %2379 = vmatprep.subr.bf16.mxu0 %v1521
    %2380 = vmatpush2.bf16.msra.mxu0 %v1520
    %2381 = vmatprep.subr.bf16.mxu0 %v1513
    %2382 = vmatpush2.bf16.msra.mxu0 %v1512
    %2383 = vmatprep.subr.bf16.mxu0 %v1505
    %2384 = vmatpush2.bf16.msra.mxu0 %v1504
    %2385 = vmatprep.subr.bf16.mxu0 %v1497
    %2386 = vmatpush2.bf16.msra.mxu0 %v1496
    %2387 = vmatprep.subr.bf16.mxu0 %v1489
    %2388 = vmatpush2.bf16.msra.mxu0 %v1488
    %2389 = vmatprep.subr.bf16.mxu0 %v1481
    %2390 = vmatpush2.bf16.msra.mxu0 %v1480
    %2391 = vmatprep.subr.bf16.mxu0 %v1473
    %2392 = vmatpush2.bf16.msra.mxu0 %v1472
    %2393 = vmatprep.mubr.bf16.mxu0 %v2274
    %2394 = vmatmul.mubr.bf16.gmra.mxu0 %v2273
    %v2395 = vpop.f32.mrf.mxu0
    %v2396 = vadd.f32 0.0, %v2395
    %v2397 = vpop.f32.mrf.mxu0
    %v2398 = vadd.f32 0.0, %v2397
    %v2399 = vpop.f32.mrf.mxu0
    %v2400 = vadd.f32 0.0, %v2399
    %v2401 = vpop.f32.mrf.mxu0
    %v2402 = vadd.f32 0.0, %v2401
    %2403 = vdwg.mxu0
    %2404 = vmatprep.subr.bf16.mxu0 %v1467
    %2405 = vmatpush1.bf16.msra.mxu0 %v1466
    %2406 = vmatprep.subr.bf16.mxu0 %v1459
    %2407 = vmatpush1.bf16.msra.mxu0 %v1458
    %2408 = vmatprep.subr.bf16.mxu0 %v1451
    %2409 = vmatpush1.bf16.msra.mxu0 %v1450
    %2410 = vmatprep.subr.bf16.mxu0 %v1443
    %2411 = vmatpush1.bf16.msra.mxu0 %v1442
    %2412 = vmatprep.subr.bf16.mxu0 %v1435
    %2413 = vmatpush1.bf16.msra.mxu0 %v1434
    %2414 = vmatprep.subr.bf16.mxu0 %v1427
    %2415 = vmatpush1.bf16.msra.mxu0 %v1426
    %2416 = vmatprep.subr.bf16.mxu0 %v1419
    %2417 = vmatpush1.bf16.msra.mxu0 %v1418
    %2418 = vmatprep.subr.bf16.mxu0 %v1411
    %2419 = vmatpush1.bf16.msra.mxu0 %v1410
    %2420 = vmatprep.subr.bf16.mxu0 %v1531
    %2421 = vmatpush2.bf16.msra.mxu0 %v1530
    %2422 = vmatprep.subr.bf16.mxu0 %v1523
    %2423 = vmatpush2.bf16.msra.mxu0 %v1522
    %2424 = vmatprep.subr.bf16.mxu0 %v1515
    %2425 = vmatpush2.bf16.msra.mxu0 %v1514
    %2426 = vmatprep.subr.bf16.mxu0 %v1507
    %2427 = vmatpush2.bf16.msra.mxu0 %v1506
    %2428 = vmatprep.subr.bf16.mxu0 %v1499
    %2429 = vmatpush2.bf16.msra.mxu0 %v1498
    %2430 = vmatprep.subr.bf16.mxu0 %v1491
    %2431 = vmatpush2.bf16.msra.mxu0 %v1490
    %2432 = vmatprep.subr.bf16.mxu0 %v1483
    %2433 = vmatpush2.bf16.msra.mxu0 %v1482
    %2434 = vmatprep.subr.bf16.mxu0 %v1475
    %2435 = vmatpush2.bf16.msra.mxu0 %v1474
    %2436 = vmatprep.mubr.bf16.mxu0 %v2274
    %2437 = vmatmul.mubr.bf16.gmra.mxu0 %v2273
    %v2438 = vpop.f32.mrf.mxu0
    %v2439 = vadd.f32 0.0, %v2438
    %v2440 = vpop.f32.mrf.mxu0
    %v2441 = vadd.f32 0.0, %v2440
    %v2442 = vpop.f32.mrf.mxu0
    %v2443 = vadd.f32 0.0, %v2442
    %v2444 = vpop.f32.mrf.mxu0
    %v2445 = vadd.f32 0.0, %v2444
    %2446 = vdwg.mxu0
    %s2447 = smul.u32 6, 4
    %s2448 = smul.addr %s2447, 8
    %s2449 = scalar_lea.vmem [#allocation2], %s2448
    %v2450 = vld [vmem:[%s2449] sm:$0xff]
    %v2451 = vld [vmem:[%s2449 + $0x8] sm:$0xff]
    %v2452 = vld [vmem:[%s2449 + $0x10] sm:$0xff]
    %v2453 = vld [vmem:[%s2449 + $0x18] sm:$0xff]
    %v2454 = vld [vmem:[%s2449 + $0x20] sm:$0xff]
    %v2455 = vld [vmem:[%s2449 + $0x28] sm:$0xff]
    %v2456 = vld [vmem:[%s2449 + $0x30] sm:$0xff]
    %v2457 = vld [vmem:[%s2449 + $0x38] sm:$0xff]
    %v2458 = vadd.f32 %v2450, %v2310
    %v2459 = vadd.f32 %v2451, %v2312
    %v2460 = vadd.f32 %v2452, %v2353
    %v2461 = vadd.f32 %v2453, %v2355
    %v2462 = vadd.f32 %v2454, %v2314
    %v2463 = vadd.f32 %v2455, %v2316
    %v2464 = vadd.f32 %v2456, %v2357
    %v2465 = vadd.f32 %v2457, %v2359
    %v2466 = vadd.f32 %v1855, %v2396
    %v2467 = vadd.f32 %v1859, %v2398
    %v2468 = vadd.f32 %v1863, %v2439
    %v2469 = vadd.f32 %v1867, %v2441
    %v2470 = vadd.f32 %v1855, %v2400
    %v2471 = vadd.f32 %v1859, %v2402
    %v2472 = vadd.f32 %v1863, %v2443
    %v2473 = vadd.f32 %v1867, %v2445
    %v2474 = vxor.u32 %v2458, 2147483648
    %v2475 = vxor.u32 %v2459, 2147483648
    %v2476 = vxor.u32 %v2460, 2147483648
    %v2477 = vxor.u32 %v2462, 2147483648
    %v2478 = vxor.u32 %v2463, 2147483648
    %v2479 = vxor.u32 %v2464, 2147483648
    %v2480 = vmul.f32 %v2474, 1.442695
    %v2481 = vpow.pop %v2480
    %v2482 = vmul.f32 %v2475, 1.442695
    %v2483 = vpow.pop %v2482
    %v2484 = vmul.f32 %v2476, 1.442695
    %v2485 = vpow.pop %v2484
    %v2486 = vmul.f32 %v2477, 1.442695
    %v2487 = vpow.pop %v2486
    %v2488 = vmul.f32 %v2478, 1.442695
    %v2489 = vpow.pop %v2488
    %v2490 = vmul.f32 %v2479, 1.442695
    %v2491 = vpow.pop %v2490
    %v2492 = vadd.f32 %v2481, 1.0
    %v2493 = vadd.f32 %v2483, 1.0
    %v2494 = vadd.f32 %v2485, 1.0
    %v2495 = vadd.f32 %v2487, 1.0
    %v2496 = vadd.f32 %v2489, 1.0
    %v2497 = vadd.f32 %v2491, 1.0
    %v2498 = vrcp.pop %v2492
    %v2499 = vmul.f32 1.0, %v2498
    %v2500 = vrcp.pop %v2493
    %v2501 = vmul.f32 1.0, %v2500
    %v2502 = vrcp.pop %v2494
    %v2503 = vmul.f32 1.0, %v2502
    %v2504 = vrcp.pop %v2495
    %v2505 = vmul.f32 1.0, %v2504
    %v2506 = vrcp.pop %v2496
    %v2507 = vmul.f32 1.0, %v2506
    %v2508 = vrcp.pop %v2497
    %v2509 = vmul.f32 1.0, %v2508
    %v2510 = vtanh.pop %v2461
    %v2511 = vtanh.pop %v2465
    %v2512 = vmul.f32 %v2501, %v2219
    %v2513 = vmul.f32 %v2507, %v2220
    %v2514 = vmul.f32 %v2499, %v2510
    %v2515 = vmul.f32 %v2505, %v2511
    %v2516 = vadd.f32 %v2512, %v2514
    %v2517 = vadd.f32 %v2513, %v2515
    %v2518 = vtanh.pop %v2516
    %v2519 = vtanh.pop %v2517
    %v2520 = vmul.f32 %v2503, %v2518
    %v2521 = vmul.f32 %v2509, %v2519
    %v2522 = vxor.u32 %v2466, 2147483648
    %v2523 = vxor.u32 %v2467, 2147483648
    %v2524 = vxor.u32 %v2468, 2147483648
    %v2525 = vxor.u32 %v2470, 2147483648
    %v2526 = vxor.u32 %v2471, 2147483648
    %v2527 = vxor.u32 %v2472, 2147483648
    %v2528 = vmul.f32 %v2522, 1.442695
    %v2529 = vpow.pop %v2528
    %v2530 = vmul.f32 %v2523, 1.442695
    %v2531 = vpow.pop %v2530
    %v2532 = vmul.f32 %v2524, 1.442695
    %v2533 = vpow.pop %v2532
    %v2534 = vmul.f32 %v2525, 1.442695
    %v2535 = vpow.pop %v2534
    %v2536 = vmul.f32 %v2526, 1.442695
    %v2537 = vpow.pop %v2536
    %v2538 = vmul.f32 %v2527, 1.442695
    %v2539 = vpow.pop %v2538
    %v2540 = vadd.f32 %v2529, 1.0
    %v2541 = vadd.f32 %v2531, 1.0
    %v2542 = vadd.f32 %v2533, 1.0
    %v2543 = vadd.f32 %v2535, 1.0
    %v2544 = vadd.f32 %v2537, 1.0
    %v2545 = vadd.f32 %v2539, 1.0
    %v2546 = vrcp.pop %v2540
    %v2547 = vmul.f32 1.0, %v2546
    %v2548 = vrcp.pop %v2541
    %v2549 = vmul.f32 1.0, %v2548
    %v2550 = vrcp.pop %v2542
    %v2551 = vmul.f32 1.0, %v2550
    %v2552 = vrcp.pop %v2543
    %v2553 = vmul.f32 1.0, %v2552
    %v2554 = vrcp.pop %v2544
    %v2555 = vmul.f32 1.0, %v2554
    %v2556 = vrcp.pop %v2545
    %v2557 = vmul.f32 1.0, %v2556
    %v2558 = vtanh.pop %v2469
    %v2559 = vtanh.pop %v2473
    %v2560 = vmul.f32 %v2549, %v2267
    %v2561 = vmul.f32 %v2555, %v2268
    %v2562 = vmul.f32 %v2547, %v2558
    %v2563 = vmul.f32 %v2553, %v2559
    %v2564 = vadd.f32 %v2560, %v2562
    %v2565 = vadd.f32 %v2561, %v2563
    %v2566 = vtanh.pop %v2564
    %v2567 = vtanh.pop %v2565
    %v2568 = vmul.f32 %v2551, %v2566
    %v2569 = vmul.f32 %v2557, %v2567
    %v2570 = vpack.c.bf16 %v2521, %v2520
    %v2571 = vpack.c.bf16 %v2569, %v2568
    %2572 = vmatprep.subr.bf16.mxu0 %v1461
    %2573 = vmatpush1.bf16.msra.mxu0 %v1460
    %2574 = vmatprep.subr.bf16.mxu0 %v1453
    %2575 = vmatpush1.bf16.msra.mxu0 %v1452
    %2576 = vmatprep.subr.bf16.mxu0 %v1445
    %2577 = vmatpush1.bf16.msra.mxu0 %v1444
    %2578 = vmatprep.subr.bf16.mxu0 %v1437
    %2579 = vmatpush1.bf16.msra.mxu0 %v1436
    %2580 = vmatprep.subr.bf16.mxu0 %v1429
    %2581 = vmatpush1.bf16.msra.mxu0 %v1428
    %2582 = vmatprep.subr.bf16.mxu0 %v1421
    %2583 = vmatpush1.bf16.msra.mxu0 %v1420
    %2584 = vmatprep.subr.bf16.mxu0 %v1413
    %2585 = vmatpush1.bf16.msra.mxu0 %v1412
    %2586 = vmatprep.subr.bf16.mxu0 %v1405
    %2587 = vmatpush1.bf16.msra.mxu0 %v1404
    %2588 = vmatprep.subr.bf16.mxu0 %v1525
    %2589 = vmatpush2.bf16.msra.mxu0 %v1524
    %2590 = vmatprep.subr.bf16.mxu0 %v1517
    %2591 = vmatpush2.bf16.msra.mxu0 %v1516
    %2592 = vmatprep.subr.bf16.mxu0 %v1509
    %2593 = vmatpush2.bf16.msra.mxu0 %v1508
    %2594 = vmatprep.subr.bf16.mxu0 %v1501
    %2595 = vmatpush2.bf16.msra.mxu0 %v1500
    %2596 = vmatprep.subr.bf16.mxu0 %v1493
    %2597 = vmatpush2.bf16.msra.mxu0 %v1492
    %2598 = vmatprep.subr.bf16.mxu0 %v1485
    %2599 = vmatpush2.bf16.msra.mxu0 %v1484
    %2600 = vmatprep.subr.bf16.mxu0 %v1477
    %2601 = vmatpush2.bf16.msra.mxu0 %v1476
    %2602 = vmatprep.subr.bf16.mxu0 %v1469
    %2603 = vmatpush2.bf16.msra.mxu0 %v1468
    %2604 = vmatprep.mubr.bf16.mxu0 %v2571
    %2605 = vmatmul.mubr.bf16.gmra.mxu0 %v2570
    %v2606 = vpop.f32.mrf.mxu0
    %v2607 = vadd.f32 0.0, %v2606
    %v2608 = vpop.f32.mrf.mxu0
    %v2609 = vadd.f32 0.0, %v2608
    %v2610 = vpop.f32.mrf.mxu0
    %v2611 = vadd.f32 0.0, %v2610
    %v2612 = vpop.f32.mrf.mxu0
    %v2613 = vadd.f32 0.0, %v2612
    %2614 = vdwg.mxu0
    %2615 = vmatprep.subr.bf16.mxu0 %v1463
    %2616 = vmatpush1.bf16.msra.mxu0 %v1462
    %2617 = vmatprep.subr.bf16.mxu0 %v1455
    %2618 = vmatpush1.bf16.msra.mxu0 %v1454
    %2619 = vmatprep.subr.bf16.mxu0 %v1447
    %2620 = vmatpush1.bf16.msra.mxu0 %v1446
    %2621 = vmatprep.subr.bf16.mxu0 %v1439
    %2622 = vmatpush1.bf16.msra.mxu0 %v1438
    %2623 = vmatprep.subr.bf16.mxu0 %v1431
    %2624 = vmatpush1.bf16.msra.mxu0 %v1430
    %2625 = vmatprep.subr.bf16.mxu0 %v1423
    %2626 = vmatpush1.bf16.msra.mxu0 %v1422
    %2627 = vmatprep.subr.bf16.mxu0 %v1415
    %2628 = vmatpush1.bf16.msra.mxu0 %v1414
    %2629 = vmatprep.subr.bf16.mxu0 %v1407
    %2630 = vmatpush1.bf16.msra.mxu0 %v1406
    %2631 = vmatprep.subr.bf16.mxu0 %v1527
    %2632 = vmatpush2.bf16.msra.mxu0 %v1526
    %2633 = vmatprep.subr.bf16.mxu0 %v1519
    %2634 = vmatpush2.bf16.msra.mxu0 %v1518
    %2635 = vmatprep.subr.bf16.mxu0 %v1511
    %2636 = vmatpush2.bf16.msra.mxu0 %v1510
    %2637 = vmatprep.subr.bf16.mxu0 %v1503
    %2638 = vmatpush2.bf16.msra.mxu0 %v1502
    %2639 = vmatprep.subr.bf16.mxu0 %v1495
    %2640 = vmatpush2.bf16.msra.mxu0 %v1494
    %2641 = vmatprep.subr.bf16.mxu0 %v1487
    %2642 = vmatpush2.bf16.msra.mxu0 %v1486
    %2643 = vmatprep.subr.bf16.mxu0 %v1479
    %2644 = vmatpush2.bf16.msra.mxu0 %v1478
    %2645 = vmatprep.subr.bf16.mxu0 %v1471
    %2646 = vmatpush2.bf16.msra.mxu0 %v1470
    %2647 = vmatprep.mubr.bf16.mxu0 %v2571
    %2648 = vmatmul.mubr.bf16.gmra.mxu0 %v2570
    %v2649 = vpop.f32.mrf.mxu0
    %v2650 = vadd.f32 0.0, %v2649
    %v2651 = vpop.f32.mrf.mxu0
    %v2652 = vadd.f32 0.0, %v2651
    %v2653 = vpop.f32.mrf.mxu0
    %v2654 = vadd.f32 0.0, %v2653
    %v2655 = vpop.f32.mrf.mxu0
    %v2656 = vadd.f32 0.0, %v2655
    %2657 = vdwg.mxu0
    %2658 = vmatprep.subr.bf16.mxu0 %v1465
    %2659 = vmatpush1.bf16.msra.mxu0 %v1464
    %2660 = vmatprep.subr.bf16.mxu0 %v1457
    %2661 = vmatpush1.bf16.msra.mxu0 %v1456
    %2662 = vmatprep.subr.bf16.mxu0 %v1449
    %2663 = vmatpush1.bf16.msra.mxu0 %v1448
    %2664 = vmatprep.subr.bf16.mxu0 %v1441
    %2665 = vmatpush1.bf16.msra.mxu0 %v1440
    %2666 = vmatprep.subr.bf16.mxu0 %v1433
    %2667 = vmatpush1.bf16.msra.mxu0 %v1432
    %2668 = vmatprep.subr.bf16.mxu0 %v1425
    %2669 = vmatpush1.bf16.msra.mxu0 %v1424
    %2670 = vmatprep.subr.bf16.mxu0 %v1417
    %2671 = vmatpush1.bf16.msra.mxu0 %v1416
    %2672 = vmatprep.subr.bf16.mxu0 %v1409
    %2673 = vmatpush1.bf16.msra.mxu0 %v1408
    %2674 = vmatprep.subr.bf16.mxu0 %v1529
    %2675 = vmatpush2.bf16.msra.mxu0 %v1528
    %2676 = vmatprep.subr.bf16.mxu0 %v1521
    %2677 = vmatpush2.bf16.msra.mxu0 %v1520
    %2678 = vmatprep.subr.bf16.mxu0 %v1513
    %2679 = vmatpush2.bf16.msra.mxu0 %v1512
    %2680 = vmatprep.subr.bf16.mxu0 %v1505
    %2681 = vmatpush2.bf16.msra.mxu0 %v1504
    %2682 = vmatprep.subr.bf16.mxu0 %v1497
    %2683 = vmatpush2.bf16.msra.mxu0 %v1496
    %2684 = vmatprep.subr.bf16.mxu0 %v1489
    %2685 = vmatpush2.bf16.msra.mxu0 %v1488
    %2686 = vmatprep.subr.bf16.mxu0 %v1481
    %2687 = vmatpush2.bf16.msra.mxu0 %v1480
    %2688 = vmatprep.subr.bf16.mxu0 %v1473
    %2689 = vmatpush2.bf16.msra.mxu0 %v1472
    %2690 = vmatprep.mubr.bf16.mxu0 %v2571
    %2691 = vmatmul.mubr.bf16.gmra.mxu0 %v2570
    %v2692 = vpop.f32.mrf.mxu0
    %v2693 = vadd.f32 0.0, %v2692
    %v2694 = vpop.f32.mrf.mxu0
    %v2695 = vadd.f32 0.0, %v2694
    %v2696 = vpop.f32.mrf.mxu0
    %v2697 = vadd.f32 0.0, %v2696
    %v2698 = vpop.f32.mrf.mxu0
    %v2699 = vadd.f32 0.0, %v2698
    %2700 = vdwg.mxu0
    %2701 = vmatprep.subr.bf16.mxu0 %v1467
    %2702 = vmatpush1.bf16.msra.mxu0 %v1466
    %2703 = vmatprep.subr.bf16.mxu0 %v1459
    %2704 = vmatpush1.bf16.msra.mxu0 %v1458
    %2705 = vmatprep.subr.bf16.mxu0 %v1451
    %2706 = vmatpush1.bf16.msra.mxu0 %v1450
    %2707 = vmatprep.subr.bf16.mxu0 %v1443
    %2708 = vmatpush1.bf16.msra.mxu0 %v1442
    %2709 = vmatprep.subr.bf16.mxu0 %v1435
    %2710 = vmatpush1.bf16.msra.mxu0 %v1434
    %2711 = vmatprep.subr.bf16.mxu0 %v1427
    %2712 = vmatpush1.bf16.msra.mxu0 %v1426
    %2713 = vmatprep.subr.bf16.mxu0 %v1419
    %2714 = vmatpush1.bf16.msra.mxu0 %v1418
    %2715 = vmatprep.subr.bf16.mxu0 %v1411
    %2716 = vmatpush1.bf16.msra.mxu0 %v1410
    %2717 = vmatprep.subr.bf16.mxu0 %v1531
    %2718 = vmatpush2.bf16.msra.mxu0 %v1530
    %2719 = vmatprep.subr.bf16.mxu0 %v1523
    %2720 = vmatpush2.bf16.msra.mxu0 %v1522
    %2721 = vmatprep.subr.bf16.mxu0 %v1515
    %2722 = vmatpush2.bf16.msra.mxu0 %v1514
    %2723 = vmatprep.subr.bf16.mxu0 %v1507
    %2724 = vmatpush2.bf16.msra.mxu0 %v1506
    %2725 = vmatprep.subr.bf16.mxu0 %v1499
    %2726 = vmatpush2.bf16.msra.mxu0 %v1498
    %2727 = vmatprep.subr.bf16.mxu0 %v1491
    %2728 = vmatpush2.bf16.msra.mxu0 %v1490
    %2729 = vmatprep.subr.bf16.mxu0 %v1483
    %2730 = vmatpush2.bf16.msra.mxu0 %v1482
    %2731 = vmatprep.subr.bf16.mxu0 %v1475
    %2732 = vmatpush2.bf16.msra.mxu0 %v1474
    %2733 = vmatprep.mubr.bf16.mxu0 %v2571
    %2734 = vmatmul.mubr.bf16.gmra.mxu0 %v2570
    %v2735 = vpop.f32.mrf.mxu0
    %v2736 = vadd.f32 0.0, %v2735
    %v2737 = vpop.f32.mrf.mxu0
    %v2738 = vadd.f32 0.0, %v2737
    %v2739 = vpop.f32.mrf.mxu0
    %v2740 = vadd.f32 0.0, %v2739
    %v2741 = vpop.f32.mrf.mxu0
    %v2742 = vadd.f32 0.0, %v2741
    %2743 = vdwg.mxu0
    %s2744 = smul.u32 8, 4
    %s2745 = smul.addr %s2744, 8
    %s2746 = scalar_lea.vmem [#allocation2], %s2745
    %v2747 = vld [vmem:[%s2746] sm:$0xff]
    %v2748 = vld [vmem:[%s2746 + $0x8] sm:$0xff]
    %v2749 = vld [vmem:[%s2746 + $0x10] sm:$0xff]
    %v2750 = vld [vmem:[%s2746 + $0x18] sm:$0xff]
    %v2751 = vld [vmem:[%s2746 + $0x20] sm:$0xff]
    %v2752 = vld [vmem:[%s2746 + $0x28] sm:$0xff]
    %v2753 = vld [vmem:[%s2746 + $0x30] sm:$0xff]
    %v2754 = vld [vmem:[%s2746 + $0x38] sm:$0xff]
    %v2755 = vadd.f32 %v2747, %v2607
    %v2756 = vadd.f32 %v2748, %v2609
    %v2757 = vadd.f32 %v2749, %v2650
    %v2758 = vadd.f32 %v2750, %v2652
    %v2759 = vadd.f32 %v2751, %v2611
    %v2760 = vadd.f32 %v2752, %v2613
    %v2761 = vadd.f32 %v2753, %v2654
    %v2762 = vadd.f32 %v2754, %v2656
    %v2763 = vadd.f32 %v1855, %v2693
    %v2764 = vadd.f32 %v1859, %v2695
    %v2765 = vadd.f32 %v1863, %v2736
    %v2766 = vadd.f32 %v1867, %v2738
    %v2767 = vadd.f32 %v1855, %v2697
    %v2768 = vadd.f32 %v1859, %v2699
    %v2769 = vadd.f32 %v1863, %v2740
    %v2770 = vadd.f32 %v1867, %v2742
    %v2771 = vxor.u32 %v2755, 2147483648
    %v2772 = vxor.u32 %v2756, 2147483648
    %v2773 = vxor.u32 %v2757, 2147483648
    %v2774 = vxor.u32 %v2759, 2147483648
    %v2775 = vxor.u32 %v2760, 2147483648
    %v2776 = vxor.u32 %v2761, 2147483648
    %v2777 = vmul.f32 %v2771, 1.442695
    %v2778 = vpow.pop %v2777
    %v2779 = vmul.f32 %v2772, 1.442695
    %v2780 = vpow.pop %v2779
    %v2781 = vmul.f32 %v2773, 1.442695
    %v2782 = vpow.pop %v2781
    %v2783 = vmul.f32 %v2774, 1.442695
    %v2784 = vpow.pop %v2783
    %v2785 = vmul.f32 %v2775, 1.442695
    %v2786 = vpow.pop %v2785
    %v2787 = vmul.f32 %v2776, 1.442695
    %v2788 = vpow.pop %v2787
    %v2789 = vadd.f32 %v2778, 1.0
    %v2790 = vadd.f32 %v2780, 1.0
    %v2791 = vadd.f32 %v2782, 1.0
    %v2792 = vadd.f32 %v2784, 1.0
    %v2793 = vadd.f32 %v2786, 1.0
    %v2794 = vadd.f32 %v2788, 1.0
    %v2795 = vrcp.pop %v2789
    %v2796 = vmul.f32 1.0, %v2795
    %v2797 = vrcp.pop %v2790
    %v2798 = vmul.f32 1.0, %v2797
    %v2799 = vrcp.pop %v2791
    %v2800 = vmul.f32 1.0, %v2799
    %v2801 = vrcp.pop %v2792
    %v2802 = vmul.f32 1.0, %v2801
    %v2803 = vrcp.pop %v2793
    %v2804 = vmul.f32 1.0, %v2803
    %v2805 = vrcp.pop %v2794
    %v2806 = vmul.f32 1.0, %v2805
    %v2807 = vtanh.pop %v2758
    %v2808 = vtanh.pop %v2762
    %v2809 = vmul.f32 %v2798, %v2516
    %v2810 = vmul.f32 %v2804, %v2517
    %v2811 = vmul.f32 %v2796, %v2807
    %v2812 = vmul.f32 %v2802, %v2808
    %v2813 = vadd.f32 %v2809, %v2811
    %v2814 = vadd.f32 %v2810, %v2812
    %v2815 = vtanh.pop %v2813
    %v2816 = vtanh.pop %v2814
    %v2817 = vmul.f32 %v2800, %v2815
    %v2818 = vmul.f32 %v2806, %v2816
    %v2819 = vxor.u32 %v2763, 2147483648
    %v2820 = vxor.u32 %v2764, 2147483648
    %v2821 = vxor.u32 %v2765, 2147483648
    %v2822 = vxor.u32 %v2767, 2147483648
    %v2823 = vxor.u32 %v2768, 2147483648
    %v2824 = vxor.u32 %v2769, 2147483648
    %v2825 = vmul.f32 %v2819, 1.442695
    %v2826 = vpow.pop %v2825
    %v2827 = vmul.f32 %v2820, 1.442695
    %v2828 = vpow.pop %v2827
    %v2829 = vmul.f32 %v2821, 1.442695
    %v2830 = vpow.pop %v2829
    %v2831 = vmul.f32 %v2822, 1.442695
    %v2832 = vpow.pop %v2831
    %v2833 = vmul.f32 %v2823, 1.442695
    %v2834 = vpow.pop %v2833
    %v2835 = vmul.f32 %v2824, 1.442695
    %v2836 = vpow.pop %v2835
    %v2837 = vadd.f32 %v2826, 1.0
    %v2838 = vadd.f32 %v2828, 1.0
    %v2839 = vadd.f32 %v2830, 1.0
    %v2840 = vadd.f32 %v2832, 1.0
    %v2841 = vadd.f32 %v2834, 1.0
    %v2842 = vadd.f32 %v2836, 1.0
    %v2843 = vrcp.pop %v2837
    %v2844 = vmul.f32 1.0, %v2843
    %v2845 = vrcp.pop %v2838
    %v2846 = vmul.f32 1.0, %v2845
    %v2847 = vrcp.pop %v2839
    %v2848 = vmul.f32 1.0, %v2847
    %v2849 = vrcp.pop %v2840
    %v2850 = vmul.f32 1.0, %v2849
    %v2851 = vrcp.pop %v2841
    %v2852 = vmul.f32 1.0, %v2851
    %v2853 = vrcp.pop %v2842
    %v2854 = vmul.f32 1.0, %v2853
    %v2855 = vtanh.pop %v2766
    %v2856 = vtanh.pop %v2770
    %v2857 = vmul.f32 %v2846, %v2564
    %v2858 = vmul.f32 %v2852, %v2565
    %v2859 = vmul.f32 %v2844, %v2855
    %v2860 = vmul.f32 %v2850, %v2856
    %v2861 = vadd.f32 %v2857, %v2859
    %v2862 = vadd.f32 %v2858, %v2860
    %v2863 = vtanh.pop %v2861
    %v2864 = vtanh.pop %v2862
    %v2865 = vmul.f32 %v2848, %v2863
    %v2866 = vmul.f32 %v2854, %v2864
    %v2867 = vpack.c.bf16 %v2818, %v2817
    %v2868 = vpack.c.bf16 %v2866, %v2865
    %2869 = vmatprep.subr.bf16.mxu0 %v1461
    %2870 = vmatpush1.bf16.msra.mxu0 %v1460
    %2871 = vmatprep.subr.bf16.mxu0 %v1453
    %2872 = vmatpush1.bf16.msra.mxu0 %v1452
    %2873 = vmatprep.subr.bf16.mxu0 %v1445
    %2874 = vmatpush1.bf16.msra.mxu0 %v1444
    %2875 = vmatprep.subr.bf16.mxu0 %v1437
    %2876 = vmatpush1.bf16.msra.mxu0 %v1436
    %2877 = vmatprep.subr.bf16.mxu0 %v1429
    %2878 = vmatpush1.bf16.msra.mxu0 %v1428
    %2879 = vmatprep.subr.bf16.mxu0 %v1421
    %2880 = vmatpush1.bf16.msra.mxu0 %v1420
    %2881 = vmatprep.subr.bf16.mxu0 %v1413
    %2882 = vmatpush1.bf16.msra.mxu0 %v1412
    %2883 = vmatprep.subr.bf16.mxu0 %v1405
    %2884 = vmatpush1.bf16.msra.mxu0 %v1404
    %2885 = vmatprep.subr.bf16.mxu0 %v1525
    %2886 = vmatpush2.bf16.msra.mxu0 %v1524
    %2887 = vmatprep.subr.bf16.mxu0 %v1517
    %2888 = vmatpush2.bf16.msra.mxu0 %v1516
    %2889 = vmatprep.subr.bf16.mxu0 %v1509
    %2890 = vmatpush2.bf16.msra.mxu0 %v1508
    %2891 = vmatprep.subr.bf16.mxu0 %v1501
    %2892 = vmatpush2.bf16.msra.mxu0 %v1500
    %2893 = vmatprep.subr.bf16.mxu0 %v1493
    %2894 = vmatpush2.bf16.msra.mxu0 %v1492
    %2895 = vmatprep.subr.bf16.mxu0 %v1485
    %2896 = vmatpush2.bf16.msra.mxu0 %v1484
    %2897 = vmatprep.subr.bf16.mxu0 %v1477
    %2898 = vmatpush2.bf16.msra.mxu0 %v1476
    %2899 = vmatprep.subr.bf16.mxu0 %v1469
    %2900 = vmatpush2.bf16.msra.mxu0 %v1468
    %2901 = vmatprep.mubr.bf16.mxu0 %v2868
    %2902 = vmatmul.mubr.bf16.gmra.mxu0 %v2867
    %v2903 = vpop.f32.mrf.mxu0
    %v2904 = vadd.f32 0.0, %v2903
    %v2905 = vpop.f32.mrf.mxu0
    %v2906 = vadd.f32 0.0, %v2905
    %v2907 = vpop.f32.mrf.mxu0
    %v2908 = vadd.f32 0.0, %v2907
    %v2909 = vpop.f32.mrf.mxu0
    %v2910 = vadd.f32 0.0, %v2909
    %2911 = vdwg.mxu0
    %2912 = vmatprep.subr.bf16.mxu0 %v1463
    %2913 = vmatpush1.bf16.msra.mxu0 %v1462
    %2914 = vmatprep.subr.bf16.mxu0 %v1455
    %2915 = vmatpush1.bf16.msra.mxu0 %v1454
    %2916 = vmatprep.subr.bf16.mxu0 %v1447
    %2917 = vmatpush1.bf16.msra.mxu0 %v1446
    %2918 = vmatprep.subr.bf16.mxu0 %v1439
    %2919 = vmatpush1.bf16.msra.mxu0 %v1438
    %2920 = vmatprep.subr.bf16.mxu0 %v1431
    %2921 = vmatpush1.bf16.msra.mxu0 %v1430
    %2922 = vmatprep.subr.bf16.mxu0 %v1423
    %2923 = vmatpush1.bf16.msra.mxu0 %v1422
    %2924 = vmatprep.subr.bf16.mxu0 %v1415
    %2925 = vmatpush1.bf16.msra.mxu0 %v1414
    %2926 = vmatprep.subr.bf16.mxu0 %v1407
    %2927 = vmatpush1.bf16.msra.mxu0 %v1406
    %2928 = vmatprep.subr.bf16.mxu0 %v1527
    %2929 = vmatpush2.bf16.msra.mxu0 %v1526
    %2930 = vmatprep.subr.bf16.mxu0 %v1519
    %2931 = vmatpush2.bf16.msra.mxu0 %v1518
    %2932 = vmatprep.subr.bf16.mxu0 %v1511
    %2933 = vmatpush2.bf16.msra.mxu0 %v1510
    %2934 = vmatprep.subr.bf16.mxu0 %v1503
    %2935 = vmatpush2.bf16.msra.mxu0 %v1502
    %2936 = vmatprep.subr.bf16.mxu0 %v1495
    %2937 = vmatpush2.bf16.msra.mxu0 %v1494
    %2938 = vmatprep.subr.bf16.mxu0 %v1487
    %2939 = vmatpush2.bf16.msra.mxu0 %v1486
    %2940 = vmatprep.subr.bf16.mxu0 %v1479
    %2941 = vmatpush2.bf16.msra.mxu0 %v1478
    %2942 = vmatprep.subr.bf16.mxu0 %v1471
    %2943 = vmatpush2.bf16.msra.mxu0 %v1470
    %2944 = vmatprep.mubr.bf16.mxu0 %v2868
    %2945 = vmatmul.mubr.bf16.gmra.mxu0 %v2867
    %v2946 = vpop.f32.mrf.mxu0
    %v2947 = vadd.f32 0.0, %v2946
    %v2948 = vpop.f32.mrf.mxu0
    %v2949 = vadd.f32 0.0, %v2948
    %v2950 = vpop.f32.mrf.mxu0
    %v2951 = vadd.f32 0.0, %v2950
    %v2952 = vpop.f32.mrf.mxu0
    %v2953 = vadd.f32 0.0, %v2952
    %2954 = vdwg.mxu0
    %2955 = vmatprep.subr.bf16.mxu0 %v1465
    %2956 = vmatpush1.bf16.msra.mxu0 %v1464
    %2957 = vmatprep.subr.bf16.mxu0 %v1457
    %2958 = vmatpush1.bf16.msra.mxu0 %v1456
    %2959 = vmatprep.subr.bf16.mxu0 %v1449
    %2960 = vmatpush1.bf16.msra.mxu0 %v1448
    %2961 = vmatprep.subr.bf16.mxu0 %v1441
    %2962 = vmatpush1.bf16.msra.mxu0 %v1440
    %2963 = vmatprep.subr.bf16.mxu0 %v1433
    %2964 = vmatpush1.bf16.msra.mxu0 %v1432
    %2965 = vmatprep.subr.bf16.mxu0 %v1425
    %2966 = vmatpush1.bf16.msra.mxu0 %v1424
    %2967 = vmatprep.subr.bf16.mxu0 %v1417
    %2968 = vmatpush1.bf16.msra.mxu0 %v1416
    %2969 = vmatprep.subr.bf16.mxu0 %v1409
    %2970 = vmatpush1.bf16.msra.mxu0 %v1408
    %2971 = vmatprep.subr.bf16.mxu0 %v1529
    %2972 = vmatpush2.bf16.msra.mxu0 %v1528
    %2973 = vmatprep.subr.bf16.mxu0 %v1521
    %2974 = vmatpush2.bf16.msra.mxu0 %v1520
    %2975 = vmatprep.subr.bf16.mxu0 %v1513
    %2976 = vmatpush2.bf16.msra.mxu0 %v1512
    %2977 = vmatprep.subr.bf16.mxu0 %v1505
    %2978 = vmatpush2.bf16.msra.mxu0 %v1504
    %2979 = vmatprep.subr.bf16.mxu0 %v1497
    %2980 = vmatpush2.bf16.msra.mxu0 %v1496
    %2981 = vmatprep.subr.bf16.mxu0 %v1489
    %2982 = vmatpush2.bf16.msra.mxu0 %v1488
    %2983 = vmatprep.subr.bf16.mxu0 %v1481
    %2984 = vmatpush2.bf16.msra.mxu0 %v1480
    %2985 = vmatprep.subr.bf16.mxu0 %v1473
    %2986 = vmatpush2.bf16.msra.mxu0 %v1472
    %2987 = vmatprep.mubr.bf16.mxu0 %v2868
    %2988 = vmatmul.mubr.bf16.gmra.mxu0 %v2867
    %v2989 = vpop.f32.mrf.mxu0
    %v2990 = vadd.f32 0.0, %v2989
    %v2991 = vpop.f32.mrf.mxu0
    %v2992 = vadd.f32 0.0, %v2991
    %v2993 = vpop.f32.mrf.mxu0
    %v2994 = vadd.f32 0.0, %v2993
    %v2995 = vpop.f32.mrf.mxu0
    %v2996 = vadd.f32 0.0, %v2995
    %2997 = vdwg.mxu0
    %2998 = vmatprep.subr.bf16.mxu0 %v1467
    %2999 = vmatpush1.bf16.msra.mxu0 %v1466
    %3000 = vmatprep.subr.bf16.mxu0 %v1459
    %3001 = vmatpush1.bf16.msra.mxu0 %v1458
    %3002 = vmatprep.subr.bf16.mxu0 %v1451
    %3003 = vmatpush1.bf16.msra.mxu0 %v1450
    %3004 = vmatprep.subr.bf16.mxu0 %v1443
    %3005 = vmatpush1.bf16.msra.mxu0 %v1442
    %3006 = vmatprep.subr.bf16.mxu0 %v1435
    %3007 = vmatpush1.bf16.msra.mxu0 %v1434
    %3008 = vmatprep.subr.bf16.mxu0 %v1427
    %3009 = vmatpush1.bf16.msra.mxu0 %v1426
    %3010 = vmatprep.subr.bf16.mxu0 %v1419
    %3011 = vmatpush1.bf16.msra.mxu0 %v1418
    %3012 = vmatprep.subr.bf16.mxu0 %v1411
    %3013 = vmatpush1.bf16.msra.mxu0 %v1410
    %3014 = vmatprep.subr.bf16.mxu0 %v1531
    %3015 = vmatpush2.bf16.msra.mxu0 %v1530
    %3016 = vmatprep.subr.bf16.mxu0 %v1523
    %3017 = vmatpush2.bf16.msra.mxu0 %v1522
    %3018 = vmatprep.subr.bf16.mxu0 %v1515
    %3019 = vmatpush2.bf16.msra.mxu0 %v1514
    %3020 = vmatprep.subr.bf16.mxu0 %v1507
    %3021 = vmatpush2.bf16.msra.mxu0 %v1506
    %3022 = vmatprep.subr.bf16.mxu0 %v1499
    %3023 = vmatpush2.bf16.msra.mxu0 %v1498
    %3024 = vmatprep.subr.bf16.mxu0 %v1491
    %3025 = vmatpush2.bf16.msra.mxu0 %v1490
    %3026 = vmatprep.subr.bf16.mxu0 %v1483
    %3027 = vmatpush2.bf16.msra.mxu0 %v1482
    %3028 = vmatprep.subr.bf16.mxu0 %v1475
    %3029 = vmatpush2.bf16.msra.mxu0 %v1474
    %3030 = vmatprep.mubr.bf16.mxu0 %v2868
    %3031 = vmatmul.mubr.bf16.gmra.mxu0 %v2867
    %v3032 = vpop.f32.mrf.mxu0
    %v3033 = vadd.f32 0.0, %v3032
    %v3034 = vpop.f32.mrf.mxu0
    %v3035 = vadd.f32 0.0, %v3034
    %v3036 = vpop.f32.mrf.mxu0
    %v3037 = vadd.f32 0.0, %v3036
    %v3038 = vpop.f32.mrf.mxu0
    %v3039 = vadd.f32 0.0, %v3038
    %3040 = vdwg.mxu0
    %s3041 = smul.u32 10, 4
    %s3042 = smul.addr %s3041, 8
    %s3043 = scalar_lea.vmem [#allocation2], %s3042
    %v3044 = vld [vmem:[%s3043] sm:$0xff]
    %v3045 = vld [vmem:[%s3043 + $0x8] sm:$0xff]
    %v3046 = vld [vmem:[%s3043 + $0x10] sm:$0xff]
    %v3047 = vld [vmem:[%s3043 + $0x18] sm:$0xff]
    %v3048 = vld [vmem:[%s3043 + $0x20] sm:$0xff]
    %v3049 = vld [vmem:[%s3043 + $0x28] sm:$0xff]
    %v3050 = vld [vmem:[%s3043 + $0x30] sm:$0xff]
    %v3051 = vld [vmem:[%s3043 + $0x38] sm:$0xff]
    %v3052 = vadd.f32 %v3044, %v2904
    %v3053 = vadd.f32 %v3045, %v2906
    %v3054 = vadd.f32 %v3046, %v2947
    %v3055 = vadd.f32 %v3047, %v2949
    %v3056 = vadd.f32 %v3048, %v2908
    %v3057 = vadd.f32 %v3049, %v2910
    %v3058 = vadd.f32 %v3050, %v2951
    %v3059 = vadd.f32 %v3051, %v2953
    %v3060 = vadd.f32 %v1855, %v2990
    %v3061 = vadd.f32 %v1859, %v2992
    %v3062 = vadd.f32 %v1863, %v3033
    %v3063 = vadd.f32 %v1867, %v3035
    %v3064 = vadd.f32 %v1855, %v2994
    %v3065 = vadd.f32 %v1859, %v2996
    %v3066 = vadd.f32 %v1863, %v3037
    %v3067 = vadd.f32 %v1867, %v3039
    %v3068 = vxor.u32 %v3052, 2147483648
    %v3069 = vxor.u32 %v3053, 2147483648
    %v3070 = vxor.u32 %v3054, 2147483648
    %v3071 = vxor.u32 %v3056, 2147483648
    %v3072 = vxor.u32 %v3057, 2147483648
    %v3073 = vxor.u32 %v3058, 2147483648
    %v3074 = vmul.f32 %v3068, 1.442695
    %v3075 = vpow.pop %v3074
    %v3076 = vmul.f32 %v3069, 1.442695
    %v3077 = vpow.pop %v3076
    %v3078 = vmul.f32 %v3070, 1.442695
    %v3079 = vpow.pop %v3078
    %v3080 = vmul.f32 %v3071, 1.442695
    %v3081 = vpow.pop %v3080
    %v3082 = vmul.f32 %v3072, 1.442695
    %v3083 = vpow.pop %v3082
    %v3084 = vmul.f32 %v3073, 1.442695
    %v3085 = vpow.pop %v3084
    %v3086 = vadd.f32 %v3075, 1.0
    %v3087 = vadd.f32 %v3077, 1.0
    %v3088 = vadd.f32 %v3079, 1.0
    %v3089 = vadd.f32 %v3081, 1.0
    %v3090 = vadd.f32 %v3083, 1.0
    %v3091 = vadd.f32 %v3085, 1.0
    %v3092 = vrcp.pop %v3086
    %v3093 = vmul.f32 1.0, %v3092
    %v3094 = vrcp.pop %v3087
    %v3095 = vmul.f32 1.0, %v3094
    %v3096 = vrcp.pop %v3088
    %v3097 = vmul.f32 1.0, %v3096
    %v3098 = vrcp.pop %v3089
    %v3099 = vmul.f32 1.0, %v3098
    %v3100 = vrcp.pop %v3090
    %v3101 = vmul.f32 1.0, %v3100
    %v3102 = vrcp.pop %v3091
    %v3103 = vmul.f32 1.0, %v3102
    %v3104 = vtanh.pop %v3055
    %v3105 = vtanh.pop %v3059
    %v3106 = vmul.f32 %v3095, %v2813
    %v3107 = vmul.f32 %v3101, %v2814
    %v3108 = vmul.f32 %v3093, %v3104
    %v3109 = vmul.f32 %v3099, %v3105
    %v3110 = vadd.f32 %v3106, %v3108
    %v3111 = vadd.f32 %v3107, %v3109
    %v3112 = vtanh.pop %v3110
    %v3113 = vtanh.pop %v3111
    %v3114 = vmul.f32 %v3097, %v3112
    %v3115 = vmul.f32 %v3103, %v3113
    %v3116 = vxor.u32 %v3060, 2147483648
    %v3117 = vxor.u32 %v3061, 2147483648
    %v3118 = vxor.u32 %v3062, 2147483648
    %v3119 = vxor.u32 %v3064, 2147483648
    %v3120 = vxor.u32 %v3065, 2147483648
    %v3121 = vxor.u32 %v3066, 2147483648
    %v3122 = vmul.f32 %v3116, 1.442695
    %v3123 = vpow.pop %v3122
    %v3124 = vmul.f32 %v3117, 1.442695
    %v3125 = vpow.pop %v3124
    %v3126 = vmul.f32 %v3118, 1.442695
    %v3127 = vpow.pop %v3126
    %v3128 = vmul.f32 %v3119, 1.442695
    %v3129 = vpow.pop %v3128
    %v3130 = vmul.f32 %v3120, 1.442695
    %v3131 = vpow.pop %v3130
    %v3132 = vmul.f32 %v3121, 1.442695
    %v3133 = vpow.pop %v3132
    %v3134 = vadd.f32 %v3123, 1.0
    %v3135 = vadd.f32 %v3125, 1.0
    %v3136 = vadd.f32 %v3127, 1.0
    %v3137 = vadd.f32 %v3129, 1.0
    %v3138 = vadd.f32 %v3131, 1.0
    %v3139 = vadd.f32 %v3133, 1.0
    %v3140 = vrcp.pop %v3134
    %v3141 = vmul.f32 1.0, %v3140
    %v3142 = vrcp.pop %v3135
    %v3143 = vmul.f32 1.0, %v3142
    %v3144 = vrcp.pop %v3136
    %v3145 = vmul.f32 1.0, %v3144
    %v3146 = vrcp.pop %v3137
    %v3147 = vmul.f32 1.0, %v3146
    %v3148 = vrcp.pop %v3138
    %v3149 = vmul.f32 1.0, %v3148
    %v3150 = vrcp.pop %v3139
    %v3151 = vmul.f32 1.0, %v3150
    %v3152 = vtanh.pop %v3063
    %v3153 = vtanh.pop %v3067
    %v3154 = vmul.f32 %v3143, %v2861
    %v3155 = vmul.f32 %v3149, %v2862
    %v3156 = vmul.f32 %v3141, %v3152
    %v3157 = vmul.f32 %v3147, %v3153
    %v3158 = vadd.f32 %v3154, %v3156
    %v3159 = vadd.f32 %v3155, %v3157
    %v3160 = vtanh.pop %v3158
    %v3161 = vtanh.pop %v3159
    %v3162 = vmul.f32 %v3145, %v3160
    %v3163 = vmul.f32 %v3151, %v3161
    %v3164 = vpack.c.bf16 %v3115, %v3114
    %v3165 = vpack.c.bf16 %v3163, %v3162
    %3166 = vmatprep.subr.bf16.mxu0 %v1461
    %3167 = vmatpush1.bf16.msra.mxu0 %v1460
    %3168 = vmatprep.subr.bf16.mxu0 %v1453
    %3169 = vmatpush1.bf16.msra.mxu0 %v1452
    %3170 = vmatprep.subr.bf16.mxu0 %v1445
    %3171 = vmatpush1.bf16.msra.mxu0 %v1444
    %3172 = vmatprep.subr.bf16.mxu0 %v1437
    %3173 = vmatpush1.bf16.msra.mxu0 %v1436
    %3174 = vmatprep.subr.bf16.mxu0 %v1429
    %3175 = vmatpush1.bf16.msra.mxu0 %v1428
    %3176 = vmatprep.subr.bf16.mxu0 %v1421
    %3177 = vmatpush1.bf16.msra.mxu0 %v1420
    %3178 = vmatprep.subr.bf16.mxu0 %v1413
    %3179 = vmatpush1.bf16.msra.mxu0 %v1412
    %3180 = vmatprep.subr.bf16.mxu0 %v1405
    %3181 = vmatpush1.bf16.msra.mxu0 %v1404
    %3182 = vmatprep.subr.bf16.mxu0 %v1525
    %3183 = vmatpush2.bf16.msra.mxu0 %v1524
    %3184 = vmatprep.subr.bf16.mxu0 %v1517
    %3185 = vmatpush2.bf16.msra.mxu0 %v1516
    %3186 = vmatprep.subr.bf16.mxu0 %v1509
    %3187 = vmatpush2.bf16.msra.mxu0 %v1508
    %3188 = vmatprep.subr.bf16.mxu0 %v1501
    %3189 = vmatpush2.bf16.msra.mxu0 %v1500
    %3190 = vmatprep.subr.bf16.mxu0 %v1493
    %3191 = vmatpush2.bf16.msra.mxu0 %v1492
    %3192 = vmatprep.subr.bf16.mxu0 %v1485
    %3193 = vmatpush2.bf16.msra.mxu0 %v1484
    %3194 = vmatprep.subr.bf16.mxu0 %v1477
    %3195 = vmatpush2.bf16.msra.mxu0 %v1476
    %3196 = vmatprep.subr.bf16.mxu0 %v1469
    %3197 = vmatpush2.bf16.msra.mxu0 %v1468
    %3198 = vmatprep.mubr.bf16.mxu0 %v3165
    %3199 = vmatmul.mubr.bf16.gmra.mxu0 %v3164
    %v3200 = vpop.f32.mrf.mxu0
    %v3201 = vadd.f32 0.0, %v3200
    %v3202 = vpop.f32.mrf.mxu0
    %v3203 = vadd.f32 0.0, %v3202
    %v3204 = vpop.f32.mrf.mxu0
    %v3205 = vadd.f32 0.0, %v3204
    %v3206 = vpop.f32.mrf.mxu0
    %v3207 = vadd.f32 0.0, %v3206
    %3208 = vdwg.mxu0
    %3209 = vmatprep.subr.bf16.mxu0 %v1463
    %3210 = vmatpush1.bf16.msra.mxu0 %v1462
    %3211 = vmatprep.subr.bf16.mxu0 %v1455
    %3212 = vmatpush1.bf16.msra.mxu0 %v1454
    %3213 = vmatprep.subr.bf16.mxu0 %v1447
    %3214 = vmatpush1.bf16.msra.mxu0 %v1446
    %3215 = vmatprep.subr.bf16.mxu0 %v1439
    %3216 = vmatpush1.bf16.msra.mxu0 %v1438
    %3217 = vmatprep.subr.bf16.mxu0 %v1431
    %3218 = vmatpush1.bf16.msra.mxu0 %v1430
    %3219 = vmatprep.subr.bf16.mxu0 %v1423
    %3220 = vmatpush1.bf16.msra.mxu0 %v1422
    %3221 = vmatprep.subr.bf16.mxu0 %v1415
    %3222 = vmatpush1.bf16.msra.mxu0 %v1414
    %3223 = vmatprep.subr.bf16.mxu0 %v1407
    %3224 = vmatpush1.bf16.msra.mxu0 %v1406
    %3225 = vmatprep.subr.bf16.mxu0 %v1527
    %3226 = vmatpush2.bf16.msra.mxu0 %v1526
    %3227 = vmatprep.subr.bf16.mxu0 %v1519
    %3228 = vmatpush2.bf16.msra.mxu0 %v1518
    %3229 = vmatprep.subr.bf16.mxu0 %v1511
    %3230 = vmatpush2.bf16.msra.mxu0 %v1510
    %3231 = vmatprep.subr.bf16.mxu0 %v1503
    %3232 = vmatpush2.bf16.msra.mxu0 %v1502
    %3233 = vmatprep.subr.bf16.mxu0 %v1495
    %3234 = vmatpush2.bf16.msra.mxu0 %v1494
    %3235 = vmatprep.subr.bf16.mxu0 %v1487
    %3236 = vmatpush2.bf16.msra.mxu0 %v1486
    %3237 = vmatprep.subr.bf16.mxu0 %v1479
    %3238 = vmatpush2.bf16.msra.mxu0 %v1478
    %3239 = vmatprep.subr.bf16.mxu0 %v1471
    %3240 = vmatpush2.bf16.msra.mxu0 %v1470
    %3241 = vmatprep.mubr.bf16.mxu0 %v3165
    %3242 = vmatmul.mubr.bf16.gmra.mxu0 %v3164
    %v3243 = vpop.f32.mrf.mxu0
    %v3244 = vadd.f32 0.0, %v3243
    %v3245 = vpop.f32.mrf.mxu0
    %v3246 = vadd.f32 0.0, %v3245
    %v3247 = vpop.f32.mrf.mxu0
    %v3248 = vadd.f32 0.0, %v3247
    %v3249 = vpop.f32.mrf.mxu0
    %v3250 = vadd.f32 0.0, %v3249
    %3251 = vdwg.mxu0
    %3252 = vmatprep.subr.bf16.mxu0 %v1465
    %3253 = vmatpush1.bf16.msra.mxu0 %v1464
    %3254 = vmatprep.subr.bf16.mxu0 %v1457
    %3255 = vmatpush1.bf16.msra.mxu0 %v1456
    %3256 = vmatprep.subr.bf16.mxu0 %v1449
    %3257 = vmatpush1.bf16.msra.mxu0 %v1448
    %3258 = vmatprep.subr.bf16.mxu0 %v1441
    %3259 = vmatpush1.bf16.msra.mxu0 %v1440
    %3260 = vmatprep.subr.bf16.mxu0 %v1433
    %3261 = vmatpush1.bf16.msra.mxu0 %v1432
    %3262 = vmatprep.subr.bf16.mxu0 %v1425
    %3263 = vmatpush1.bf16.msra.mxu0 %v1424
    %3264 = vmatprep.subr.bf16.mxu0 %v1417
    %3265 = vmatpush1.bf16.msra.mxu0 %v1416
    %3266 = vmatprep.subr.bf16.mxu0 %v1409
    %3267 = vmatpush1.bf16.msra.mxu0 %v1408
    %3268 = vmatprep.subr.bf16.mxu0 %v1529
    %3269 = vmatpush2.bf16.msra.mxu0 %v1528
    %3270 = vmatprep.subr.bf16.mxu0 %v1521
    %3271 = vmatpush2.bf16.msra.mxu0 %v1520
    %3272 = vmatprep.subr.bf16.mxu0 %v1513
    %3273 = vmatpush2.bf16.msra.mxu0 %v1512
    %3274 = vmatprep.subr.bf16.mxu0 %v1505
    %3275 = vmatpush2.bf16.msra.mxu0 %v1504
    %3276 = vmatprep.subr.bf16.mxu0 %v1497
    %3277 = vmatpush2.bf16.msra.mxu0 %v1496
    %3278 = vmatprep.subr.bf16.mxu0 %v1489
    %3279 = vmatpush2.bf16.msra.mxu0 %v1488
    %3280 = vmatprep.subr.bf16.mxu0 %v1481
    %3281 = vmatpush2.bf16.msra.mxu0 %v1480
    %3282 = vmatprep.subr.bf16.mxu0 %v1473
    %3283 = vmatpush2.bf16.msra.mxu0 %v1472
    %3284 = vmatprep.mubr.bf16.mxu0 %v3165
    %3285 = vmatmul.mubr.bf16.gmra.mxu0 %v3164
    %v3286 = vpop.f32.mrf.mxu0
    %v3287 = vadd.f32 0.0, %v3286
    %v3288 = vpop.f32.mrf.mxu0
    %v3289 = vadd.f32 0.0, %v3288
    %v3290 = vpop.f32.mrf.mxu0
    %v3291 = vadd.f32 0.0, %v3290
    %v3292 = vpop.f32.mrf.mxu0
    %v3293 = vadd.f32 0.0, %v3292
    %3294 = vdwg.mxu0
    %3295 = vmatprep.subr.bf16.mxu0 %v1467
    %3296 = vmatpush1.bf16.msra.mxu0 %v1466
    %3297 = vmatprep.subr.bf16.mxu0 %v1459
    %3298 = vmatpush1.bf16.msra.mxu0 %v1458
    %3299 = vmatprep.subr.bf16.mxu0 %v1451
    %3300 = vmatpush1.bf16.msra.mxu0 %v1450
    %3301 = vmatprep.subr.bf16.mxu0 %v1443
    %3302 = vmatpush1.bf16.msra.mxu0 %v1442
    %3303 = vmatprep.subr.bf16.mxu0 %v1435
    %3304 = vmatpush1.bf16.msra.mxu0 %v1434
    %3305 = vmatprep.subr.bf16.mxu0 %v1427
    %3306 = vmatpush1.bf16.msra.mxu0 %v1426
    %3307 = vmatprep.subr.bf16.mxu0 %v1419
    %3308 = vmatpush1.bf16.msra.mxu0 %v1418
    %3309 = vmatprep.subr.bf16.mxu0 %v1411
    %3310 = vmatpush1.bf16.msra.mxu0 %v1410
    %3311 = vmatprep.subr.bf16.mxu0 %v1531
    %3312 = vmatpush2.bf16.msra.mxu0 %v1530
    %3313 = vmatprep.subr.bf16.mxu0 %v1523
    %3314 = vmatpush2.bf16.msra.mxu0 %v1522
    %3315 = vmatprep.subr.bf16.mxu0 %v1515
    %3316 = vmatpush2.bf16.msra.mxu0 %v1514
    %3317 = vmatprep.subr.bf16.mxu0 %v1507
    %3318 = vmatpush2.bf16.msra.mxu0 %v1506
    %3319 = vmatprep.subr.bf16.mxu0 %v1499
    %3320 = vmatpush2.bf16.msra.mxu0 %v1498
    %3321 = vmatprep.subr.bf16.mxu0 %v1491
    %3322 = vmatpush2.bf16.msra.mxu0 %v1490
    %3323 = vmatprep.subr.bf16.mxu0 %v1483
    %3324 = vmatpush2.bf16.msra.mxu0 %v1482
    %3325 = vmatprep.subr.bf16.mxu0 %v1475
    %3326 = vmatpush2.bf16.msra.mxu0 %v1474
    %3327 = vmatprep.mubr.bf16.mxu0 %v3165
    %3328 = vmatmul.mubr.bf16.gmra.mxu0 %v3164
    %v3329 = vpop.f32.mrf.mxu0
    %v3330 = vadd.f32 0.0, %v3329
    %v3331 = vpop.f32.mrf.mxu0
    %v3332 = vadd.f32 0.0, %v3331
    %v3333 = vpop.f32.mrf.mxu0
    %v3334 = vadd.f32 0.0, %v3333
    %v3335 = vpop.f32.mrf.mxu0
    %v3336 = vadd.f32 0.0, %v3335
    %3337 = vdwg.mxu0
    %s3338 = smul.u32 12, 4
    %s3339 = smul.addr %s3338, 8
    %s3340 = scalar_lea.vmem [#allocation2], %s3339
    %v3341 = vld [vmem:[%s3340] sm:$0xff]
    %v3342 = vld [vmem:[%s3340 + $0x8] sm:$0xff]
    %v3343 = vld [vmem:[%s3340 + $0x10] sm:$0xff]
    %v3344 = vld [vmem:[%s3340 + $0x18] sm:$0xff]
    %v3345 = vld [vmem:[%s3340 + $0x20] sm:$0xff]
    %v3346 = vld [vmem:[%s3340 + $0x28] sm:$0xff]
    %v3347 = vld [vmem:[%s3340 + $0x30] sm:$0xff]
    %v3348 = vld [vmem:[%s3340 + $0x38] sm:$0xff]
    %v3349 = vadd.f32 %v3341, %v3201
    %v3350 = vadd.f32 %v3342, %v3203
    %v3351 = vadd.f32 %v3343, %v3244
    %v3352 = vadd.f32 %v3344, %v3246
    %v3353 = vadd.f32 %v3345, %v3205
    %v3354 = vadd.f32 %v3346, %v3207
    %v3355 = vadd.f32 %v3347, %v3248
    %v3356 = vadd.f32 %v3348, %v3250
    %v3357 = vadd.f32 %v1855, %v3287
    %v3358 = vadd.f32 %v1859, %v3289
    %v3359 = vadd.f32 %v1863, %v3330
    %v3360 = vadd.f32 %v1867, %v3332
    %v3361 = vadd.f32 %v1855, %v3291
    %v3362 = vadd.f32 %v1859, %v3293
    %v3363 = vadd.f32 %v1863, %v3334
    %v3364 = vadd.f32 %v1867, %v3336
    %v3365 = vxor.u32 %v3349, 2147483648
    %v3366 = vxor.u32 %v3350, 2147483648
    %v3367 = vxor.u32 %v3351, 2147483648
    %v3368 = vxor.u32 %v3353, 2147483648
    %v3369 = vxor.u32 %v3354, 2147483648
    %v3370 = vxor.u32 %v3355, 2147483648
    %v3371 = vmul.f32 %v3365, 1.442695
    %v3372 = vpow.pop %v3371
    %v3373 = vmul.f32 %v3366, 1.442695
    %v3374 = vpow.pop %v3373
    %v3375 = vmul.f32 %v3367, 1.442695
    %v3376 = vpow.pop %v3375
    %v3377 = vmul.f32 %v3368, 1.442695
    %v3378 = vpow.pop %v3377
    %v3379 = vmul.f32 %v3369, 1.442695
    %v3380 = vpow.pop %v3379
    %v3381 = vmul.f32 %v3370, 1.442695
    %v3382 = vpow.pop %v3381
    %v3383 = vadd.f32 %v3372, 1.0
    %v3384 = vadd.f32 %v3374, 1.0
    %v3385 = vadd.f32 %v3376, 1.0
    %v3386 = vadd.f32 %v3378, 1.0
    %v3387 = vadd.f32 %v3380, 1.0
    %v3388 = vadd.f32 %v3382, 1.0
    %v3389 = vrcp.pop %v3383
    %v3390 = vmul.f32 1.0, %v3389
    %v3391 = vrcp.pop %v3384
    %v3392 = vmul.f32 1.0, %v3391
    %v3393 = vrcp.pop %v3385
    %v3394 = vmul.f32 1.0, %v3393
    %v3395 = vrcp.pop %v3386
    %v3396 = vmul.f32 1.0, %v3395
    %v3397 = vrcp.pop %v3387
    %v3398 = vmul.f32 1.0, %v3397
    %v3399 = vrcp.pop %v3388
    %v3400 = vmul.f32 1.0, %v3399
    %v3401 = vtanh.pop %v3352
    %v3402 = vtanh.pop %v3356
    %v3403 = vmul.f32 %v3392, %v3110
    %v3404 = vmul.f32 %v3398, %v3111
    %v3405 = vmul.f32 %v3390, %v3401
    %v3406 = vmul.f32 %v3396, %v3402
    %v3407 = vadd.f32 %v3403, %v3405
    %v3408 = vadd.f32 %v3404, %v3406
    %v3409 = vtanh.pop %v3407
    %v3410 = vtanh.pop %v3408
    %v3411 = vmul.f32 %v3394, %v3409
    %v3412 = vmul.f32 %v3400, %v3410
    %v3413 = vxor.u32 %v3357, 2147483648
    %v3414 = vxor.u32 %v3358, 2147483648
    %v3415 = vxor.u32 %v3359, 2147483648
    %v3416 = vxor.u32 %v3361, 2147483648
    %v3417 = vxor.u32 %v3362, 2147483648
    %v3418 = vxor.u32 %v3363, 2147483648
    %v3419 = vmul.f32 %v3413, 1.442695
    %v3420 = vpow.pop %v3419
    %v3421 = vmul.f32 %v3414, 1.442695
    %v3422 = vpow.pop %v3421
    %v3423 = vmul.f32 %v3415, 1.442695
    %v3424 = vpow.pop %v3423
    %v3425 = vmul.f32 %v3416, 1.442695
    %v3426 = vpow.pop %v3425
    %v3427 = vmul.f32 %v3417, 1.442695
    %v3428 = vpow.pop %v3427
    %v3429 = vmul.f32 %v3418, 1.442695
    %v3430 = vpow.pop %v3429
    %v3431 = vadd.f32 %v3420, 1.0
    %v3432 = vadd.f32 %v3422, 1.0
    %v3433 = vadd.f32 %v3424, 1.0
    %v3434 = vadd.f32 %v3426, 1.0
    %v3435 = vadd.f32 %v3428, 1.0
    %v3436 = vadd.f32 %v3430, 1.0
    %v3437 = vrcp.pop %v3431
    %v3438 = vmul.f32 1.0, %v3437
    %v3439 = vrcp.pop %v3432
    %v3440 = vmul.f32 1.0, %v3439
    %v3441 = vrcp.pop %v3433
    %v3442 = vmul.f32 1.0, %v3441
    %v3443 = vrcp.pop %v3434
    %v3444 = vmul.f32 1.0, %v3443
    %v3445 = vrcp.pop %v3435
    %v3446 = vmul.f32 1.0, %v3445
    %v3447 = vrcp.pop %v3436
    %v3448 = vmul.f32 1.0, %v3447
    %v3449 = vtanh.pop %v3360
    %v3450 = vtanh.pop %v3364
    %v3451 = vmul.f32 %v3440, %v3158
    %v3452 = vmul.f32 %v3446, %v3159
    %v3453 = vmul.f32 %v3438, %v3449
    %v3454 = vmul.f32 %v3444, %v3450
    %v3455 = vadd.f32 %v3451, %v3453
    %v3456 = vadd.f32 %v3452, %v3454
    %v3457 = vtanh.pop %v3455
    %v3458 = vtanh.pop %v3456
    %v3459 = vmul.f32 %v3442, %v3457
    %v3460 = vmul.f32 %v3448, %v3458
    %v3461 = vpack.c.bf16 %v3412, %v3411
    %v3462 = vpack.c.bf16 %v3460, %v3459
    %3463 = vmatprep.subr.bf16.mxu0 %v1461
    %3464 = vmatpush1.bf16.msra.mxu0 %v1460
    %3465 = vmatprep.subr.bf16.mxu0 %v1453
    %3466 = vmatpush1.bf16.msra.mxu0 %v1452
    %3467 = vmatprep.subr.bf16.mxu0 %v1445
    %3468 = vmatpush1.bf16.msra.mxu0 %v1444
    %3469 = vmatprep.subr.bf16.mxu0 %v1437
    %3470 = vmatpush1.bf16.msra.mxu0 %v1436
    %3471 = vmatprep.subr.bf16.mxu0 %v1429
    %3472 = vmatpush1.bf16.msra.mxu0 %v1428
    %3473 = vmatprep.subr.bf16.mxu0 %v1421
    %3474 = vmatpush1.bf16.msra.mxu0 %v1420
    %3475 = vmatprep.subr.bf16.mxu0 %v1413
    %3476 = vmatpush1.bf16.msra.mxu0 %v1412
    %3477 = vmatprep.subr.bf16.mxu0 %v1405
    %3478 = vmatpush1.bf16.msra.mxu0 %v1404
    %3479 = vmatprep.subr.bf16.mxu0 %v1525
    %3480 = vmatpush2.bf16.msra.mxu0 %v1524
    %3481 = vmatprep.subr.bf16.mxu0 %v1517
    %3482 = vmatpush2.bf16.msra.mxu0 %v1516
    %3483 = vmatprep.subr.bf16.mxu0 %v1509
    %3484 = vmatpush2.bf16.msra.mxu0 %v1508
    %3485 = vmatprep.subr.bf16.mxu0 %v1501
    %3486 = vmatpush2.bf16.msra.mxu0 %v1500
    %3487 = vmatprep.subr.bf16.mxu0 %v1493
    %3488 = vmatpush2.bf16.msra.mxu0 %v1492
    %3489 = vmatprep.subr.bf16.mxu0 %v1485
    %3490 = vmatpush2.bf16.msra.mxu0 %v1484
    %3491 = vmatprep.subr.bf16.mxu0 %v1477
    %3492 = vmatpush2.bf16.msra.mxu0 %v1476
    %3493 = vmatprep.subr.bf16.mxu0 %v1469
    %3494 = vmatpush2.bf16.msra.mxu0 %v1468
    %3495 = vmatprep.mubr.bf16.mxu0 %v3462
    %3496 = vmatmul.mubr.bf16.gmra.mxu0 %v3461
    %v3497 = vpop.f32.mrf.mxu0
    %v3498 = vadd.f32 0.0, %v3497
    %v3499 = vpop.f32.mrf.mxu0
    %v3500 = vadd.f32 0.0, %v3499
    %v3501 = vpop.f32.mrf.mxu0
    %v3502 = vadd.f32 0.0, %v3501
    %v3503 = vpop.f32.mrf.mxu0
    %v3504 = vadd.f32 0.0, %v3503
    %3505 = vdwg.mxu0
    %3506 = vmatprep.subr.bf16.mxu0 %v1463
    %3507 = vmatpush1.bf16.msra.mxu0 %v1462
    %3508 = vmatprep.subr.bf16.mxu0 %v1455
    %3509 = vmatpush1.bf16.msra.mxu0 %v1454
    %3510 = vmatprep.subr.bf16.mxu0 %v1447
    %3511 = vmatpush1.bf16.msra.mxu0 %v1446
    %3512 = vmatprep.subr.bf16.mxu0 %v1439
    %3513 = vmatpush1.bf16.msra.mxu0 %v1438
    %3514 = vmatprep.subr.bf16.mxu0 %v1431
    %3515 = vmatpush1.bf16.msra.mxu0 %v1430
    %3516 = vmatprep.subr.bf16.mxu0 %v1423
    %3517 = vmatpush1.bf16.msra.mxu0 %v1422
    %3518 = vmatprep.subr.bf16.mxu0 %v1415
    %3519 = vmatpush1.bf16.msra.mxu0 %v1414
    %3520 = vmatprep.subr.bf16.mxu0 %v1407
    %3521 = vmatpush1.bf16.msra.mxu0 %v1406
    %3522 = vmatprep.subr.bf16.mxu0 %v1527
    %3523 = vmatpush2.bf16.msra.mxu0 %v1526
    %3524 = vmatprep.subr.bf16.mxu0 %v1519
    %3525 = vmatpush2.bf16.msra.mxu0 %v1518
    %3526 = vmatprep.subr.bf16.mxu0 %v1511
    %3527 = vmatpush2.bf16.msra.mxu0 %v1510
    %3528 = vmatprep.subr.bf16.mxu0 %v1503
    %3529 = vmatpush2.bf16.msra.mxu0 %v1502
    %3530 = vmatprep.subr.bf16.mxu0 %v1495
    %3531 = vmatpush2.bf16.msra.mxu0 %v1494
    %3532 = vmatprep.subr.bf16.mxu0 %v1487
    %3533 = vmatpush2.bf16.msra.mxu0 %v1486
    %3534 = vmatprep.subr.bf16.mxu0 %v1479
    %3535 = vmatpush2.bf16.msra.mxu0 %v1478
    %3536 = vmatprep.subr.bf16.mxu0 %v1471
    %3537 = vmatpush2.bf16.msra.mxu0 %v1470
    %3538 = vmatprep.mubr.bf16.mxu0 %v3462
    %3539 = vmatmul.mubr.bf16.gmra.mxu0 %v3461
    %v3540 = vpop.f32.mrf.mxu0
    %v3541 = vadd.f32 0.0, %v3540
    %v3542 = vpop.f32.mrf.mxu0
    %v3543 = vadd.f32 0.0, %v3542
    %v3544 = vpop.f32.mrf.mxu0
    %v3545 = vadd.f32 0.0, %v3544
    %v3546 = vpop.f32.mrf.mxu0
    %v3547 = vadd.f32 0.0, %v3546
    %3548 = vdwg.mxu0
    %3549 = vmatprep.subr.bf16.mxu0 %v1465
    %3550 = vmatpush1.bf16.msra.mxu0 %v1464
    %3551 = vmatprep.subr.bf16.mxu0 %v1457
    %3552 = vmatpush1.bf16.msra.mxu0 %v1456
    %3553 = vmatprep.subr.bf16.mxu0 %v1449
    %3554 = vmatpush1.bf16.msra.mxu0 %v1448
    %3555 = vmatprep.subr.bf16.mxu0 %v1441
    %3556 = vmatpush1.bf16.msra.mxu0 %v1440
    %3557 = vmatprep.subr.bf16.mxu0 %v1433
    %3558 = vmatpush1.bf16.msra.mxu0 %v1432
    %3559 = vmatprep.subr.bf16.mxu0 %v1425
    %3560 = vmatpush1.bf16.msra.mxu0 %v1424
    %3561 = vmatprep.subr.bf16.mxu0 %v1417
    %3562 = vmatpush1.bf16.msra.mxu0 %v1416
    %3563 = vmatprep.subr.bf16.mxu0 %v1409
    %3564 = vmatpush1.bf16.msra.mxu0 %v1408
    %3565 = vmatprep.subr.bf16.mxu0 %v1529
    %3566 = vmatpush2.bf16.msra.mxu0 %v1528
    %3567 = vmatprep.subr.bf16.mxu0 %v1521
    %3568 = vmatpush2.bf16.msra.mxu0 %v1520
    %3569 = vmatprep.subr.bf16.mxu0 %v1513
    %3570 = vmatpush2.bf16.msra.mxu0 %v1512
    %3571 = vmatprep.subr.bf16.mxu0 %v1505
    %3572 = vmatpush2.bf16.msra.mxu0 %v1504
    %3573 = vmatprep.subr.bf16.mxu0 %v1497
    %3574 = vmatpush2.bf16.msra.mxu0 %v1496
    %3575 = vmatprep.subr.bf16.mxu0 %v1489
    %3576 = vmatpush2.bf16.msra.mxu0 %v1488
    %3577 = vmatprep.subr.bf16.mxu0 %v1481
    %3578 = vmatpush2.bf16.msra.mxu0 %v1480
    %3579 = vmatprep.subr.bf16.mxu0 %v1473
    %3580 = vmatpush2.bf16.msra.mxu0 %v1472
    %3581 = vmatprep.mubr.bf16.mxu0 %v3462
    %3582 = vmatmul.mubr.bf16.gmra.mxu0 %v3461
    %v3583 = vpop.f32.mrf.mxu0
    %v3584 = vadd.f32 0.0, %v3583
    %v3585 = vpop.f32.mrf.mxu0
    %v3586 = vadd.f32 0.0, %v3585
    %v3587 = vpop.f32.mrf.mxu0
    %v3588 = vadd.f32 0.0, %v3587
    %v3589 = vpop.f32.mrf.mxu0
    %v3590 = vadd.f32 0.0, %v3589
    %3591 = vdwg.mxu0
    %3592 = vmatprep.subr.bf16.mxu0 %v1467
    %3593 = vmatpush1.bf16.msra.mxu0 %v1466
    %3594 = vmatprep.subr.bf16.mxu0 %v1459
    %3595 = vmatpush1.bf16.msra.mxu0 %v1458
    %3596 = vmatprep.subr.bf16.mxu0 %v1451
    %3597 = vmatpush1.bf16.msra.mxu0 %v1450
    %3598 = vmatprep.subr.bf16.mxu0 %v1443
    %3599 = vmatpush1.bf16.msra.mxu0 %v1442
    %3600 = vmatprep.subr.bf16.mxu0 %v1435
    %3601 = vmatpush1.bf16.msra.mxu0 %v1434
    %3602 = vmatprep.subr.bf16.mxu0 %v1427
    %3603 = vmatpush1.bf16.msra.mxu0 %v1426
    %3604 = vmatprep.subr.bf16.mxu0 %v1419
    %3605 = vmatpush1.bf16.msra.mxu0 %v1418
    %3606 = vmatprep.subr.bf16.mxu0 %v1411
    %3607 = vmatpush1.bf16.msra.mxu0 %v1410
    %3608 = vmatprep.subr.bf16.mxu0 %v1531
    %3609 = vmatpush2.bf16.msra.mxu0 %v1530
    %3610 = vmatprep.subr.bf16.mxu0 %v1523
    %3611 = vmatpush2.bf16.msra.mxu0 %v1522
    %3612 = vmatprep.subr.bf16.mxu0 %v1515
    %3613 = vmatpush2.bf16.msra.mxu0 %v1514
    %3614 = vmatprep.subr.bf16.mxu0 %v1507
    %3615 = vmatpush2.bf16.msra.mxu0 %v1506
    %3616 = vmatprep.subr.bf16.mxu0 %v1499
    %3617 = vmatpush2.bf16.msra.mxu0 %v1498
    %3618 = vmatprep.subr.bf16.mxu0 %v1491
    %3619 = vmatpush2.bf16.msra.mxu0 %v1490
    %3620 = vmatprep.subr.bf16.mxu0 %v1483
    %3621 = vmatpush2.bf16.msra.mxu0 %v1482
    %3622 = vmatprep.subr.bf16.mxu0 %v1475
    %3623 = vmatpush2.bf16.msra.mxu0 %v1474
    %3624 = vmatprep.mubr.bf16.mxu0 %v3462
    %3625 = vmatmul.mubr.bf16.gmra.mxu0 %v3461
    %v3626 = vpop.f32.mrf.mxu0
    %v3627 = vadd.f32 0.0, %v3626
    %v3628 = vpop.f32.mrf.mxu0
    %v3629 = vadd.f32 0.0, %v3628
    %v3630 = vpop.f32.mrf.mxu0
    %v3631 = vadd.f32 0.0, %v3630
    %v3632 = vpop.f32.mrf.mxu0
    %v3633 = vadd.f32 0.0, %v3632
    %3634 = vdwg.mxu0
    %s3635 = smul.u32 14, 4
    %s3636 = smul.addr %s3635, 8
    %s3637 = scalar_lea.vmem [#allocation2], %s3636
    %v3638 = vld [vmem:[%s3637] sm:$0xff]
    %v3639 = vld [vmem:[%s3637 + $0x8] sm:$0xff]
    %v3640 = vld [vmem:[%s3637 + $0x10] sm:$0xff]
    %v3641 = vld [vmem:[%s3637 + $0x18] sm:$0xff]
    %v3642 = vld [vmem:[%s3637 + $0x20] sm:$0xff]
    %v3643 = vld [vmem:[%s3637 + $0x28] sm:$0xff]
    %v3644 = vld [vmem:[%s3637 + $0x30] sm:$0xff]
    %v3645 = vld [vmem:[%s3637 + $0x38] sm:$0xff]
    %v3646 = vadd.f32 %v3638, %v3498
    %v3647 = vadd.f32 %v3639, %v3500
    %v3648 = vadd.f32 %v3640, %v3541
    %v3649 = vadd.f32 %v3641, %v3543
    %v3650 = vadd.f32 %v3642, %v3502
    %v3651 = vadd.f32 %v3643, %v3504
    %v3652 = vadd.f32 %v3644, %v3545
    %v3653 = vadd.f32 %v3645, %v3547
    %v3654 = vadd.f32 %v1855, %v3584
    %v3655 = vadd.f32 %v1859, %v3586
    %v3656 = vadd.f32 %v1863, %v3627
    %v3657 = vadd.f32 %v1867, %v3629
    %v3658 = vadd.f32 %v1855, %v3588
    %v3659 = vadd.f32 %v1859, %v3590
    %v3660 = vadd.f32 %v1863, %v3631
    %v3661 = vadd.f32 %v1867, %v3633
    %v3662 = vxor.u32 %v3646, 2147483648
    %v3663 = vxor.u32 %v3647, 2147483648
    %v3664 = vxor.u32 %v3648, 2147483648
    %v3665 = vxor.u32 %v3650, 2147483648
    %v3666 = vxor.u32 %v3651, 2147483648
    %v3667 = vxor.u32 %v3652, 2147483648
    %v3668 = vmul.f32 %v3662, 1.442695
    %v3669 = vpow.pop %v3668
    %v3670 = vmul.f32 %v3663, 1.442695
    %v3671 = vpow.pop %v3670
    %v3672 = vmul.f32 %v3664, 1.442695
    %v3673 = vpow.pop %v3672
    %v3674 = vmul.f32 %v3665, 1.442695
    %v3675 = vpow.pop %v3674
    %v3676 = vmul.f32 %v3666, 1.442695
    %v3677 = vpow.pop %v3676
    %v3678 = vmul.f32 %v3667, 1.442695
    %v3679 = vpow.pop %v3678
    %v3680 = vadd.f32 %v3669, 1.0
    %v3681 = vadd.f32 %v3671, 1.0
    %v3682 = vadd.f32 %v3673, 1.0
    %v3683 = vadd.f32 %v3675, 1.0
    %v3684 = vadd.f32 %v3677, 1.0
    %v3685 = vadd.f32 %v3679, 1.0
    %v3686 = vrcp.pop %v3680
    %v3687 = vmul.f32 1.0, %v3686
    %v3688 = vrcp.pop %v3681
    %v3689 = vmul.f32 1.0, %v3688
    %v3690 = vrcp.pop %v3682
    %v3691 = vmul.f32 1.0, %v3690
    %v3692 = vrcp.pop %v3683
    %v3693 = vmul.f32 1.0, %v3692
    %v3694 = vrcp.pop %v3684
    %v3695 = vmul.f32 1.0, %v3694
    %v3696 = vrcp.pop %v3685
    %v3697 = vmul.f32 1.0, %v3696
    %v3698 = vtanh.pop %v3649
    %v3699 = vtanh.pop %v3653
    %v3700 = vmul.f32 %v3689, %v3407
    %v3701 = vmul.f32 %v3695, %v3408
    %v3702 = vmul.f32 %v3687, %v3698
    %v3703 = vmul.f32 %v3693, %v3699
    %v3704 = vadd.f32 %v3700, %v3702
    %v3705 = vadd.f32 %v3701, %v3703
    %v3706 = vtanh.pop %v3704
    %v3707 = vtanh.pop %v3705
    %v3708 = vmul.f32 %v3691, %v3706
    %v3709 = vmul.f32 %v3697, %v3707
    %v3710 = vxor.u32 %v3654, 2147483648
    %v3711 = vxor.u32 %v3655, 2147483648
    %v3712 = vxor.u32 %v3656, 2147483648
    %v3713 = vxor.u32 %v3658, 2147483648
    %v3714 = vxor.u32 %v3659, 2147483648
    %v3715 = vxor.u32 %v3660, 2147483648
    %v3716 = vmul.f32 %v3710, 1.442695
    %v3717 = vpow.pop %v3716
    %v3718 = vmul.f32 %v3711, 1.442695
    %v3719 = vpow.pop %v3718
    %v3720 = vmul.f32 %v3712, 1.442695
    %v3721 = vpow.pop %v3720
    %v3722 = vmul.f32 %v3713, 1.442695
    %v3723 = vpow.pop %v3722
    %v3724 = vmul.f32 %v3714, 1.442695
    %v3725 = vpow.pop %v3724
    %v3726 = vmul.f32 %v3715, 1.442695
    %v3727 = vpow.pop %v3726
    %v3728 = vadd.f32 %v3717, 1.0
    %v3729 = vadd.f32 %v3719, 1.0
    %v3730 = vadd.f32 %v3721, 1.0
    %v3731 = vadd.f32 %v3723, 1.0
    %v3732 = vadd.f32 %v3725, 1.0
    %v3733 = vadd.f32 %v3727, 1.0
    %v3734 = vrcp.pop %v3728
    %v3735 = vmul.f32 1.0, %v3734
    %v3736 = vrcp.pop %v3729
    %v3737 = vmul.f32 1.0, %v3736
    %v3738 = vrcp.pop %v3730
    %v3739 = vmul.f32 1.0, %v3738
    %v3740 = vrcp.pop %v3731
    %v3741 = vmul.f32 1.0, %v3740
    %v3742 = vrcp.pop %v3732
    %v3743 = vmul.f32 1.0, %v3742
    %v3744 = vrcp.pop %v3733
    %v3745 = vmul.f32 1.0, %v3744
    %v3746 = vtanh.pop %v3657
    %v3747 = vtanh.pop %v3661
    %v3748 = vmul.f32 %v3737, %v3455
    %v3749 = vmul.f32 %v3743, %v3456
    %v3750 = vmul.f32 %v3735, %v3746
    %v3751 = vmul.f32 %v3741, %v3747
    %v3752 = vadd.f32 %v3748, %v3750
    %v3753 = vadd.f32 %v3749, %v3751
    %v3754 = vtanh.pop %v3752
    %v3755 = vtanh.pop %v3753
    %v3756 = vmul.f32 %v3739, %v3754
    %v3757 = vmul.f32 %v3745, %v3755
    %v3758 = vpack.c.bf16 %v3709, %v3708
    %v3759 = vpack.c.bf16 %v3757, %v3756
    %3760 = vmatprep.subr.bf16.mxu0 %v1465
    %3761 = vmatpush1.bf16.msra.mxu0 %v1464
    %3762 = vmatprep.subr.bf16.mxu0 %v1457
    %3763 = vmatpush1.bf16.msra.mxu0 %v1456
    %3764 = vmatprep.subr.bf16.mxu0 %v1449
    %3765 = vmatpush1.bf16.msra.mxu0 %v1448
    %3766 = vmatprep.subr.bf16.mxu0 %v1441
    %3767 = vmatpush1.bf16.msra.mxu0 %v1440
    %3768 = vmatprep.subr.bf16.mxu0 %v1433
    %3769 = vmatpush1.bf16.msra.mxu0 %v1432
    %3770 = vmatprep.subr.bf16.mxu0 %v1425
    %3771 = vmatpush1.bf16.msra.mxu0 %v1424
    %3772 = vmatprep.subr.bf16.mxu0 %v1417
    %3773 = vmatpush1.bf16.msra.mxu0 %v1416
    %3774 = vmatprep.subr.bf16.mxu0 %v1409
    %3775 = vmatpush1.bf16.msra.mxu0 %v1408
    %3776 = vmatprep.subr.bf16.mxu0 %v1529
    %3777 = vmatpush2.bf16.msra.mxu0 %v1528
    %3778 = vmatprep.subr.bf16.mxu0 %v1521
    %3779 = vmatpush2.bf16.msra.mxu0 %v1520
    %3780 = vmatprep.subr.bf16.mxu0 %v1513
    %3781 = vmatpush2.bf16.msra.mxu0 %v1512
    %3782 = vmatprep.subr.bf16.mxu0 %v1505
    %3783 = vmatpush2.bf16.msra.mxu0 %v1504
    %3784 = vmatprep.subr.bf16.mxu0 %v1497
    %3785 = vmatpush2.bf16.msra.mxu0 %v1496
    %3786 = vmatprep.subr.bf16.mxu0 %v1489
    %3787 = vmatpush2.bf16.msra.mxu0 %v1488
    %3788 = vmatprep.subr.bf16.mxu0 %v1481
    %3789 = vmatpush2.bf16.msra.mxu0 %v1480
    %3790 = vmatprep.subr.bf16.mxu0 %v1473
    %3791 = vmatpush2.bf16.msra.mxu0 %v1472
    %3792 = vmatprep.mubr.bf16.mxu0 %v3759
    %3793 = vmatmul.mubr.bf16.gmra.mxu0 %v3758
    %v3794 = vpop.f32.mrf.mxu0
    %v3795 = vadd.f32 0.0, %v3794
    %v3796 = vpop.f32.mrf.mxu0
    %v3797 = vadd.f32 0.0, %v3796
    %v3798 = vpop.f32.mrf.mxu0
    %v3799 = vadd.f32 0.0, %v3798
    %v3800 = vpop.f32.mrf.mxu0
    %v3801 = vadd.f32 0.0, %v3800
    %3802 = vdwg.mxu0
    %3803 = vmatprep.subr.bf16.mxu0 %v1467
    %3804 = vmatpush1.bf16.msra.mxu0 %v1466
    %3805 = vmatprep.subr.bf16.mxu0 %v1459
    %3806 = vmatpush1.bf16.msra.mxu0 %v1458
    %3807 = vmatprep.subr.bf16.mxu0 %v1451
    %3808 = vmatpush1.bf16.msra.mxu0 %v1450
    %3809 = vmatprep.subr.bf16.mxu0 %v1443
    %3810 = vmatpush1.bf16.msra.mxu0 %v1442
    %3811 = vmatprep.subr.bf16.mxu0 %v1435
    %3812 = vmatpush1.bf16.msra.mxu0 %v1434
    %3813 = vmatprep.subr.bf16.mxu0 %v1427
    %3814 = vmatpush1.bf16.msra.mxu0 %v1426
    %3815 = vmatprep.subr.bf16.mxu0 %v1419
    %3816 = vmatpush1.bf16.msra.mxu0 %v1418
    %3817 = vmatprep.subr.bf16.mxu0 %v1411
    %3818 = vmatpush1.bf16.msra.mxu0 %v1410
    %3819 = vmatprep.subr.bf16.mxu0 %v1531
    %3820 = vmatpush2.bf16.msra.mxu0 %v1530
    %3821 = vmatprep.subr.bf16.mxu0 %v1523
    %3822 = vmatpush2.bf16.msra.mxu0 %v1522
    %3823 = vmatprep.subr.bf16.mxu0 %v1515
    %3824 = vmatpush2.bf16.msra.mxu0 %v1514
    %3825 = vmatprep.subr.bf16.mxu0 %v1507
    %3826 = vmatpush2.bf16.msra.mxu0 %v1506
    %3827 = vmatprep.subr.bf16.mxu0 %v1499
    %3828 = vmatpush2.bf16.msra.mxu0 %v1498
    %3829 = vmatprep.subr.bf16.mxu0 %v1491
    %3830 = vmatpush2.bf16.msra.mxu0 %v1490
    %3831 = vmatprep.subr.bf16.mxu0 %v1483
    %3832 = vmatpush2.bf16.msra.mxu0 %v1482
    %3833 = vmatprep.subr.bf16.mxu0 %v1475
    %3834 = vmatpush2.bf16.msra.mxu0 %v1474
    %3835 = vmatprep.mubr.bf16.mxu0 %v3759
    %3836 = vmatmul.mubr.bf16.gmra.mxu0 %v3758
    %v3837 = vpop.f32.mrf.mxu0
    %v3838 = vadd.f32 0.0, %v3837
    %v3839 = vpop.f32.mrf.mxu0
    %v3840 = vadd.f32 0.0, %v3839
    %v3841 = vpop.f32.mrf.mxu0
    %v3842 = vadd.f32 0.0, %v3841
    %v3843 = vpop.f32.mrf.mxu0
    %v3844 = vadd.f32 0.0, %v3843
    %3845 = vdwg.mxu0
    %v3846 = vadd.f32 %v1855, %v3795
    %v3847 = vadd.f32 %v1859, %v3797
    %v3848 = vadd.f32 %v1863, %v3838
    %v3849 = vadd.f32 %v1867, %v3840
    %v3850 = vadd.f32 %v1855, %v3799
    %v3851 = vadd.f32 %v1859, %v3801
    %v3852 = vadd.f32 %v1863, %v3842
    %v3853 = vadd.f32 %v1867, %v3844
    %v3854 = vxor.u32 %v3846, 2147483648
    %v3855 = vxor.u32 %v3847, 2147483648
    %v3856 = vxor.u32 %v3848, 2147483648
    %v3857 = vxor.u32 %v3850, 2147483648
    %v3858 = vxor.u32 %v3851, 2147483648
    %v3859 = vxor.u32 %v3852, 2147483648
    %v3860 = vmul.f32 %v3854, 1.442695
    %v3861 = vpow.pop %v3860
    %v3862 = vmul.f32 %v3855, 1.442695
    %v3863 = vpow.pop %v3862
    %v3864 = vmul.f32 %v3856, 1.442695
    %v3865 = vpow.pop %v3864
    %v3866 = vmul.f32 %v3857, 1.442695
    %v3867 = vpow.pop %v3866
    %v3868 = vmul.f32 %v3858, 1.442695
    %v3869 = vpow.pop %v3868
    %v3870 = vmul.f32 %v3859, 1.442695
    %v3871 = vpow.pop %v3870
    %v3872 = vadd.f32 %v3861, 1.0
    %v3873 = vadd.f32 %v3863, 1.0
    %v3874 = vadd.f32 %v3865, 1.0
    %v3875 = vadd.f32 %v3867, 1.0
    %v3876 = vadd.f32 %v3869, 1.0
    %v3877 = vadd.f32 %v3871, 1.0
    %v3878 = vrcp.pop %v3872
    %v3879 = vmul.f32 1.0, %v3878
    %v3880 = vrcp.pop %v3873
    %v3881 = vmul.f32 1.0, %v3880
    %v3882 = vrcp.pop %v3874
    %v3883 = vmul.f32 1.0, %v3882
    %v3884 = vrcp.pop %v3875
    %v3885 = vmul.f32 1.0, %v3884
    %v3886 = vrcp.pop %v3876
    %v3887 = vmul.f32 1.0, %v3886
    %v3888 = vrcp.pop %v3877
    %v3889 = vmul.f32 1.0, %v3888
    %v3890 = vtanh.pop %v3849
    %v3891 = vtanh.pop %v3853
    %v3892 = vmul.f32 %v3881, %v3752
    %v3893 = vmul.f32 %v3887, %v3753
    %v3894 = vmul.f32 %v3879, %v3890
    %v3895 = vmul.f32 %v3885, %v3891
    %v3896 = vadd.f32 %v3892, %v3894
    %v3897 = vadd.f32 %v3893, %v3895
    %v3898 = vtanh.pop %v3896
    %v3899 = vtanh.pop %v3897
    %v3900 = vmul.f32 %v3883, %v3898
    %v3901 = vmul.f32 %v3889, %v3899
    %v3902 = vpack.c.bf16 %v3901, %v3900
    %v3904 = vlaneseq
    %v3905 = vshrl.u32 %v3904, 7
    %v3906 = vsub.s32 0, %v3905
    %v3907 = vrot.slane %v257, %v3906
    %v3925 = vunpack.c.l.b16 %v241
    %v3926 = vunpack.c.l.b16 %v242
    %v3927 = vunpack.c.l.b16 %v243
    %v3928 = vunpack.c.l.b16 %v244
    %v3929 = vunpack.c.l.b16 %v245
    %v3930 = vunpack.c.l.b16 %v246
    %v3931 = vunpack.c.l.b16 %v247
    %v3932 = vunpack.c.l.b16 %v248
    %v3933 = vunpack.c.l.b16 %v249
    %v3934 = vunpack.c.l.b16 %v250
    %v3935 = vunpack.c.l.b16 %v251
    %v3936 = vunpack.c.l.b16 %v252
    %v3937 = vunpack.c.l.b16 %v253
    %v3938 = vunpack.c.l.b16 %v254
    %v3939 = vunpack.c.l.b16 %v255
    %v3940 = vunpack.c.l.b16 %v256
    %v3941 = vpack.c.b16 %v3926, %v3925
    %v3942 = vpack.c.b16 %v3928, %v3927
    %v3943 = vpack.c.b16 %v3930, %v3929
    %v3944 = vpack.c.b16 %v3932, %v3931
    %v3945 = vpack.c.b16 %v3934, %v3933
    %v3946 = vpack.c.b16 %v3936, %v3935
    %v3947 = vpack.c.b16 %v3938, %v3937
    %v3948 = vpack.c.b16 %v3940, %v3939
    %3957 = vmatprep.subr.bf16.mxu0 0
    %3958 = vmatpush1.bf16.msra.mxu0 %v3948
    %3959 = vmatprep.subr.bf16.mxu0 0
    %3960 = vmatpush1.bf16.msra.mxu0 %v3947
    %3961 = vmatprep.subr.bf16.mxu0 0
    %3962 = vmatpush1.bf16.msra.mxu0 %v3946
    %3963 = vmatprep.subr.bf16.mxu0 0
    %3964 = vmatpush1.bf16.msra.mxu0 %v3945
    %3965 = vmatprep.subr.bf16.mxu0 0
    %3966 = vmatpush1.bf16.msra.mxu0 %v3944
    %3967 = vmatprep.subr.bf16.mxu0 0
    %3968 = vmatpush1.bf16.msra.mxu0 %v3943
    %3969 = vmatprep.subr.bf16.mxu0 0
    %3970 = vmatpush1.bf16.msra.mxu0 %v3942
    %3971 = vmatprep.subr.bf16.mxu0 0
    %3972 = vmatpush1.bf16.msra.mxu0 %v3941
    %3973 = vmatprep.subr.bf16.mxu0 0
    %3974 = vmatpush2.bf16.msra.mxu0 0
    %3975 = vmatprep.subr.bf16.mxu0 0
    %3976 = vmatpush2.bf16.msra.mxu0 0
    %3977 = vmatprep.subr.bf16.mxu0 0
    %3978 = vmatpush2.bf16.msra.mxu0 0
    %3979 = vmatprep.subr.bf16.mxu0 0
    %3980 = vmatpush2.bf16.msra.mxu0 0
    %3981 = vmatprep.subr.bf16.mxu0 0
    %3982 = vmatpush2.bf16.msra.mxu0 0
    %3983 = vmatprep.subr.bf16.mxu0 0
    %3984 = vmatpush2.bf16.msra.mxu0 0
    %3985 = vmatprep.subr.bf16.mxu0 0
    %3986 = vmatpush2.bf16.msra.mxu0 0
    %3987 = vmatprep.subr.bf16.mxu0 0
    %3988 = vmatpush2.bf16.msra.mxu0 0
    %3989 = vmatprep.mubr.bf16.mxu0 0
    %3990 = vmatmul.mubr.bf16.gmra.mxu0 %v3902
    %v3991 = vpop.f32.mrf.mxu0
    %v3992 = vadd.f32 %v3907, %v3991
    %v3993 = vpop.f32.mrf.mxu0
    %v3994 = vpop.f32.mrf.mxu0
    %v3995 = vadd.f32 %v3907, %v3994
    %v3996 = vpop.f32.mrf.mxu0
    %3997 = vdwg.mxu0
    %3998 = vst [vmem:[%s7] sm:$0xff] %v3992
    %3999 = vst [vmem:[%s7 + $0x8] sm:$0xff] %v3995
    // Predicated region
    $region38: #{rnn_classifier_forward.1} parent=1 // pred_check
      _
    $region39: #{rnn_classifier_forward.1} parent=1 // pred_check_branch
      %4001 = sbr.rel (0) target = $region41
    $region40: #{rnn_classifier_forward.1} parent=1 // pred_region
      _
    $region41: #{rnn_classifier_forward.1} parent=1 // pred_fallthru
      _
    // Predicated region
    $region42: #{rnn_classifier_forward.1} parent=1 // pred_check
      _
    $region43: #{rnn_classifier_forward.1} parent=1 // pred_check_branch
      %4003 = sbr.rel (0) target = $region45
    $region44: #{rnn_classifier_forward.1} parent=1 // pred_region
      _
    $region45: #{rnn_classifier_forward.1} parent=1 // pred_fallthru
      _
    %4004 = vsyncpa [#allocation4], 1
    %4005 = vsyncpa [#allocation6], 1

</llo_original>
